<compile_context>
chip_gen: v7x
topology: tpu7x:2x2x1
jax: 0.10.0
libtpu: 0.0.40
codegen_flags: <defaults>
</compile_context>

<pallas_src>
import functools

import jax
import jax.numpy as jnp
from jax.experimental import pallas as pl
from jax.experimental.pallas import tpu as pltpu

# ----- model hyper-parameters (small, consistent with the module) -----
VOCAB = 50      # vocab_size
EMB = 16        # embedding_dim
HID = 32        # hidden_size   (8*HID = 256 -> fused fwd+bwd gate lanes)
NTAG = 5        # len(tag_to_index)
MAXLEN = 8      # max_length
BATCH = 2


# ---------------------------------------------------------------------------
# Fused kernel: BiLSTM recurrence + hidden_to_tag + CRF log-likelihood.
# Single grid point; time loops are unrolled at trace time (L is small/static).
# ---------------------------------------------------------------------------
def _bilstm_crf_kernel(x_ref, lens_ref, tags_ref,
                       wx_ref, whh_ref, b_ref, wt_ref, bt_ref,
                       start_ref, end_ref, trans_ref,
                       out_ref,
                       xp_s, h_s,
                       *, hidden, ntag, length, batch):
    H, T, L, B = hidden, ntag, length, batch

    # ----- hoisted loads / constants -----
    whh = whh_ref[...]          # (2H, 8H)
    bias = b_ref[...]           # (1, 8H)
    bt = bt_ref[...]            # (1, T)
    start = start_ref[...]      # (1, T)
    end = end_ref[...]          # (1, T)
    trans = trans_ref[...]      # (T, T)
    lens = lens_ref[...]        # (B, 1) int32

    glane = jax.lax.broadcasted_iota(jnp.int32, (1, 8 * H), 1)
    fwd_gate_lane = (glane % (2 * H)) < H            # per-gate [fwd|bwd] halves
    slane = jax.lax.broadcasted_iota(jnp.int32, (1, 2 * H), 1)
    fwd_state_lane = slane < H                       # [h_fwd | h_bwd] halves
    tag_iota = jax.lax.broadcasted_iota(jnp.int32, (1, T), 1)

    # ----- phase 0: batched input projection for every timestep (one matmul) -----
    # x_ref rows are ordered n = t*B + b.  Column layout of wx gives, per token,
    # its fwd-direction gate contribution in fwd lanes and bwd contribution in
    # bwd lanes (selected per step below).
    xp_s[...] = jnp.dot(x_ref[...], wx_ref[...],
                        preferred_element_type=jnp.float32)      # (L*B, 8H)

    # ----- phase 1: fused fwd+bwd LSTM recurrence (serial, unrolled) -----
    hcat = jnp.zeros((B, 2 * H), jnp.float32)        # [h_fwd | h_bwd]
    ccat = jnp.zeros((B, 2 * H), jnp.float32)
    for s in range(L):
        tb = L - 1 - s                               # backward-direction time
        xp_f = xp_s[s * B:(s + 1) * B, :]            # (B, 8H)
        xp_b = xp_s[tb * B:(tb + 1) * B, :]          # (B, 8H)
        g = (jnp.where(fwd_gate_lane, xp_f, xp_b)
             + jnp.dot(hcat, whh, preferred_element_type=jnp.float32)
             + bias)                                 # (B, 8H)

        # PyTorch LSTM gate order: i, f, g, o (each a 2H=[fwd|bwd] lane block)
        i = jax.nn.sigmoid(g[:, 0 * 2 * H:1 * 2 * H])
        f = jax.nn.sigmoid(g[:, 1 * 2 * H:2 * 2 * H])
        gg = jnp.tanh(g[:, 2 * 2 * H:3 * 2 * H])
        o = jax.nn.sigmoid(g[:, 3 * 2 * H:4 * 2 * H])
        c_new = f * ccat + i * gg
        h_new = o * jnp.tanh(c_new)

        # stash candidate hidden state (fwd half is for time s, bwd for time tb)
        h_s[s * B:(s + 1) * B, :] = h_new

        # packed-sequence semantics: the backward half only advances while its
        # time index is still valid (t < length); forward half always advances
        # (padded-position fwd outputs are masked later and never feed back).
        upd = jnp.logical_or(fwd_state_lane, tb < lens)          # (B, 2H)
        hcat = jnp.where(upd, h_new, hcat)
        ccat = jnp.where(upd, c_new, ccat)

    # ----- phase 2: batched hidden_to_tag projection (one matmul) -----
    # TODO(synk): nn.Dropout(0.5) is stochastic in training mode; here it is the
    # eval-mode identity.
    hp = jnp.dot(h_s[...], wt_ref[...],
                 preferred_element_type=jnp.float32)             # (L*B, 2T)

    # ----- phase 3: CRF log-likelihood (torchcrf semantics, reduction='sum') -----
    alpha = None
    num = None
    last_oh = None
    prev_oh = None
    for t in range(L):
        valid = t < lens                              # (B, 1) bool
        mk = valid.astype(jnp.float32)                # (B, 1)
        ef = hp[t * B:(t + 1) * B, :T]                # fwd emission @ t
        eb = hp[(L - 1 - t) * B:(L - t) * B, T:]      # bwd emission @ t
        # padded positions: pad_packed zeros -> Linear(0) = bias
        em = bt + jnp.where(valid, ef + eb, 0.0)      # (B, T)
        oh = (tags_ref[:, t:t + 1] == tag_iota).astype(jnp.float32)   # (B, T)

        if t == 0:
            alpha = start + em
            num = jnp.sum(alpha * oh, axis=-1, keepdims=True)
            last_oh = oh
        else:
            tr_score = jnp.sum(
                jnp.dot(prev_oh, trans, preferred_element_type=jnp.float32) * oh,
                axis=-1, keepdims=True)
            em_score = jnp.sum(em * oh, axis=-1, keepdims=True)
            num = num + mk * (tr_score + em_score)

            x3 = alpha[:, :, None] + trans[None, :, :] + em[:, None, :]  # (B,T,T)
            m = jnp.max(x3, axis=1)                                      # (B,T)
            a_new = jnp.log(jnp.sum(jnp.exp(x3 - m[:, None, :]), axis=1)) + m
            alpha = jnp.where(valid, a_new, alpha)
            last_oh = jnp.where(valid, oh, last_oh)
        prev_oh = oh

    num = num + jnp.sum(last_oh * end, axis=-1, keepdims=True)
    a = alpha + end
    m = jnp.max(a, axis=-1, keepdims=True)
    denom = jnp.log(jnp.sum(jnp.exp(a - m), axis=-1, keepdims=True)) + m
    llh = num - denom                                 # (B, 1) per-batch llh
    out_ref[...] = jnp.sum(llh, axis=0, keepdims=True)   # reduction='sum'


# ---------------------------------------------------------------------------
# Parameter init (PyTorch-shaped) + one-time repack into the fused layouts.
# ---------------------------------------------------------------------------
def init_params(key):
    ks = jax.random.split(key, 13)

    def u(k, shape, scale):
        return jax.random.uniform(k, shape, jnp.float32, -scale, scale)

    b_emb = float(jnp.sqrt(6.0 / EMB))        # kaiming_uniform_-style bound
    b_lstm = float(1.0 / jnp.sqrt(HID))
    b_lin = float(1.0 / jnp.sqrt(2 * HID))
    return dict(
        emb=u(ks[0], (VOCAB, EMB), b_emb),           # nn.Embedding weight
        wih_f=u(ks[1], (EMB, 4 * HID), b_lstm),      # weight_ih_l0 (transposed)
        whh_f=u(ks[2], (HID, 4 * HID), b_lstm),      # weight_hh_l0 (transposed)
        b_f=u(ks[3], (1, 4 * HID), b_lstm),          # bias_ih_l0 + bias_hh_l0
        wih_b=u(ks[4], (EMB, 4 * HID), b_lstm),      # *_l0_reverse
        whh_b=u(ks[5], (HID, 4 * HID), b_lstm),
        b_b=u(ks[6], (1, 4 * HID), b_lstm),
        wt_f=u(ks[7], (HID, NTAG), b_lin),           # Linear weight[:, :H].T
        wt_b=u(ks[8], (HID, NTAG), b_lin),           # Linear weight[:, H:].T
        bt=u(ks[9], (1, NTAG), b_lin),               # Linear bias
        crf_start=u(ks[10], (1, NTAG), 0.1),
        crf_end=u(ks[11], (1, NTAG), 0.1),
        crf_trans=u(ks[12], (NTAG, NTAG), 0.1),
    )


def prepare_params(p):
    """One-time repack into the fused-direction layouts the kernel consumes.
    Gate lanes are laid out as [i_f i_b | f_f f_b | g_f g_b | o_f o_b]."""
    H, T = HID, NTAG

    def gate_interleave(wf, wb):
        # (R, 4H) x 2 -> (R, 8H): per-gate [fwd H | bwd H] lane blocks
        f3 = wf.reshape(wf.shape[0], 4, H)
        b3 = wb.reshape(wb.shape[0], 4, H)
        return jnp.concatenate([f3, b3], axis=-1).reshape(wf.shape[0], 8 * H)

    # input projection: the same token rows feed both directions' gate lanes
    w_x = gate_interleave(p['wih_f'], p['wih_b'])                 # (E, 8H)

    # hidden projection: block structure, input rows are [h_fwd | h_bwd]
    f3 = p['whh_f'].reshape(H, 4, H)
    b3 = p['whh_b'].reshape(H, 4, H)
    top = jnp.concatenate([f3, jnp.zeros_like(f3)], axis=-1).reshape(H, 8 * H)
    bot = jnp.concatenate([jnp.zeros_like(b3), b3], axis=-1).reshape(H, 8 * H)
    w_hh = jnp.concatenate([top, bot], axis=0)                    # (2H, 8H)

    b = gate_interleave(p['b_f'], p['b_b'])                       # (1, 8H)

    # tag projection: block-diag so hp[:, :T] = h_f@wt_f, hp[:, T:] = h_b@wt_b
    w_tag = jnp.concatenate(
        [jnp.concatenate([p['wt_f'], jnp.zeros((H, T), jnp.float32)], axis=1),
         jnp.concatenate([jnp.zeros((H, T), jnp.float32), p['wt_b']], axis=1)],
        axis=0)                                                   # (2H, 2T)

    return dict(emb=p['emb'], w_x=w_x, w_hh=w_hh, b=b, w_tag=w_tag, bt=p['bt'],
                crf_start=p['crf_start'], crf_end=p['crf_end'],
                crf_trans=p['crf_trans'])


# ---------------------------------------------------------------------------
# Full forward: BiLstmCRF.forward(sentences, tags, length_list)
# ---------------------------------------------------------------------------
def bilstm_crf_forward(params, sentences, tags, length_list):
    B, L = sentences.shape
    E, H, T = EMB, HID, NTAG

    # embedding lookup (single XLA gather), rows ordered n = t*B + b
    x = params['emb'][sentences.T.reshape(-1)]            # (L*B, E)
    lens = length_list.astype(jnp.int32)[:, None]         # (B, 1)
    tg = tags.astype(jnp.int32)                           # (B, L)

    kernel = functools.partial(_bilstm_crf_kernel,
                               hidden=H, ntag=T, length=L, batch=B)

    def full_spec(shape):
        return pl.BlockSpec(shape, lambda *_: (0,) * len(shape))

    out = pl.pallas_call(
        kernel,
        grid=(1,),
        in_specs=[
            full_spec((L * B, E)),        # embedded tokens
            full_spec((B, 1)),            # lengths
            full_spec((B, L)),            # tags
            full_spec((E, 8 * H)),        # fused W_ih
            full_spec((2 * H, 8 * H)),    # fused W_hh
            full_spec((1, 8 * H)),        # fused LSTM bias
            full_spec((2 * H, 2 * T)),    # fused hidden_to_tag weight
            full_spec((1, T)),            # hidden_to_tag bias
            full_spec((1, T)),            # crf start
            full_spec((1, T)),            # crf end
            full_spec((T, T)),            # crf transitions
        ],
        out_specs=full_spec((1, 1)),
        out_shape=jax.ShapeDtypeStruct((1, 1), jnp.float32),
        scratch_shapes=[pltpu.VMEM((L * B, 8 * H), jnp.float32),   # input projections
                        pltpu.VMEM((L * B, 2 * H), jnp.float32)],  # hidden states
        compiler_params=pltpu.CompilerParams(
            dimension_semantics=("arbitrary",)),
    )(x, lens, tg,
      params['w_x'], params['w_hh'], params['b'], params['w_tag'], params['bt'],
      params['crf_start'], params['crf_end'], params['crf_trans'])

    return out[0, 0]


if __name__ == "__main__":
    key = jax.random.PRNGKey(0)
    pkey, skey, tkey = jax.random.split(key, 3)
    params = prepare_params(init_params(pkey))

    sentences = jax.random.randint(skey, (BATCH, MAXLEN), 0, VOCAB,
                                   dtype=jnp.int32)
    tags = jax.random.randint(tkey, (BATCH, MAXLEN), 0, NTAG, dtype=jnp.int32)
    length_list = jnp.array([MAXLEN, 5], dtype=jnp.int32)

    out = jax.jit(bilstm_crf_forward)(params, sentences, tags, length_list)
    jax.block_until_ready(out)
    assert out.shape == () and bool(jnp.isfinite(out))
    print("KERNEL_OK")
</pallas_src>

<mosaic_0001>
module attributes {stable_mosaic.version = 11 : i64} {
  func.func @_bilstm_crf_kernel(%arg0: i32, %arg1: memref<16x16xf32, #tpu.memory_space<vmem>>, %arg2: memref<2x1xi32, #tpu.memory_space<vmem>>, %arg3: memref<2x8xi32, #tpu.memory_space<vmem>>, %arg4: memref<16x256xf32, #tpu.memory_space<vmem>>, %arg5: memref<64x256xf32, #tpu.memory_space<vmem>>, %arg6: memref<1x256xf32, #tpu.memory_space<vmem>>, %arg7: memref<64x10xf32, #tpu.memory_space<vmem>>, %arg8: memref<1x5xf32, #tpu.memory_space<vmem>>, %arg9: memref<1x5xf32, #tpu.memory_space<vmem>>, %arg10: memref<1x5xf32, #tpu.memory_space<vmem>>, %arg11: memref<5x5xf32, #tpu.memory_space<vmem>>, %arg12: memref<1x1xf32, #tpu.memory_space<vmem>>, %arg13: memref<16x256xf32, #tpu.memory_space<vmem>>, %arg14: memref<16x64xf32, #tpu.memory_space<vmem>>) attributes {dimension_semantics = [#tpu.dimension_semantics<arbitrary>], iteration_bounds = array<i64: 1>, scalar_prefetch = 0 : i64, scratch_operands = 2 : i64, tpu.core_type = #tpu.core_type<tc>, window_params = [{pipeline_mode = #tpu.pipeline_mode<synchronous>, transform_indices = @transform_0, window_bounds = array<i64: 16, 16>}, {pipeline_mode = #tpu.pipeline_mode<synchronous>, transform_indices = @transform_1, window_bounds = array<i64: 2, 1>}, {pipeline_mode = #tpu.pipeline_mode<synchronous>, transform_indices = @transform_2, window_bounds = array<i64: 2, 8>}, {pipeline_mode = #tpu.pipeline_mode<synchronous>, transform_indices = @transform_3, window_bounds = array<i64: 16, 256>}, {pipeline_mode = #tpu.pipeline_mode<synchronous>, transform_indices = @transform_4, window_bounds = array<i64: 64, 256>}, {pipeline_mode = #tpu.pipeline_mode<synchronous>, transform_indices = @transform_5, window_bounds = array<i64: 1, 256>}, {pipeline_mode = #tpu.pipeline_mode<synchronous>, transform_indices = @transform_6, window_bounds = array<i64: 64, 10>}, {pipeline_mode = #tpu.pipeline_mode<synchronous>, transform_indices = @transform_7, window_bounds = array<i64: 1, 5>}, {pipeline_mode = #tpu.pipeline_mode<synchronous>, transform_indices = @transform_8, window_bounds = array<i64: 1, 5>}, {pipeline_mode = #tpu.pipeline_mode<synchronous>, transform_indices = @transform_9, window_bounds = array<i64: 1, 5>}, {pipeline_mode = #tpu.pipeline_mode<synchronous>, transform_indices = @transform_10, window_bounds = array<i64: 5, 5>}, {pipeline_mode = #tpu.pipeline_mode<synchronous>, transform_indices = @transform_11, window_bounds = array<i64: 1, 1>}]} {
    %c0 = arith.constant 0 : index
    %c0_0 = arith.constant 0 : index
    %0 = vector.load %arg5[%c0, %c0_0] : memref<64x256xf32, #tpu.memory_space<vmem>>, vector<64x256xf32>
    %c0_1 = arith.constant 0 : index
    %c0_2 = arith.constant 0 : index
    %1 = vector.load %arg6[%c0_1, %c0_2] : memref<1x256xf32, #tpu.memory_space<vmem>>, vector<1x256xf32>
    %c0_3 = arith.constant 0 : index
    %c0_4 = arith.constant 0 : index
    %2 = vector.load %arg8[%c0_3, %c0_4] : memref<1x5xf32, #tpu.memory_space<vmem>>, vector<1x5xf32>
    %c0_5 = arith.constant 0 : index
    %c0_6 = arith.constant 0 : index
    %3 = vector.load %arg9[%c0_5, %c0_6] : memref<1x5xf32, #tpu.memory_space<vmem>>, vector<1x5xf32>
    %c0_7 = arith.constant 0 : index
    %c0_8 = arith.constant 0 : index
    %4 = vector.load %arg10[%c0_7, %c0_8] : memref<1x5xf32, #tpu.memory_space<vmem>>, vector<1x5xf32>
    %c0_9 = arith.constant 0 : index
    %c0_10 = arith.constant 0 : index
    %5 = vector.load %arg11[%c0_9, %c0_10] : memref<5x5xf32, #tpu.memory_space<vmem>>, vector<5x5xf32>
    %c0_11 = arith.constant 0 : index
    %c0_12 = arith.constant 0 : index
    %6 = vector.load %arg2[%c0_11, %c0_12] : memref<2x1xi32, #tpu.memory_space<vmem>>, vector<2x1xi32>
    %7 = tpu.iota {dimensions = array<i32: 1>} : vector<1x256xi32>
    %c64_i32 = arith.constant 64 : i32
    %c0_i32 = arith.constant 0 : i32
    %8 = arith.cmpi eq, %c64_i32, %c0_i32 : i32
    %c1_i32 = arith.constant 1 : i32
    %9 = arith.select %8, %c1_i32, %c64_i32 : i32
    %10 = vector.broadcast %9 : i32 to vector<1x256xi32>
    %11 = arith.remsi %7, %10 : vector<1x256xi32>
    %c0_i32_13 = arith.constant 0 : i32
    %12 = vector.broadcast %c0_i32_13 : i32 to vector<1x256xi32>
    %13 = arith.cmpi ne, %11, %12 : vector<1x256xi32>
    %c0_i32_14 = arith.constant 0 : i32
    %14 = vector.broadcast %c0_i32_14 : i32 to vector<1x256xi32>
    %15 = arith.cmpi slt, %11, %14 : vector<1x256xi32>
    %c0_i32_15 = arith.constant 0 : i32
    %16 = arith.cmpi slt, %9, %c0_i32_15 : i32
    %17 = vector.broadcast %16 : i1 to vector<1x256xi1>
    %18 = vector.broadcast %17 : vector<1x256xi1> to vector<1x256xi1>
    %19 = arith.xori %15, %18 : vector<1x256xi1>
    %20 = arith.andi %19, %13 : vector<1x256xi1>
    %21 = vector.broadcast %9 : i32 to vector<1x256xi32>
    %22 = arith.addi %11, %21 : vector<1x256xi32>
    %23 = arith.select %20, %22, %11 : vector<1x256xi1>, vector<1x256xi32>
    %c32_i32 = arith.constant 32 : i32
    %24 = vector.broadcast %c32_i32 : i32 to vector<1x256xi32>
    %25 = arith.cmpi slt, %23, %24 : vector<1x256xi32>
    %26 = tpu.iota {dimensions = array<i32: 1>} : vector<1x64xi32>
    %c32_i32_16 = arith.constant 32 : i32
    %27 = vector.broadcast %c32_i32_16 : i32 to vector<1x64xi32>
    %28 = arith.cmpi slt, %26, %27 : vector<1x64xi32>
    %29 = tpu.iota {dimensions = array<i32: 1>} : vector<1x5xi32>
    %c0_17 = arith.constant 0 : index
    %c0_18 = arith.constant 0 : index
    %30 = vector.load %arg1[%c0_17, %c0_18] : memref<16x16xf32, #tpu.memory_space<vmem>>, vector<16x16xf32>
    %c0_19 = arith.constant 0 : index
    %c0_20 = arith.constant 0 : index
    %31 = vector.load %arg4[%c0_19, %c0_20] : memref<16x256xf32, #tpu.memory_space<vmem>>, vector<16x256xf32>
    %cst = arith.constant dense<0.000000e+00> : vector<16x256xf32>
    %32 = tpu.matmul %30, %31, %cst {dimension_numbers = #tpu.dot_dimension_numbers<[1], [0], [0], [1], [0, 0, 1, 1], [], []>} : vector<16x16xf32>, vector<16x256xf32>, vector<16x256xf32> -> vector<16x256xf32>
    %c0_21 = arith.constant 0 : index
    %c0_22 = arith.constant 0 : index
    %33 = vector.load %arg13[%c0_21, %c0_22] : memref<16x256xf32, #tpu.memory_space<vmem>>, vector<16x256xf32>
    tpu.vector_store %arg13[%c0_21, %c0_22], %32 {strides = array<i32>} : memref<16x256xf32, #tpu.memory_space<vmem>>, vector<16x256xf32>,
    %cst_23 = arith.constant 0.000000e+00 : f32
    %34 = vector.broadcast %cst_23 : f32 to vector<2x64xf32>
    %cst_24 = arith.constant 0.000000e+00 : f32
    %35 = vector.broadcast %cst_24 : f32 to vector<2x64xf32>
    %c0_25 = arith.constant 0 : index
    %c0_26 = arith.constant 0 : index
    %36 = vector.load %arg13[%c0_25, %c0_26] : memref<16x256xf32, #tpu.memory_space<vmem>>, vector<2x256xf32>
    %c14 = arith.constant 14 : index
    %c0_27 = arith.constant 0 : index
    %37 = vector.load %arg13[%c14, %c0_27] : memref<16x256xf32, #tpu.memory_space<vmem>>, vector<2x256xf32>
    %38 = vector.shape_cast %25 : vector<1x256xi1> to vector<1x256xi1>
    %39 = vector.broadcast %38 : vector<1x256xi1> to vector<2x256xi1>
    %40 = arith.select %39, %36, %37 : vector<2x256xi1>, vector<2x256xf32>
    %cst_28 = arith.constant dense<0.000000e+00> : vector<2x256xf32>
    %41 = tpu.matmul %34, %0, %cst_28 {dimension_numbers = #tpu.dot_dimension_numbers<[1], [0], [0], [1], [0, 0, 1, 1], [], []>} : vector<2x64xf32>, vector<64x256xf32>, vector<2x256xf32> -> vector<2x256xf32>
    %42 = arith.addf %40, %41 : vector<2x256xf32>
    %43 = vector.broadcast %1 : vector<1x256xf32> to vector<2x256xf32>
    %44 = arith.addf %42, %43 : vector<2x256xf32>
    %45 = vector.extract_strided_slice %44 {offsets = [0, 0], sizes = [2, 64], strides = [1, 1]} : vector<2x256xf32> to vector<2x64xf32>
    %46 = arith.negf %45 : vector<2x64xf32>
    %47 = math.exp %46 : vector<2x64xf32>
    %cst_29 = arith.constant 1.000000e+00 : f32
    %48 = vector.broadcast %cst_29 : f32 to vector<2x64xf32>
    %49 = arith.addf %48, %47 : vector<2x64xf32>
    %50 = arith.divf %48, %49 : vector<2x64xf32>
    %51 = vector.extract_strided_slice %44 {offsets = [0, 64], sizes = [2, 64], strides = [1, 1]} : vector<2x256xf32> to vector<2x64xf32>
    %52 = arith.negf %51 : vector<2x64xf32>
    %53 = math.exp %52 : vector<2x64xf32>
    %cst_30 = arith.constant 1.000000e+00 : f32
    %54 = vector.broadcast %cst_30 : f32 to vector<2x64xf32>
    %55 = arith.addf %54, %53 : vector<2x64xf32>
    %56 = arith.divf %54, %55 : vector<2x64xf32>
    %57 = vector.extract_strided_slice %44 {offsets = [0, 128], sizes = [2, 64], strides = [1, 1]} : vector<2x256xf32> to vector<2x64xf32>
    %58 = math.tanh %57 : vector<2x64xf32>
    %59 = vector.extract_strided_slice %44 {offsets = [0, 192], sizes = [2, 64], strides = [1, 1]} : vector<2x256xf32> to vector<2x64xf32>
    %60 = arith.negf %59 : vector<2x64xf32>
    %61 = math.exp %60 : vector<2x64xf32>
    %cst_31 = arith.constant 1.000000e+00 : f32
    %62 = vector.broadcast %cst_31 : f32 to vector<2x64xf32>
    %63 = arith.addf %62, %61 : vector<2x64xf32>
    %64 = arith.divf %62, %63 : vector<2x64xf32>
    %65 = arith.mulf %56, %35 : vector<2x64xf32>
    %66 = arith.mulf %50, %58 : vector<2x64xf32>
    %67 = arith.addf %65, %66 : vector<2x64xf32>
    %68 = math.tanh %67 : vector<2x64xf32>
    %69 = arith.mulf %64, %68 : vector<2x64xf32>
    %c0_32 = arith.constant 0 : index
    %c0_33 = arith.constant 0 : index
    %70 = vector.load %arg14[%c0_32, %c0_33] : memref<16x64xf32, #tpu.memory_space<vmem>>, vector<2x64xf32>
    tpu.vector_store %arg14[%c0_32, %c0_33], %69 {strides = array<i32>} : memref<16x64xf32, #tpu.memory_space<vmem>>, vector<2x64xf32>,
    %c7_i32 = arith.constant 7 : i32
    %71 = vector.broadcast %c7_i32 : i32 to vector<2x1xi32>
    %72 = arith.cmpi sgt, %6, %71 : vector<2x1xi32>
    %73 = vector.broadcast %28 : vector<1x64xi1> to vector<2x64xi1>
    %74 = vector.broadcast %72 : vector<2x1xi1> to vector<2x64xi1>
    %75 = arith.ori %73, %74 : vector<2x64xi1>
    %76 = arith.select %75, %69, %34 : vector<2x64xi1>, vector<2x64xf32>
    %77 = arith.select %75, %67, %35 : vector<2x64xi1>, vector<2x64xf32>
    %c2 = arith.constant 2 : index
    %c0_34 = arith.constant 0 : index
    %78 = vector.load %arg13[%c2, %c0_34] : memref<16x256xf32, #tpu.memory_space<vmem>>, vector<2x256xf32>
    %c12 = arith.constant 12 : index
    %c0_35 = arith.constant 0 : index
    %79 = vector.load %arg13[%c12, %c0_35] : memref<16x256xf32, #tpu.memory_space<vmem>>, vector<2x256xf32>
    %80 = vector.shape_cast %25 : vector<1x256xi1> to vector<1x256xi1>
    %81 = vector.broadcast %80 : vector<1x256xi1> to vector<2x256xi1>
    %82 = arith.select %81, %78, %79 : vector<2x256xi1>, vector<2x256xf32>
    %cst_36 = arith.constant dense<0.000000e+00> : vector<2x256xf32>
    %83 = tpu.matmul %76, %0, %cst_36 {dimension_numbers = #tpu.dot_dimension_numbers<[1], [0], [0], [1], [0, 0, 1, 1], [], []>} : vector<2x64xf32>, vector<64x256xf32>, vector<2x256xf32> -> vector<2x256xf32>
    %84 = arith.addf %82, %83 : vector<2x256xf32>
    %85 = vector.broadcast %1 : vector<1x256xf32> to vector<2x256xf32>
    %86 = arith.addf %84, %85 : vector<2x256xf32>
    %87 = vector.extract_strided_slice %86 {offsets = [0, 0], sizes = [2, 64], strides = [1, 1]} : vector<2x256xf32> to vector<2x64xf32>
    %88 = arith.negf %87 : vector<2x64xf32>
    %89 = math.exp %88 : vector<2x64xf32>
    %cst_37 = arith.constant 1.000000e+00 : f32
    %90 = vector.broadcast %cst_37 : f32 to vector<2x64xf32>
    %91 = arith.addf %90, %89 : vector<2x64xf32>
    %92 = arith.divf %90, %91 : vector<2x64xf32>
    %93 = vector.extract_strided_slice %86 {offsets = [0, 64], sizes = [2, 64], strides = [1, 1]} : vector<2x256xf32> to vector<2x64xf32>
    %94 = arith.negf %93 : vector<2x64xf32>
    %95 = math.exp %94 : vector<2x64xf32>
    %cst_38 = arith.constant 1.000000e+00 : f32
    %96 = vector.broadcast %cst_38 : f32 to vector<2x64xf32>
    %97 = arith.addf %96, %95 : vector<2x64xf32>
    %98 = arith.divf %96, %97 : vector<2x64xf32>
    %99 = vector.extract_strided_slice %86 {offsets = [0, 128], sizes = [2, 64], strides = [1, 1]} : vector<2x256xf32> to vector<2x64xf32>
    %100 = math.tanh %99 : vector<2x64xf32>
    %101 = vector.extract_strided_slice %86 {offsets = [0, 192], sizes = [2, 64], strides = [1, 1]} : vector<2x256xf32> to vector<2x64xf32>
    %102 = arith.negf %101 : vector<2x64xf32>
    %103 = math.exp %102 : vector<2x64xf32>
    %cst_39 = arith.constant 1.000000e+00 : f32
    %104 = vector.broadcast %cst_39 : f32 to vector<2x64xf32>
    %105 = arith.addf %104, %103 : vector<2x64xf32>
    %106 = arith.divf %104, %105 : vector<2x64xf32>
    %107 = arith.mulf %98, %77 : vector<2x64xf32>
    %108 = arith.mulf %92, %100 : vector<2x64xf32>
    %109 = arith.addf %107, %108 : vector<2x64xf32>
    %110 = math.tanh %109 : vector<2x64xf32>
    %111 = arith.mulf %106, %110 : vector<2x64xf32>
    %c2_40 = arith.constant 2 : index
    %c0_41 = arith.constant 0 : index
    %112 = vector.load %arg14[%c2_40, %c0_41] : memref<16x64xf32, #tpu.memory_space<vmem>>, vector<2x64xf32>
    tpu.vector_store %arg14[%c2_40, %c0_41], %111 {strides = array<i32>} : memref<16x64xf32, #tpu.memory_space<vmem>>, vector<2x64xf32>,
    %c6_i32 = arith.constant 6 : i32
    %113 = vector.broadcast %c6_i32 : i32 to vector<2x1xi32>
    %114 = arith.cmpi sgt, %6, %113 : vector<2x1xi32>
    %115 = vector.broadcast %28 : vector<1x64xi1> to vector<2x64xi1>
    %116 = vector.broadcast %114 : vector<2x1xi1> to vector<2x64xi1>
    %117 = arith.ori %115, %116 : vector<2x64xi1>
    %118 = arith.select %117, %111, %76 : vector<2x64xi1>, vector<2x64xf32>
    %119 = arith.select %117, %109, %77 : vector<2x64xi1>, vector<2x64xf32>
    %c4 = arith.constant 4 : index
    %c0_42 = arith.constant 0 : index
    %120 = vector.load %arg13[%c4, %c0_42] : memref<16x256xf32, #tpu.memory_space<vmem>>, vector<2x256xf32>
    %c10 = arith.constant 10 : index
    %c0_43 = arith.constant 0 : index
    %121 = vector.load %arg13[%c10, %c0_43] : memref<16x256xf32, #tpu.memory_space<vmem>>, vector<2x256xf32>
    %122 = vector.shape_cast %25 : vector<1x256xi1> to vector<1x256xi1>
    %123 = vector.broadcast %122 : vector<1x256xi1> to vector<2x256xi1>
    %124 = arith.select %123, %120, %121 : vector<2x256xi1>, vector<2x256xf32>
    %cst_44 = arith.constant dense<0.000000e+00> : vector<2x256xf32>
    %125 = tpu.matmul %118, %0, %cst_44 {dimension_numbers = #tpu.dot_dimension_numbers<[1], [0], [0], [1], [0, 0, 1, 1], [], []>} : vector<2x64xf32>, vector<64x256xf32>, vector<2x256xf32> -> vector<2x256xf32>
    %126 = arith.addf %124, %125 : vector<2x256xf32>
    %127 = vector.broadcast %1 : vector<1x256xf32> to vector<2x256xf32>
    %128 = arith.addf %126, %127 : vector<2x256xf32>
    %129 = vector.extract_strided_slice %128 {offsets = [0, 0], sizes = [2, 64], strides = [1, 1]} : vector<2x256xf32> to vector<2x64xf32>
    %130 = arith.negf %129 : vector<2x64xf32>
    %131 = math.exp %130 : vector<2x64xf32>
    %cst_45 = arith.constant 1.000000e+00 : f32
    %132 = vector.broadcast %cst_45 : f32 to vector<2x64xf32>
    %133 = arith.addf %132, %131 : vector<2x64xf32>
    %134 = arith.divf %132, %133 : vector<2x64xf32>
    %135 = vector.extract_strided_slice %128 {offsets = [0, 64], sizes = [2, 64], strides = [1, 1]} : vector<2x256xf32> to vector<2x64xf32>
    %136 = arith.negf %135 : vector<2x64xf32>
    %137 = math.exp %136 : vector<2x64xf32>
    %cst_46 = arith.constant 1.000000e+00 : f32
    %138 = vector.broadcast %cst_46 : f32 to vector<2x64xf32>
    %139 = arith.addf %138, %137 : vector<2x64xf32>
    %140 = arith.divf %138, %139 : vector<2x64xf32>
    %141 = vector.extract_strided_slice %128 {offsets = [0, 128], sizes = [2, 64], strides = [1, 1]} : vector<2x256xf32> to vector<2x64xf32>
    %142 = math.tanh %141 : vector<2x64xf32>
    %143 = vector.extract_strided_slice %128 {offsets = [0, 192], sizes = [2, 64], strides = [1, 1]} : vector<2x256xf32> to vector<2x64xf32>
    %144 = arith.negf %143 : vector<2x64xf32>
    %145 = math.exp %144 : vector<2x64xf32>
    %cst_47 = arith.constant 1.000000e+00 : f32
    %146 = vector.broadcast %cst_47 : f32 to vector<2x64xf32>
    %147 = arith.addf %146, %145 : vector<2x64xf32>
    %148 = arith.divf %146, %147 : vector<2x64xf32>
    %149 = arith.mulf %140, %119 : vector<2x64xf32>
    %150 = arith.mulf %134, %142 : vector<2x64xf32>
    %151 = arith.addf %149, %150 : vector<2x64xf32>
    %152 = math.tanh %151 : vector<2x64xf32>
    %153 = arith.mulf %148, %152 : vector<2x64xf32>
    %c4_48 = arith.constant 4 : index
    %c0_49 = arith.constant 0 : index
    %154 = vector.load %arg14[%c4_48, %c0_49] : memref<16x64xf32, #tpu.memory_space<vmem>>, vector<2x64xf32>
    tpu.vector_store %arg14[%c4_48, %c0_49], %153 {strides = array<i32>} : memref<16x64xf32, #tpu.memory_space<vmem>>, vector<2x64xf32>,
    %c5_i32 = arith.constant 5 : i32
    %155 = vector.broadcast %c5_i32 : i32 to vector<2x1xi32>
    %156 = arith.cmpi sgt, %6, %155 : vector<2x1xi32>
    %157 = vector.broadcast %28 : vector<1x64xi1> to vector<2x64xi1>
    %158 = vector.broadcast %156 : vector<2x1xi1> to vector<2x64xi1>
    %159 = arith.ori %157, %158 : vector<2x64xi1>
    %160 = arith.select %159, %153, %118 : vector<2x64xi1>, vector<2x64xf32>
    %161 = arith.select %159, %151, %119 : vector<2x64xi1>, vector<2x64xf32>
    %c6 = arith.constant 6 : index
    %c0_50 = arith.constant 0 : index
    %162 = vector.load %arg13[%c6, %c0_50] : memref<16x256xf32, #tpu.memory_space<vmem>>, vector<2x256xf32>
    %c8 = arith.constant 8 : index
    %c0_51 = arith.constant 0 : index
    %163 = vector.load %arg13[%c8, %c0_51] : memref<16x256xf32, #tpu.memory_space<vmem>>, vector<2x256xf32>
    %164 = vector.shape_cast %25 : vector<1x256xi1> to vector<1x256xi1>
    %165 = vector.broadcast %164 : vector<1x256xi1> to vector<2x256xi1>
    %166 = arith.select %165, %162, %163 : vector<2x256xi1>, vector<2x256xf32>
    %cst_52 = arith.constant dense<0.000000e+00> : vector<2x256xf32>
    %167 = tpu.matmul %160, %0, %cst_52 {dimension_numbers = #tpu.dot_dimension_numbers<[1], [0], [0], [1], [0, 0, 1, 1], [], []>} : vector<2x64xf32>, vector<64x256xf32>, vector<2x256xf32> -> vector<2x256xf32>
    %168 = arith.addf %166, %167 : vector<2x256xf32>
    %169 = vector.broadcast %1 : vector<1x256xf32> to vector<2x256xf32>
    %170 = arith.addf %168, %169 : vector<2x256xf32>
    %171 = vector.extract_strided_slice %170 {offsets = [0, 0], sizes = [2, 64], strides = [1, 1]} : vector<2x256xf32> to vector<2x64xf32>
    %172 = arith.negf %171 : vector<2x64xf32>
    %173 = math.exp %172 : vector<2x64xf32>
    %cst_53 = arith.constant 1.000000e+00 : f32
    %174 = vector.broadcast %cst_53 : f32 to vector<2x64xf32>
    %175 = arith.addf %174, %173 : vector<2x64xf32>
    %176 = arith.divf %174, %175 : vector<2x64xf32>
    %177 = vector.extract_strided_slice %170 {offsets = [0, 64], sizes = [2, 64], strides = [1, 1]} : vector<2x256xf32> to vector<2x64xf32>
    %178 = arith.negf %177 : vector<2x64xf32>
    %179 = math.exp %178 : vector<2x64xf32>
    %cst_54 = arith.constant 1.000000e+00 : f32
    %180 = vector.broadcast %cst_54 : f32 to vector<2x64xf32>
    %181 = arith.addf %180, %179 : vector<2x64xf32>
    %182 = arith.divf %180, %181 : vector<2x64xf32>
    %183 = vector.extract_strided_slice %170 {offsets = [0, 128], sizes = [2, 64], strides = [1, 1]} : vector<2x256xf32> to vector<2x64xf32>
    %184 = math.tanh %183 : vector<2x64xf32>
    %185 = vector.extract_strided_slice %170 {offsets = [0, 192], sizes = [2, 64], strides = [1, 1]} : vector<2x256xf32> to vector<2x64xf32>
    %186 = arith.negf %185 : vector<2x64xf32>
    %187 = math.exp %186 : vector<2x64xf32>
    %cst_55 = arith.constant 1.000000e+00 : f32
    %188 = vector.broadcast %cst_55 : f32 to vector<2x64xf32>
    %189 = arith.addf %188, %187 : vector<2x64xf32>
    %190 = arith.divf %188, %189 : vector<2x64xf32>
    %191 = arith.mulf %182, %161 : vector<2x64xf32>
    %192 = arith.mulf %176, %184 : vector<2x64xf32>
    %193 = arith.addf %191, %192 : vector<2x64xf32>
    %194 = math.tanh %193 : vector<2x64xf32>
    %195 = arith.mulf %190, %194 : vector<2x64xf32>
    %c6_56 = arith.constant 6 : index
    %c0_57 = arith.constant 0 : index
    %196 = vector.load %arg14[%c6_56, %c0_57] : memref<16x64xf32, #tpu.memory_space<vmem>>, vector<2x64xf32>
    tpu.vector_store %arg14[%c6_56, %c0_57], %195 {strides = array<i32>} : memref<16x64xf32, #tpu.memory_space<vmem>>, vector<2x64xf32>,
    %c4_i32 = arith.constant 4 : i32
    %197 = vector.broadcast %c4_i32 : i32 to vector<2x1xi32>
    %198 = arith.cmpi sgt, %6, %197 : vector<2x1xi32>
    %199 = vector.broadcast %28 : vector<1x64xi1> to vector<2x64xi1>
    %200 = vector.broadcast %198 : vector<2x1xi1> to vector<2x64xi1>
    %201 = arith.ori %199, %200 : vector<2x64xi1>
    %202 = arith.select %201, %195, %160 : vector<2x64xi1>, vector<2x64xf32>
    %203 = arith.select %201, %193, %161 : vector<2x64xi1>, vector<2x64xf32>
    %c8_58 = arith.constant 8 : index
    %c0_59 = arith.constant 0 : index
    %204 = vector.load %arg13[%c8_58, %c0_59] : memref<16x256xf32, #tpu.memory_space<vmem>>, vector<2x256xf32>
    %c6_60 = arith.constant 6 : index
    %c0_61 = arith.constant 0 : index
    %205 = vector.load %arg13[%c6_60, %c0_61] : memref<16x256xf32, #tpu.memory_space<vmem>>, vector<2x256xf32>
    %206 = vector.shape_cast %25 : vector<1x256xi1> to vector<1x256xi1>
    %207 = vector.broadcast %206 : vector<1x256xi1> to vector<2x256xi1>
    %208 = arith.select %207, %204, %205 : vector<2x256xi1>, vector<2x256xf32>
    %cst_62 = arith.constant dense<0.000000e+00> : vector<2x256xf32>
    %209 = tpu.matmul %202, %0, %cst_62 {dimension_numbers = #tpu.dot_dimension_numbers<[1], [0], [0], [1], [0, 0, 1, 1], [], []>} : vector<2x64xf32>, vector<64x256xf32>, vector<2x256xf32> -> vector<2x256xf32>
    %210 = arith.addf %208, %209 : vector<2x256xf32>
    %211 = vector.broadcast %1 : vector<1x256xf32> to vector<2x256xf32>
    %212 = arith.addf %210, %211 : vector<2x256xf32>
    %213 = vector.extract_strided_slice %212 {offsets = [0, 0], sizes = [2, 64], strides = [1, 1]} : vector<2x256xf32> to vector<2x64xf32>
    %214 = arith.negf %213 : vector<2x64xf32>
    %215 = math.exp %214 : vector<2x64xf32>
    %cst_63 = arith.constant 1.000000e+00 : f32
    %216 = vector.broadcast %cst_63 : f32 to vector<2x64xf32>
    %217 = arith.addf %216, %215 : vector<2x64xf32>
    %218 = arith.divf %216, %217 : vector<2x64xf32>
    %219 = vector.extract_strided_slice %212 {offsets = [0, 64], sizes = [2, 64], strides = [1, 1]} : vector<2x256xf32> to vector<2x64xf32>
    %220 = arith.negf %219 : vector<2x64xf32>
    %221 = math.exp %220 : vector<2x64xf32>
    %cst_64 = arith.constant 1.000000e+00 : f32
    %222 = vector.broadcast %cst_64 : f32 to vector<2x64xf32>
    %223 = arith.addf %222, %221 : vector<2x64xf32>
    %224 = arith.divf %222, %223 : vector<2x64xf32>
    %225 = vector.extract_strided_slice %212 {offsets = [0, 128], sizes = [2, 64], strides = [1, 1]} : vector<2x256xf32> to vector<2x64xf32>
    %226 = math.tanh %225 : vector<2x64xf32>
    %227 = vector.extract_strided_slice %212 {offsets = [0, 192], sizes = [2, 64], strides = [1, 1]} : vector<2x256xf32> to vector<2x64xf32>
    %228 = arith.negf %227 : vector<2x64xf32>
    %229 = math.exp %228 : vector<2x64xf32>
    %cst_65 = arith.constant 1.000000e+00 : f32
    %230 = vector.broadcast %cst_65 : f32 to vector<2x64xf32>
    %231 = arith.addf %230, %229 : vector<2x64xf32>
    %232 = arith.divf %230, %231 : vector<2x64xf32>
    %233 = arith.mulf %224, %203 : vector<2x64xf32>
    %234 = arith.mulf %218, %226 : vector<2x64xf32>
    %235 = arith.addf %233, %234 : vector<2x64xf32>
    %236 = math.tanh %235 : vector<2x64xf32>
    %237 = arith.mulf %232, %236 : vector<2x64xf32>
    %c8_66 = arith.constant 8 : index
    %c0_67 = arith.constant 0 : index
    %238 = vector.load %arg14[%c8_66, %c0_67] : memref<16x64xf32, #tpu.memory_space<vmem>>, vector<2x64xf32>
    tpu.vector_store %arg14[%c8_66, %c0_67], %237 {strides = array<i32>} : memref<16x64xf32, #tpu.memory_space<vmem>>, vector<2x64xf32>,
    %c3_i32 = arith.constant 3 : i32
    %239 = vector.broadcast %c3_i32 : i32 to vector<2x1xi32>
    %240 = arith.cmpi sgt, %6, %239 : vector<2x1xi32>
    %241 = vector.broadcast %28 : vector<1x64xi1> to vector<2x64xi1>
    %242 = vector.broadcast %240 : vector<2x1xi1> to vector<2x64xi1>
    %243 = arith.ori %241, %242 : vector<2x64xi1>
    %244 = arith.select %243, %237, %202 : vector<2x64xi1>, vector<2x64xf32>
    %245 = arith.select %243, %235, %203 : vector<2x64xi1>, vector<2x64xf32>
    %c10_68 = arith.constant 10 : index
    %c0_69 = arith.constant 0 : index
    %246 = vector.load %arg13[%c10_68, %c0_69] : memref<16x256xf32, #tpu.memory_space<vmem>>, vector<2x256xf32>
    %c4_70 = arith.constant 4 : index
    %c0_71 = arith.constant 0 : index
    %247 = vector.load %arg13[%c4_70, %c0_71] : memref<16x256xf32, #tpu.memory_space<vmem>>, vector<2x256xf32>
    %248 = vector.shape_cast %25 : vector<1x256xi1> to vector<1x256xi1>
    %249 = vector.broadcast %248 : vector<1x256xi1> to vector<2x256xi1>
    %250 = arith.select %249, %246, %247 : vector<2x256xi1>, vector<2x256xf32>
    %cst_72 = arith.constant dense<0.000000e+00> : vector<2x256xf32>
    %251 = tpu.matmul %244, %0, %cst_72 {dimension_numbers = #tpu.dot_dimension_numbers<[1], [0], [0], [1], [0, 0, 1, 1], [], []>} : vector<2x64xf32>, vector<64x256xf32>, vector<2x256xf32> -> vector<2x256xf32>
    %252 = arith.addf %250, %251 : vector<2x256xf32>
    %253 = vector.broadcast %1 : vector<1x256xf32> to vector<2x256xf32>
    %254 = arith.addf %252, %253 : vector<2x256xf32>
    %255 = vector.extract_strided_slice %254 {offsets = [0, 0], sizes = [2, 64], strides = [1, 1]} : vector<2x256xf32> to vector<2x64xf32>
    %256 = arith.negf %255 : vector<2x64xf32>
    %257 = math.exp %256 : vector<2x64xf32>
    %cst_73 = arith.constant 1.000000e+00 : f32
    %258 = vector.broadcast %cst_73 : f32 to vector<2x64xf32>
    %259 = arith.addf %258, %257 : vector<2x64xf32>
    %260 = arith.divf %258, %259 : vector<2x64xf32>
    %261 = vector.extract_strided_slice %254 {offsets = [0, 64], sizes = [2, 64], strides = [1, 1]} : vector<2x256xf32> to vector<2x64xf32>
    %262 = arith.negf %261 : vector<2x64xf32>
    %263 = math.exp %262 : vector<2x64xf32>
    %cst_74 = arith.constant 1.000000e+00 : f32
    %264 = vector.broadcast %cst_74 : f32 to vector<2x64xf32>
    %265 = arith.addf %264, %263 : vector<2x64xf32>
    %266 = arith.divf %264, %265 : vector<2x64xf32>
    %267 = vector.extract_strided_slice %254 {offsets = [0, 128], sizes = [2, 64], strides = [1, 1]} : vector<2x256xf32> to vector<2x64xf32>
    %268 = math.tanh %267 : vector<2x64xf32>
    %269 = vector.extract_strided_slice %254 {offsets = [0, 192], sizes = [2, 64], strides = [1, 1]} : vector<2x256xf32> to vector<2x64xf32>
    %270 = arith.negf %269 : vector<2x64xf32>
    %271 = math.exp %270 : vector<2x64xf32>
    %cst_75 = arith.constant 1.000000e+00 : f32
    %272 = vector.broadcast %cst_75 : f32 to vector<2x64xf32>
    %273 = arith.addf %272, %271 : vector<2x64xf32>
    %274 = arith.divf %272, %273 : vector<2x64xf32>
    %275 = arith.mulf %266, %245 : vector<2x64xf32>
    %276 = arith.mulf %260, %268 : vector<2x64xf32>
    %277 = arith.addf %275, %276 : vector<2x64xf32>
    %278 = math.tanh %277 : vector<2x64xf32>
    %279 = arith.mulf %274, %278 : vector<2x64xf32>
    %c10_76 = arith.constant 10 : index
    %c0_77 = arith.constant 0 : index
    %280 = vector.load %arg14[%c10_76, %c0_77] : memref<16x64xf32, #tpu.memory_space<vmem>>, vector<2x64xf32>
    tpu.vector_store %arg14[%c10_76, %c0_77], %279 {strides = array<i32>} : memref<16x64xf32, #tpu.memory_space<vmem>>, vector<2x64xf32>,
    %c2_i32 = arith.constant 2 : i32
    %281 = vector.broadcast %c2_i32 : i32 to vector<2x1xi32>
    %282 = arith.cmpi sgt, %6, %281 : vector<2x1xi32>
    %283 = vector.broadcast %28 : vector<1x64xi1> to vector<2x64xi1>
    %284 = vector.broadcast %282 : vector<2x1xi1> to vector<2x64xi1>
    %285 = arith.ori %283, %284 : vector<2x64xi1>
    %286 = arith.select %285, %279, %244 : vector<2x64xi1>, vector<2x64xf32>
    %287 = arith.select %285, %277, %245 : vector<2x64xi1>, vector<2x64xf32>
    %c12_78 = arith.constant 12 : index
    %c0_79 = arith.constant 0 : index
    %288 = vector.load %arg13[%c12_78, %c0_79] : memref<16x256xf32, #tpu.memory_space<vmem>>, vector<2x256xf32>
    %c2_80 = arith.constant 2 : index
    %c0_81 = arith.constant 0 : index
    %289 = vector.load %arg13[%c2_80, %c0_81] : memref<16x256xf32, #tpu.memory_space<vmem>>, vector<2x256xf32>
    %290 = vector.shape_cast %25 : vector<1x256xi1> to vector<1x256xi1>
    %291 = vector.broadcast %290 : vector<1x256xi1> to vector<2x256xi1>
    %292 = arith.select %291, %288, %289 : vector<2x256xi1>, vector<2x256xf32>
    %cst_82 = arith.constant dense<0.000000e+00> : vector<2x256xf32>
    %293 = tpu.matmul %286, %0, %cst_82 {dimension_numbers = #tpu.dot_dimension_numbers<[1], [0], [0], [1], [0, 0, 1, 1], [], []>} : vector<2x64xf32>, vector<64x256xf32>, vector<2x256xf32> -> vector<2x256xf32>
    %294 = arith.addf %292, %293 : vector<2x256xf32>
    %295 = vector.broadcast %1 : vector<1x256xf32> to vector<2x256xf32>
    %296 = arith.addf %294, %295 : vector<2x256xf32>
    %297 = vector.extract_strided_slice %296 {offsets = [0, 0], sizes = [2, 64], strides = [1, 1]} : vector<2x256xf32> to vector<2x64xf32>
    %298 = arith.negf %297 : vector<2x64xf32>
    %299 = math.exp %298 : vector<2x64xf32>
    %cst_83 = arith.constant 1.000000e+00 : f32
    %300 = vector.broadcast %cst_83 : f32 to vector<2x64xf32>
    %301 = arith.addf %300, %299 : vector<2x64xf32>
    %302 = arith.divf %300, %301 : vector<2x64xf32>
    %303 = vector.extract_strided_slice %296 {offsets = [0, 64], sizes = [2, 64], strides = [1, 1]} : vector<2x256xf32> to vector<2x64xf32>
    %304 = arith.negf %303 : vector<2x64xf32>
    %305 = math.exp %304 : vector<2x64xf32>
    %cst_84 = arith.constant 1.000000e+00 : f32
    %306 = vector.broadcast %cst_84 : f32 to vector<2x64xf32>
    %307 = arith.addf %306, %305 : vector<2x64xf32>
    %308 = arith.divf %306, %307 : vector<2x64xf32>
    %309 = vector.extract_strided_slice %296 {offsets = [0, 128], sizes = [2, 64], strides = [1, 1]} : vector<2x256xf32> to vector<2x64xf32>
    %310 = math.tanh %309 : vector<2x64xf32>
    %311 = vector.extract_strided_slice %296 {offsets = [0, 192], sizes = [2, 64], strides = [1, 1]} : vector<2x256xf32> to vector<2x64xf32>
    %312 = arith.negf %311 : vector<2x64xf32>
    %313 = math.exp %312 : vector<2x64xf32>
    %cst_85 = arith.constant 1.000000e+00 : f32
    %314 = vector.broadcast %cst_85 : f32 to vector<2x64xf32>
    %315 = arith.addf %314, %313 : vector<2x64xf32>
    %316 = arith.divf %314, %315 : vector<2x64xf32>
    %317 = arith.mulf %308, %287 : vector<2x64xf32>
    %318 = arith.mulf %302, %310 : vector<2x64xf32>
    %319 = arith.addf %317, %318 : vector<2x64xf32>
    %320 = math.tanh %319 : vector<2x64xf32>
    %321 = arith.mulf %316, %320 : vector<2x64xf32>
    %c12_86 = arith.constant 12 : index
    %c0_87 = arith.constant 0 : index
    %322 = vector.load %arg14[%c12_86, %c0_87] : memref<16x64xf32, #tpu.memory_space<vmem>>, vector<2x64xf32>
    tpu.vector_store %arg14[%c12_86, %c0_87], %321 {strides = array<i32>} : memref<16x64xf32, #tpu.memory_space<vmem>>, vector<2x64xf32>,
    %c1_i32_88 = arith.constant 1 : i32
    %323 = vector.broadcast %c1_i32_88 : i32 to vector<2x1xi32>
    %324 = arith.cmpi sgt, %6, %323 : vector<2x1xi32>
    %325 = vector.broadcast %28 : vector<1x64xi1> to vector<2x64xi1>
    %326 = vector.broadcast %324 : vector<2x1xi1> to vector<2x64xi1>
    %327 = arith.ori %325, %326 : vector<2x64xi1>
    %328 = arith.select %327, %321, %286 : vector<2x64xi1>, vector<2x64xf32>
    %329 = arith.select %327, %319, %287 : vector<2x64xi1>, vector<2x64xf32>
    %c14_89 = arith.constant 14 : index
    %c0_90 = arith.constant 0 : index
    %330 = vector.load %arg13[%c14_89, %c0_90] : memref<16x256xf32, #tpu.memory_space<vmem>>, vector<2x256xf32>
    %c0_91 = arith.constant 0 : index
    %c0_92 = arith.constant 0 : index
    %331 = vector.load %arg13[%c0_91, %c0_92] : memref<16x256xf32, #tpu.memory_space<vmem>>, vector<2x256xf32>
    %332 = vector.shape_cast %25 : vector<1x256xi1> to vector<1x256xi1>
    %333 = vector.broadcast %332 : vector<1x256xi1> to vector<2x256xi1>
    %334 = arith.select %333, %330, %331 : vector<2x256xi1>, vector<2x256xf32>
    %cst_93 = arith.constant dense<0.000000e+00> : vector<2x256xf32>
    %335 = tpu.matmul %328, %0, %cst_93 {dimension_numbers = #tpu.dot_dimension_numbers<[1], [0], [0], [1], [0, 0, 1, 1], [], []>} : vector<2x64xf32>, vector<64x256xf32>, vector<2x256xf32> -> vector<2x256xf32>
    %336 = arith.addf %334, %335 : vector<2x256xf32>
    %337 = vector.broadcast %1 : vector<1x256xf32> to vector<2x256xf32>
    %338 = arith.addf %336, %337 : vector<2x256xf32>
    %339 = vector.extract_strided_slice %338 {offsets = [0, 0], sizes = [2, 64], strides = [1, 1]} : vector<2x256xf32> to vector<2x64xf32>
    %340 = arith.negf %339 : vector<2x64xf32>
    %341 = math.exp %340 : vector<2x64xf32>
    %cst_94 = arith.constant 1.000000e+00 : f32
    %342 = vector.broadcast %cst_94 : f32 to vector<2x64xf32>
    %343 = arith.addf %342, %341 : vector<2x64xf32>
    %344 = arith.divf %342, %343 : vector<2x64xf32>
    %345 = vector.extract_strided_slice %338 {offsets = [0, 64], sizes = [2, 64], strides = [1, 1]} : vector<2x256xf32> to vector<2x64xf32>
    %346 = arith.negf %345 : vector<2x64xf32>
    %347 = math.exp %346 : vector<2x64xf32>
    %cst_95 = arith.constant 1.000000e+00 : f32
    %348 = vector.broadcast %cst_95 : f32 to vector<2x64xf32>
    %349 = arith.addf %348, %347 : vector<2x64xf32>
    %350 = arith.divf %348, %349 : vector<2x64xf32>
    %351 = vector.extract_strided_slice %338 {offsets = [0, 128], sizes = [2, 64], strides = [1, 1]} : vector<2x256xf32> to vector<2x64xf32>
    %352 = math.tanh %351 : vector<2x64xf32>
    %353 = vector.extract_strided_slice %338 {offsets = [0, 192], sizes = [2, 64], strides = [1, 1]} : vector<2x256xf32> to vector<2x64xf32>
    %354 = arith.negf %353 : vector<2x64xf32>
    %355 = math.exp %354 : vector<2x64xf32>
    %cst_96 = arith.constant 1.000000e+00 : f32
    %356 = vector.broadcast %cst_96 : f32 to vector<2x64xf32>
    %357 = arith.addf %356, %355 : vector<2x64xf32>
    %358 = arith.divf %356, %357 : vector<2x64xf32>
    %359 = arith.mulf %350, %329 : vector<2x64xf32>
    %360 = arith.mulf %344, %352 : vector<2x64xf32>
    %361 = arith.addf %359, %360 : vector<2x64xf32>
    %362 = math.tanh %361 : vector<2x64xf32>
    %363 = arith.mulf %358, %362 : vector<2x64xf32>
    %c14_97 = arith.constant 14 : index
    %c0_98 = arith.constant 0 : index
    %364 = vector.load %arg14[%c14_97, %c0_98] : memref<16x64xf32, #tpu.memory_space<vmem>>, vector<2x64xf32>
    tpu.vector_store %arg14[%c14_97, %c0_98], %363 {strides = array<i32>} : memref<16x64xf32, #tpu.memory_space<vmem>>, vector<2x64xf32>,
    %c0_99 = arith.constant 0 : index
    %c0_100 = arith.constant 0 : index
    %365 = vector.load %arg14[%c0_99, %c0_100] : memref<16x64xf32, #tpu.memory_space<vmem>>, vector<16x64xf32>
    %c0_101 = arith.constant 0 : index
    %c0_102 = arith.constant 0 : index
    %366 = vector.load %arg7[%c0_101, %c0_102] : memref<64x10xf32, #tpu.memory_space<vmem>>, vector<64x10xf32>
    %cst_103 = arith.constant dense<0.000000e+00> : vector<16x10xf32>
    %367 = tpu.matmul %365, %366, %cst_103 {dimension_numbers = #tpu.dot_dimension_numbers<[1], [0], [0], [1], [0, 0, 1, 1], [], []>} : vector<16x64xf32>, vector<64x10xf32>, vector<16x10xf32> -> vector<16x10xf32>
    %c0_i32_104 = arith.constant 0 : i32
    %368 = vector.broadcast %c0_i32_104 : i32 to vector<2x1xi32>
    %369 = arith.cmpi sgt, %6, %368 : vector<2x1xi32>
    %370 = vector.extract_strided_slice %367 {offsets = [0, 0], sizes = [2, 5], strides = [1, 1]} : vector<16x10xf32> to vector<2x5xf32>
    %371 = vector.extract_strided_slice %367 {offsets = [14, 5], sizes = [2, 5], strides = [1, 1]} : vector<16x10xf32> to vector<2x5xf32>
    %372 = arith.addf %370, %371 : vector<2x5xf32>
    %cst_105 = arith.constant 0.000000e+00 : f32
    %373 = vector.shape_cast %369 : vector<2x1xi1> to vector<2x1xi1>
    %374 = vector.broadcast %373 : vector<2x1xi1> to vector<2x5xi1>
    %375 = vector.broadcast %cst_105 : f32 to vector<2x5xf32>
    %376 = arith.select %374, %372, %375 : vector<2x5xi1>, vector<2x5xf32>
    %377 = vector.broadcast %2 : vector<1x5xf32> to vector<2x5xf32>
    %378 = arith.addf %377, %376 : vector<2x5xf32>
    %c0_106 = arith.constant 0 : index
    %c0_107 = arith.constant 0 : index
    %379 = vector.load %arg3[%c0_106, %c0_107] : memref<2x8xi32, #tpu.memory_space<vmem>>, vector<2x1xi32>
    %380 = vector.broadcast %379 : vector<2x1xi32> to vector<2x5xi32>
    %381 = vector.broadcast %29 : vector<1x5xi32> to vector<2x5xi32>
    %382 = arith.cmpi eq, %380, %381 : vector<2x5xi32>
    %383 = arith.extui %382 : vector<2x5xi1> to vector<2x5xi32>
    %384 = arith.sitofp %383 : vector<2x5xi32> to vector<2x5xf32>
    %385 = vector.broadcast %3 : vector<1x5xf32> to vector<2x5xf32>
    %386 = arith.addf %385, %378 : vector<2x5xf32>
    %387 = arith.mulf %386, %384 : vector<2x5xf32>
    %cst_108 = arith.constant dense<0.000000e+00> : vector<2xf32>
    %388 = vector.multi_reduction <add>, %387, %cst_108 [1] : vector<2x5xf32> to vector<2xf32>
    %389 = vector.shape_cast %388 : vector<2xf32> to vector<2x1xf32>
    %c1_i32_109 = arith.constant 1 : i32
    %390 = vector.broadcast %c1_i32_109 : i32 to vector<2x1xi32>
    %391 = arith.cmpi sgt, %6, %390 : vector<2x1xi32>
    %392 = arith.extui %391 : vector<2x1xi1> to vector<2x1xi32>
    %393 = arith.sitofp %392 : vector<2x1xi32> to vector<2x1xf32>
    %394 = vector.extract_strided_slice %367 {offsets = [2, 0], sizes = [2, 5], strides = [1, 1]} : vector<16x10xf32> to vector<2x5xf32>
    %395 = vector.extract_strided_slice %367 {offsets = [12, 5], sizes = [2, 5], strides = [1, 1]} : vector<16x10xf32> to vector<2x5xf32>
    %396 = arith.addf %394, %395 : vector<2x5xf32>
    %cst_110 = arith.constant 0.000000e+00 : f32
    %397 = vector.shape_cast %391 : vector<2x1xi1> to vector<2x1xi1>
    %398 = vector.broadcast %397 : vector<2x1xi1> to vector<2x5xi1>
    %399 = vector.broadcast %cst_110 : f32 to vector<2x5xf32>
    %400 = arith.select %398, %396, %399 : vector<2x5xi1>, vector<2x5xf32>
    %401 = vector.broadcast %2 : vector<1x5xf32> to vector<2x5xf32>
    %402 = arith.addf %401, %400 : vector<2x5xf32>
    %c0_111 = arith.constant 0 : index
    %c1 = arith.constant 1 : index
    %403 = vector.load %arg3[%c0_111, %c1] : memref<2x8xi32, #tpu.memory_space<vmem>>, vector<2x1xi32>
    %404 = vector.broadcast %403 : vector<2x1xi32> to vector<2x5xi32>
    %405 = vector.broadcast %29 : vector<1x5xi32> to vector<2x5xi32>
    %406 = arith.cmpi eq, %404, %405 : vector<2x5xi32>
    %407 = arith.extui %406 : vector<2x5xi1> to vector<2x5xi32>
    %408 = arith.sitofp %407 : vector<2x5xi32> to vector<2x5xf32>
    %cst_112 = arith.constant dense<0.000000e+00> : vector<2x5xf32>
    %409 = tpu.matmul %384, %5, %cst_112 {dimension_numbers = #tpu.dot_dimension_numbers<[1], [0], [0], [1], [0, 0, 1, 1], [], []>} : vector<2x5xf32>, vector<5x5xf32>, vector<2x5xf32> -> vector<2x5xf32>
    %410 = arith.mulf %409, %408 : vector<2x5xf32>
    %cst_113 = arith.constant dense<0.000000e+00> : vector<2xf32>
    %411 = vector.multi_reduction <add>, %410, %cst_113 [1] : vector<2x5xf32> to vector<2xf32>
    %412 = vector.shape_cast %411 : vector<2xf32> to vector<2x1xf32>
    %413 = arith.mulf %402, %408 : vector<2x5xf32>
    %cst_114 = arith.constant dense<0.000000e+00> : vector<2xf32>
    %414 = vector.multi_reduction <add>, %413, %cst_114 [1] : vector<2x5xf32> to vector<2xf32>
    %415 = vector.shape_cast %414 : vector<2xf32> to vector<2x1xf32>
    %416 = arith.addf %412, %415 : vector<2x1xf32>
    %417 = arith.mulf %393, %416 : vector<2x1xf32>
    %418 = arith.addf %389, %417 : vector<2x1xf32>
    %419 = vector.shape_cast %386 : vector<2x5xf32> to vector<2x5x1xf32>
    %420 = vector.shape_cast %5 : vector<5x5xf32> to vector<1x5x5xf32>
    %421 = vector.broadcast %419 : vector<2x5x1xf32> to vector<2x5x5xf32>
    %422 = vector.broadcast %420 : vector<1x5x5xf32> to vector<2x5x5xf32>
    %423 = arith.addf %421, %422 : vector<2x5x5xf32>
    %424 = vector.shape_cast %402 : vector<2x5xf32> to vector<2x1x5xf32>
    %425 = vector.broadcast %424 : vector<2x1x5xf32> to vector<2x5x5xf32>
    %426 = arith.addf %423, %425 : vector<2x5x5xf32>
    %cst_115 = arith.constant dense<0xFF800000> : vector<2x5xf32>
    %427 = vector.multi_reduction <maximumf>, %426, %cst_115 [1] : vector<2x5x5xf32> to vector<2x5xf32>
    %428 = vector.shape_cast %427 : vector<2x5xf32> to vector<2x1x5xf32>
    %429 = vector.broadcast %428 : vector<2x1x5xf32> to vector<2x5x5xf32>
    %430 = arith.subf %426, %429 : vector<2x5x5xf32>
    %431 = math.exp %430 : vector<2x5x5xf32>
    %cst_116 = arith.constant dense<0.000000e+00> : vector<2x5xf32>
    %432 = vector.multi_reduction <add>, %431, %cst_116 [1] : vector<2x5x5xf32> to vector<2x5xf32>
    %433 = math.log %432 : vector<2x5xf32>
    %434 = arith.addf %433, %427 : vector<2x5xf32>
    %435 = vector.shape_cast %391 : vector<2x1xi1> to vector<2x1xi1>
    %436 = vector.broadcast %435 : vector<2x1xi1> to vector<2x5xi1>
    %437 = arith.select %436, %434, %386 : vector<2x5xi1>, vector<2x5xf32>
    %438 = vector.shape_cast %391 : vector<2x1xi1> to vector<2x1xi1>
    %439 = vector.broadcast %438 : vector<2x1xi1> to vector<2x5xi1>
    %440 = arith.select %439, %408, %384 : vector<2x5xi1>, vector<2x5xf32>
    %c2_i32_117 = arith.constant 2 : i32
    %441 = vector.broadcast %c2_i32_117 : i32 to vector<2x1xi32>
    %442 = arith.cmpi sgt, %6, %441 : vector<2x1xi32>
    %443 = arith.extui %442 : vector<2x1xi1> to vector<2x1xi32>
    %444 = arith.sitofp %443 : vector<2x1xi32> to vector<2x1xf32>
    %445 = vector.extract_strided_slice %367 {offsets = [4, 0], sizes = [2, 5], strides = [1, 1]} : vector<16x10xf32> to vector<2x5xf32>
    %446 = vector.extract_strided_slice %367 {offsets = [10, 5], sizes = [2, 5], strides = [1, 1]} : vector<16x10xf32> to vector<2x5xf32>
    %447 = arith.addf %445, %446 : vector<2x5xf32>
    %cst_118 = arith.constant 0.000000e+00 : f32
    %448 = vector.shape_cast %442 : vector<2x1xi1> to vector<2x1xi1>
    %449 = vector.broadcast %448 : vector<2x1xi1> to vector<2x5xi1>
    %450 = vector.broadcast %cst_118 : f32 to vector<2x5xf32>
    %451 = arith.select %449, %447, %450 : vector<2x5xi1>, vector<2x5xf32>
    %452 = vector.broadcast %2 : vector<1x5xf32> to vector<2x5xf32>
    %453 = arith.addf %452, %451 : vector<2x5xf32>
    %c0_119 = arith.constant 0 : index
    %c2_120 = arith.constant 2 : index
    %454 = vector.load %arg3[%c0_119, %c2_120] : memref<2x8xi32, #tpu.memory_space<vmem>>, vector<2x1xi32>
    %455 = vector.broadcast %454 : vector<2x1xi32> to vector<2x5xi32>
    %456 = vector.broadcast %29 : vector<1x5xi32> to vector<2x5xi32>
    %457 = arith.cmpi eq, %455, %456 : vector<2x5xi32>
    %458 = arith.extui %457 : vector<2x5xi1> to vector<2x5xi32>
    %459 = arith.sitofp %458 : vector<2x5xi32> to vector<2x5xf32>
    %cst_121 = arith.constant dense<0.000000e+00> : vector<2x5xf32>
    %460 = tpu.matmul %408, %5, %cst_121 {dimension_numbers = #tpu.dot_dimension_numbers<[1], [0], [0], [1], [0, 0, 1, 1], [], []>} : vector<2x5xf32>, vector<5x5xf32>, vector<2x5xf32> -> vector<2x5xf32>
    %461 = arith.mulf %460, %459 : vector<2x5xf32>
    %cst_122 = arith.constant dense<0.000000e+00> : vector<2xf32>
    %462 = vector.multi_reduction <add>, %461, %cst_122 [1] : vector<2x5xf32> to vector<2xf32>
    %463 = vector.shape_cast %462 : vector<2xf32> to vector<2x1xf32>
    %464 = arith.mulf %453, %459 : vector<2x5xf32>
    %cst_123 = arith.constant dense<0.000000e+00> : vector<2xf32>
    %465 = vector.multi_reduction <add>, %464, %cst_123 [1] : vector<2x5xf32> to vector<2xf32>
    %466 = vector.shape_cast %465 : vector<2xf32> to vector<2x1xf32>
    %467 = arith.addf %463, %466 : vector<2x1xf32>
    %468 = arith.mulf %444, %467 : vector<2x1xf32>
    %469 = arith.addf %418, %468 : vector<2x1xf32>
    %470 = vector.shape_cast %437 : vector<2x5xf32> to vector<2x5x1xf32>
    %471 = vector.shape_cast %5 : vector<5x5xf32> to vector<1x5x5xf32>
    %472 = vector.broadcast %470 : vector<2x5x1xf32> to vector<2x5x5xf32>
    %473 = vector.broadcast %471 : vector<1x5x5xf32> to vector<2x5x5xf32>
    %474 = arith.addf %472, %473 : vector<2x5x5xf32>
    %475 = vector.shape_cast %453 : vector<2x5xf32> to vector<2x1x5xf32>
    %476 = vector.broadcast %475 : vector<2x1x5xf32> to vector<2x5x5xf32>
    %477 = arith.addf %474, %476 : vector<2x5x5xf32>
    %cst_124 = arith.constant dense<0xFF800000> : vector<2x5xf32>
    %478 = vector.multi_reduction <maximumf>, %477, %cst_124 [1] : vector<2x5x5xf32> to vector<2x5xf32>
    %479 = vector.shape_cast %478 : vector<2x5xf32> to vector<2x1x5xf32>
    %480 = vector.broadcast %479 : vector<2x1x5xf32> to vector<2x5x5xf32>
    %481 = arith.subf %477, %480 : vector<2x5x5xf32>
    %482 = math.exp %481 : vector<2x5x5xf32>
    %cst_125 = arith.constant dense<0.000000e+00> : vector<2x5xf32>
    %483 = vector.multi_reduction <add>, %482, %cst_125 [1] : vector<2x5x5xf32> to vector<2x5xf32>
    %484 = math.log %483 : vector<2x5xf32>
    %485 = arith.addf %484, %478 : vector<2x5xf32>
    %486 = vector.shape_cast %442 : vector<2x1xi1> to vector<2x1xi1>
    %487 = vector.broadcast %486 : vector<2x1xi1> to vector<2x5xi1>
    %488 = arith.select %487, %485, %437 : vector<2x5xi1>, vector<2x5xf32>
    %489 = vector.shape_cast %442 : vector<2x1xi1> to vector<2x1xi1>
    %490 = vector.broadcast %489 : vector<2x1xi1> to vector<2x5xi1>
    %491 = arith.select %490, %459, %440 : vector<2x5xi1>, vector<2x5xf32>
    %c3_i32_126 = arith.constant 3 : i32
    %492 = vector.broadcast %c3_i32_126 : i32 to vector<2x1xi32>
    %493 = arith.cmpi sgt, %6, %492 : vector<2x1xi32>
    %494 = arith.extui %493 : vector<2x1xi1> to vector<2x1xi32>
    %495 = arith.sitofp %494 : vector<2x1xi32> to vector<2x1xf32>
    %496 = vector.extract_strided_slice %367 {offsets = [6, 0], sizes = [2, 5], strides = [1, 1]} : vector<16x10xf32> to vector<2x5xf32>
    %497 = vector.extract_strided_slice %367 {offsets = [8, 5], sizes = [2, 5], strides = [1, 1]} : vector<16x10xf32> to vector<2x5xf32>
    %498 = arith.addf %496, %497 : vector<2x5xf32>
    %cst_127 = arith.constant 0.000000e+00 : f32
    %499 = vector.shape_cast %493 : vector<2x1xi1> to vector<2x1xi1>
    %500 = vector.broadcast %499 : vector<2x1xi1> to vector<2x5xi1>
    %501 = vector.broadcast %cst_127 : f32 to vector<2x5xf32>
    %502 = arith.select %500, %498, %501 : vector<2x5xi1>, vector<2x5xf32>
    %503 = vector.broadcast %2 : vector<1x5xf32> to vector<2x5xf32>
    %504 = arith.addf %503, %502 : vector<2x5xf32>
    %c0_128 = arith.constant 0 : index
    %c3 = arith.constant 3 : index
    %505 = vector.load %arg3[%c0_128, %c3] : memref<2x8xi32, #tpu.memory_space<vmem>>, vector<2x1xi32>
    %506 = vector.broadcast %505 : vector<2x1xi32> to vector<2x5xi32>
    %507 = vector.broadcast %29 : vector<1x5xi32> to vector<2x5xi32>
    %508 = arith.cmpi eq, %506, %507 : vector<2x5xi32>
    %509 = arith.extui %508 : vector<2x5xi1> to vector<2x5xi32>
    %510 = arith.sitofp %509 : vector<2x5xi32> to vector<2x5xf32>
    %cst_129 = arith.constant dense<0.000000e+00> : vector<2x5xf32>
    %511 = tpu.matmul %459, %5, %cst_129 {dimension_numbers = #tpu.dot_dimension_numbers<[1], [0], [0], [1], [0, 0, 1, 1], [], []>} : vector<2x5xf32>, vector<5x5xf32>, vector<2x5xf32> -> vector<2x5xf32>
    %512 = arith.mulf %511, %510 : vector<2x5xf32>
    %cst_130 = arith.constant dense<0.000000e+00> : vector<2xf32>
    %513 = vector.multi_reduction <add>, %512, %cst_130 [1] : vector<2x5xf32> to vector<2xf32>
    %514 = vector.shape_cast %513 : vector<2xf32> to vector<2x1xf32>
    %515 = arith.mulf %504, %510 : vector<2x5xf32>
    %cst_131 = arith.constant dense<0.000000e+00> : vector<2xf32>
    %516 = vector.multi_reduction <add>, %515, %cst_131 [1] : vector<2x5xf32> to vector<2xf32>
    %517 = vector.shape_cast %516 : vector<2xf32> to vector<2x1xf32>
    %518 = arith.addf %514, %517 : vector<2x1xf32>
    %519 = arith.mulf %495, %518 : vector<2x1xf32>
    %520 = arith.addf %469, %519 : vector<2x1xf32>
    %521 = vector.shape_cast %488 : vector<2x5xf32> to vector<2x5x1xf32>
    %522 = vector.shape_cast %5 : vector<5x5xf32> to vector<1x5x5xf32>
    %523 = vector.broadcast %521 : vector<2x5x1xf32> to vector<2x5x5xf32>
    %524 = vector.broadcast %522 : vector<1x5x5xf32> to vector<2x5x5xf32>
    %525 = arith.addf %523, %524 : vector<2x5x5xf32>
    %526 = vector.shape_cast %504 : vector<2x5xf32> to vector<2x1x5xf32>
    %527 = vector.broadcast %526 : vector<2x1x5xf32> to vector<2x5x5xf32>
    %528 = arith.addf %525, %527 : vector<2x5x5xf32>
    %cst_132 = arith.constant dense<0xFF800000> : vector<2x5xf32>
    %529 = vector.multi_reduction <maximumf>, %528, %cst_132 [1] : vector<2x5x5xf32> to vector<2x5xf32>
    %530 = vector.shape_cast %529 : vector<2x5xf32> to vector<2x1x5xf32>
    %531 = vector.broadcast %530 : vector<2x1x5xf32> to vector<2x5x5xf32>
    %532 = arith.subf %528, %531 : vector<2x5x5xf32>
    %533 = math.exp %532 : vector<2x5x5xf32>
    %cst_133 = arith.constant dense<0.000000e+00> : vector<2x5xf32>
    %534 = vector.multi_reduction <add>, %533, %cst_133 [1] : vector<2x5x5xf32> to vector<2x5xf32>
    %535 = math.log %534 : vector<2x5xf32>
    %536 = arith.addf %535, %529 : vector<2x5xf32>
    %537 = vector.shape_cast %493 : vector<2x1xi1> to vector<2x1xi1>
    %538 = vector.broadcast %537 : vector<2x1xi1> to vector<2x5xi1>
    %539 = arith.select %538, %536, %488 : vector<2x5xi1>, vector<2x5xf32>
    %540 = vector.shape_cast %493 : vector<2x1xi1> to vector<2x1xi1>
    %541 = vector.broadcast %540 : vector<2x1xi1> to vector<2x5xi1>
    %542 = arith.select %541, %510, %491 : vector<2x5xi1>, vector<2x5xf32>
    %c4_i32_134 = arith.constant 4 : i32
    %543 = vector.broadcast %c4_i32_134 : i32 to vector<2x1xi32>
    %544 = arith.cmpi sgt, %6, %543 : vector<2x1xi32>
    %545 = arith.extui %544 : vector<2x1xi1> to vector<2x1xi32>
    %546 = arith.sitofp %545 : vector<2x1xi32> to vector<2x1xf32>
    %547 = vector.extract_strided_slice %367 {offsets = [8, 0], sizes = [2, 5], strides = [1, 1]} : vector<16x10xf32> to vector<2x5xf32>
    %548 = vector.extract_strided_slice %367 {offsets = [6, 5], sizes = [2, 5], strides = [1, 1]} : vector<16x10xf32> to vector<2x5xf32>
    %549 = arith.addf %547, %548 : vector<2x5xf32>
    %cst_135 = arith.constant 0.000000e+00 : f32
    %550 = vector.shape_cast %544 : vector<2x1xi1> to vector<2x1xi1>
    %551 = vector.broadcast %550 : vector<2x1xi1> to vector<2x5xi1>
    %552 = vector.broadcast %cst_135 : f32 to vector<2x5xf32>
    %553 = arith.select %551, %549, %552 : vector<2x5xi1>, vector<2x5xf32>
    %554 = vector.broadcast %2 : vector<1x5xf32> to vector<2x5xf32>
    %555 = arith.addf %554, %553 : vector<2x5xf32>
    %c0_136 = arith.constant 0 : index
    %c4_137 = arith.constant 4 : index
    %556 = vector.load %arg3[%c0_136, %c4_137] : memref<2x8xi32, #tpu.memory_space<vmem>>, vector<2x1xi32>
    %557 = vector.broadcast %556 : vector<2x1xi32> to vector<2x5xi32>
    %558 = vector.broadcast %29 : vector<1x5xi32> to vector<2x5xi32>
    %559 = arith.cmpi eq, %557, %558 : vector<2x5xi32>
    %560 = arith.extui %559 : vector<2x5xi1> to vector<2x5xi32>
    %561 = arith.sitofp %560 : vector<2x5xi32> to vector<2x5xf32>
    %cst_138 = arith.constant dense<0.000000e+00> : vector<2x5xf32>
    %562 = tpu.matmul %510, %5, %cst_138 {dimension_numbers = #tpu.dot_dimension_numbers<[1], [0], [0], [1], [0, 0, 1, 1], [], []>} : vector<2x5xf32>, vector<5x5xf32>, vector<2x5xf32> -> vector<2x5xf32>
    %563 = arith.mulf %562, %561 : vector<2x5xf32>
    %cst_139 = arith.constant dense<0.000000e+00> : vector<2xf32>
    %564 = vector.multi_reduction <add>, %563, %cst_139 [1] : vector<2x5xf32> to vector<2xf32>
    %565 = vector.shape_cast %564 : vector<2xf32> to vector<2x1xf32>
    %566 = arith.mulf %555, %561 : vector<2x5xf32>
    %cst_140 = arith.constant dense<0.000000e+00> : vector<2xf32>
    %567 = vector.multi_reduction <add>, %566, %cst_140 [1] : vector<2x5xf32> to vector<2xf32>
    %568 = vector.shape_cast %567 : vector<2xf32> to vector<2x1xf32>
    %569 = arith.addf %565, %568 : vector<2x1xf32>
    %570 = arith.mulf %546, %569 : vector<2x1xf32>
    %571 = arith.addf %520, %570 : vector<2x1xf32>
    %572 = vector.shape_cast %539 : vector<2x5xf32> to vector<2x5x1xf32>
    %573 = vector.shape_cast %5 : vector<5x5xf32> to vector<1x5x5xf32>
    %574 = vector.broadcast %572 : vector<2x5x1xf32> to vector<2x5x5xf32>
    %575 = vector.broadcast %573 : vector<1x5x5xf32> to vector<2x5x5xf32>
    %576 = arith.addf %574, %575 : vector<2x5x5xf32>
    %577 = vector.shape_cast %555 : vector<2x5xf32> to vector<2x1x5xf32>
    %578 = vector.broadcast %577 : vector<2x1x5xf32> to vector<2x5x5xf32>
    %579 = arith.addf %576, %578 : vector<2x5x5xf32>
    %cst_141 = arith.constant dense<0xFF800000> : vector<2x5xf32>
    %580 = vector.multi_reduction <maximumf>, %579, %cst_141 [1] : vector<2x5x5xf32> to vector<2x5xf32>
    %581 = vector.shape_cast %580 : vector<2x5xf32> to vector<2x1x5xf32>
    %582 = vector.broadcast %581 : vector<2x1x5xf32> to vector<2x5x5xf32>
    %583 = arith.subf %579, %582 : vector<2x5x5xf32>
    %584 = math.exp %583 : vector<2x5x5xf32>
    %cst_142 = arith.constant dense<0.000000e+00> : vector<2x5xf32>
    %585 = vector.multi_reduction <add>, %584, %cst_142 [1] : vector<2x5x5xf32> to vector<2x5xf32>
    %586 = math.log %585 : vector<2x5xf32>
    %587 = arith.addf %586, %580 : vector<2x5xf32>
    %588 = vector.shape_cast %544 : vector<2x1xi1> to vector<2x1xi1>
    %589 = vector.broadcast %588 : vector<2x1xi1> to vector<2x5xi1>
    %590 = arith.select %589, %587, %539 : vector<2x5xi1>, vector<2x5xf32>
    %591 = vector.shape_cast %544 : vector<2x1xi1> to vector<2x1xi1>
    %592 = vector.broadcast %591 : vector<2x1xi1> to vector<2x5xi1>
    %593 = arith.select %592, %561, %542 : vector<2x5xi1>, vector<2x5xf32>
    %c5_i32_143 = arith.constant 5 : i32
    %594 = vector.broadcast %c5_i32_143 : i32 to vector<2x1xi32>
    %595 = arith.cmpi sgt, %6, %594 : vector<2x1xi32>
    %596 = arith.extui %595 : vector<2x1xi1> to vector<2x1xi32>
    %597 = arith.sitofp %596 : vector<2x1xi32> to vector<2x1xf32>
    %598 = vector.extract_strided_slice %367 {offsets = [10, 0], sizes = [2, 5], strides = [1, 1]} : vector<16x10xf32> to vector<2x5xf32>
    %599 = vector.extract_strided_slice %367 {offsets = [4, 5], sizes = [2, 5], strides = [1, 1]} : vector<16x10xf32> to vector<2x5xf32>
    %600 = arith.addf %598, %599 : vector<2x5xf32>
    %cst_144 = arith.constant 0.000000e+00 : f32
    %601 = vector.shape_cast %595 : vector<2x1xi1> to vector<2x1xi1>
    %602 = vector.broadcast %601 : vector<2x1xi1> to vector<2x5xi1>
    %603 = vector.broadcast %cst_144 : f32 to vector<2x5xf32>
    %604 = arith.select %602, %600, %603 : vector<2x5xi1>, vector<2x5xf32>
    %605 = vector.broadcast %2 : vector<1x5xf32> to vector<2x5xf32>
    %606 = arith.addf %605, %604 : vector<2x5xf32>
    %c0_145 = arith.constant 0 : index
    %c5 = arith.constant 5 : index
    %607 = vector.load %arg3[%c0_145, %c5] : memref<2x8xi32, #tpu.memory_space<vmem>>, vector<2x1xi32>
    %608 = vector.broadcast %607 : vector<2x1xi32> to vector<2x5xi32>
    %609 = vector.broadcast %29 : vector<1x5xi32> to vector<2x5xi32>
    %610 = arith.cmpi eq, %608, %609 : vector<2x5xi32>
    %611 = arith.extui %610 : vector<2x5xi1> to vector<2x5xi32>
    %612 = arith.sitofp %611 : vector<2x5xi32> to vector<2x5xf32>
    %cst_146 = arith.constant dense<0.000000e+00> : vector<2x5xf32>
    %613 = tpu.matmul %561, %5, %cst_146 {dimension_numbers = #tpu.dot_dimension_numbers<[1], [0], [0], [1], [0, 0, 1, 1], [], []>} : vector<2x5xf32>, vector<5x5xf32>, vector<2x5xf32> -> vector<2x5xf32>
    %614 = arith.mulf %613, %612 : vector<2x5xf32>
    %cst_147 = arith.constant dense<0.000000e+00> : vector<2xf32>
    %615 = vector.multi_reduction <add>, %614, %cst_147 [1] : vector<2x5xf32> to vector<2xf32>
    %616 = vector.shape_cast %615 : vector<2xf32> to vector<2x1xf32>
    %617 = arith.mulf %606, %612 : vector<2x5xf32>
    %cst_148 = arith.constant dense<0.000000e+00> : vector<2xf32>
    %618 = vector.multi_reduction <add>, %617, %cst_148 [1] : vector<2x5xf32> to vector<2xf32>
    %619 = vector.shape_cast %618 : vector<2xf32> to vector<2x1xf32>
    %620 = arith.addf %616, %619 : vector<2x1xf32>
    %621 = arith.mulf %597, %620 : vector<2x1xf32>
    %622 = arith.addf %571, %621 : vector<2x1xf32>
    %623 = vector.shape_cast %590 : vector<2x5xf32> to vector<2x5x1xf32>
    %624 = vector.shape_cast %5 : vector<5x5xf32> to vector<1x5x5xf32>
    %625 = vector.broadcast %623 : vector<2x5x1xf32> to vector<2x5x5xf32>
    %626 = vector.broadcast %624 : vector<1x5x5xf32> to vector<2x5x5xf32>
    %627 = arith.addf %625, %626 : vector<2x5x5xf32>
    %628 = vector.shape_cast %606 : vector<2x5xf32> to vector<2x1x5xf32>
    %629 = vector.broadcast %628 : vector<2x1x5xf32> to vector<2x5x5xf32>
    %630 = arith.addf %627, %629 : vector<2x5x5xf32>
    %cst_149 = arith.constant dense<0xFF800000> : vector<2x5xf32>
    %631 = vector.multi_reduction <maximumf>, %630, %cst_149 [1] : vector<2x5x5xf32> to vector<2x5xf32>
    %632 = vector.shape_cast %631 : vector<2x5xf32> to vector<2x1x5xf32>
    %633 = vector.broadcast %632 : vector<2x1x5xf32> to vector<2x5x5xf32>
    %634 = arith.subf %630, %633 : vector<2x5x5xf32>
    %635 = math.exp %634 : vector<2x5x5xf32>
    %cst_150 = arith.constant dense<0.000000e+00> : vector<2x5xf32>
    %636 = vector.multi_reduction <add>, %635, %cst_150 [1] : vector<2x5x5xf32> to vector<2x5xf32>
    %637 = math.log %636 : vector<2x5xf32>
    %638 = arith.addf %637, %631 : vector<2x5xf32>
    %639 = vector.shape_cast %595 : vector<2x1xi1> to vector<2x1xi1>
    %640 = vector.broadcast %639 : vector<2x1xi1> to vector<2x5xi1>
    %641 = arith.select %640, %638, %590 : vector<2x5xi1>, vector<2x5xf32>
    %642 = vector.shape_cast %595 : vector<2x1xi1> to vector<2x1xi1>
    %643 = vector.broadcast %642 : vector<2x1xi1> to vector<2x5xi1>
    %644 = arith.select %643, %612, %593 : vector<2x5xi1>, vector<2x5xf32>
    %c6_i32_151 = arith.constant 6 : i32
    %645 = vector.broadcast %c6_i32_151 : i32 to vector<2x1xi32>
    %646 = arith.cmpi sgt, %6, %645 : vector<2x1xi32>
    %647 = arith.extui %646 : vector<2x1xi1> to vector<2x1xi32>
    %648 = arith.sitofp %647 : vector<2x1xi32> to vector<2x1xf32>
    %649 = vector.extract_strided_slice %367 {offsets = [12, 0], sizes = [2, 5], strides = [1, 1]} : vector<16x10xf32> to vector<2x5xf32>
    %650 = vector.extract_strided_slice %367 {offsets = [2, 5], sizes = [2, 5], strides = [1, 1]} : vector<16x10xf32> to vector<2x5xf32>
    %651 = arith.addf %649, %650 : vector<2x5xf32>
    %cst_152 = arith.constant 0.000000e+00 : f32
    %652 = vector.shape_cast %646 : vector<2x1xi1> to vector<2x1xi1>
    %653 = vector.broadcast %652 : vector<2x1xi1> to vector<2x5xi1>
    %654 = vector.broadcast %cst_152 : f32 to vector<2x5xf32>
    %655 = arith.select %653, %651, %654 : vector<2x5xi1>, vector<2x5xf32>
    %656 = vector.broadcast %2 : vector<1x5xf32> to vector<2x5xf32>
    %657 = arith.addf %656, %655 : vector<2x5xf32>
    %c0_153 = arith.constant 0 : index
    %c6_154 = arith.constant 6 : index
    %658 = vector.load %arg3[%c0_153, %c6_154] : memref<2x8xi32, #tpu.memory_space<vmem>>, vector<2x1xi32>
    %659 = vector.broadcast %658 : vector<2x1xi32> to vector<2x5xi32>
    %660 = vector.broadcast %29 : vector<1x5xi32> to vector<2x5xi32>
    %661 = arith.cmpi eq, %659, %660 : vector<2x5xi32>
    %662 = arith.extui %661 : vector<2x5xi1> to vector<2x5xi32>
    %663 = arith.sitofp %662 : vector<2x5xi32> to vector<2x5xf32>
    %cst_155 = arith.constant dense<0.000000e+00> : vector<2x5xf32>
    %664 = tpu.matmul %612, %5, %cst_155 {dimension_numbers = #tpu.dot_dimension_numbers<[1], [0], [0], [1], [0, 0, 1, 1], [], []>} : vector<2x5xf32>, vector<5x5xf32>, vector<2x5xf32> -> vector<2x5xf32>
    %665 = arith.mulf %664, %663 : vector<2x5xf32>
    %cst_156 = arith.constant dense<0.000000e+00> : vector<2xf32>
    %666 = vector.multi_reduction <add>, %665, %cst_156 [1] : vector<2x5xf32> to vector<2xf32>
    %667 = vector.shape_cast %666 : vector<2xf32> to vector<2x1xf32>
    %668 = arith.mulf %657, %663 : vector<2x5xf32>
    %cst_157 = arith.constant dense<0.000000e+00> : vector<2xf32>
    %669 = vector.multi_reduction <add>, %668, %cst_157 [1] : vector<2x5xf32> to vector<2xf32>
    %670 = vector.shape_cast %669 : vector<2xf32> to vector<2x1xf32>
    %671 = arith.addf %667, %670 : vector<2x1xf32>
    %672 = arith.mulf %648, %671 : vector<2x1xf32>
    %673 = arith.addf %622, %672 : vector<2x1xf32>
    %674 = vector.shape_cast %641 : vector<2x5xf32> to vector<2x5x1xf32>
    %675 = vector.shape_cast %5 : vector<5x5xf32> to vector<1x5x5xf32>
    %676 = vector.broadcast %674 : vector<2x5x1xf32> to vector<2x5x5xf32>
    %677 = vector.broadcast %675 : vector<1x5x5xf32> to vector<2x5x5xf32>
    %678 = arith.addf %676, %677 : vector<2x5x5xf32>
    %679 = vector.shape_cast %657 : vector<2x5xf32> to vector<2x1x5xf32>
    %680 = vector.broadcast %679 : vector<2x1x5xf32> to vector<2x5x5xf32>
    %681 = arith.addf %678, %680 : vector<2x5x5xf32>
    %cst_158 = arith.constant dense<0xFF800000> : vector<2x5xf32>
    %682 = vector.multi_reduction <maximumf>, %681, %cst_158 [1] : vector<2x5x5xf32> to vector<2x5xf32>
    %683 = vector.shape_cast %682 : vector<2x5xf32> to vector<2x1x5xf32>
    %684 = vector.broadcast %683 : vector<2x1x5xf32> to vector<2x5x5xf32>
    %685 = arith.subf %681, %684 : vector<2x5x5xf32>
    %686 = math.exp %685 : vector<2x5x5xf32>
    %cst_159 = arith.constant dense<0.000000e+00> : vector<2x5xf32>
    %687 = vector.multi_reduction <add>, %686, %cst_159 [1] : vector<2x5x5xf32> to vector<2x5xf32>
    %688 = math.log %687 : vector<2x5xf32>
    %689 = arith.addf %688, %682 : vector<2x5xf32>
    %690 = vector.shape_cast %646 : vector<2x1xi1> to vector<2x1xi1>
    %691 = vector.broadcast %690 : vector<2x1xi1> to vector<2x5xi1>
    %692 = arith.select %691, %689, %641 : vector<2x5xi1>, vector<2x5xf32>
    %693 = vector.shape_cast %646 : vector<2x1xi1> to vector<2x1xi1>
    %694 = vector.broadcast %693 : vector<2x1xi1> to vector<2x5xi1>
    %695 = arith.select %694, %663, %644 : vector<2x5xi1>, vector<2x5xf32>
    %c7_i32_160 = arith.constant 7 : i32
    %696 = vector.broadcast %c7_i32_160 : i32 to vector<2x1xi32>
    %697 = arith.cmpi sgt, %6, %696 : vector<2x1xi32>
    %698 = arith.extui %697 : vector<2x1xi1> to vector<2x1xi32>
    %699 = arith.sitofp %698 : vector<2x1xi32> to vector<2x1xf32>
    %700 = vector.extract_strided_slice %367 {offsets = [14, 0], sizes = [2, 5], strides = [1, 1]} : vector<16x10xf32> to vector<2x5xf32>
    %701 = vector.extract_strided_slice %367 {offsets = [0, 5], sizes = [2, 5], strides = [1, 1]} : vector<16x10xf32> to vector<2x5xf32>
    %702 = arith.addf %700, %701 : vector<2x5xf32>
    %cst_161 = arith.constant 0.000000e+00 : f32
    %703 = vector.shape_cast %697 : vector<2x1xi1> to vector<2x1xi1>
    %704 = vector.broadcast %703 : vector<2x1xi1> to vector<2x5xi1>
    %705 = vector.broadcast %cst_161 : f32 to vector<2x5xf32>
    %706 = arith.select %704, %702, %705 : vector<2x5xi1>, vector<2x5xf32>
    %707 = vector.broadcast %2 : vector<1x5xf32> to vector<2x5xf32>
    %708 = arith.addf %707, %706 : vector<2x5xf32>
    %c0_162 = arith.constant 0 : index
    %c7 = arith.constant 7 : index
    %709 = vector.load %arg3[%c0_162, %c7] : memref<2x8xi32, #tpu.memory_space<vmem>>, vector<2x1xi32>
    %710 = vector.broadcast %709 : vector<2x1xi32> to vector<2x5xi32>
    %711 = vector.broadcast %29 : vector<1x5xi32> to vector<2x5xi32>
    %712 = arith.cmpi eq, %710, %711 : vector<2x5xi32>
    %713 = arith.extui %712 : vector<2x5xi1> to vector<2x5xi32>
    %714 = arith.sitofp %713 : vector<2x5xi32> to vector<2x5xf32>
    %cst_163 = arith.constant dense<0.000000e+00> : vector<2x5xf32>
    %715 = tpu.matmul %663, %5, %cst_163 {dimension_numbers = #tpu.dot_dimension_numbers<[1], [0], [0], [1], [0, 0, 1, 1], [], []>} : vector<2x5xf32>, vector<5x5xf32>, vector<2x5xf32> -> vector<2x5xf32>
    %716 = arith.mulf %715, %714 : vector<2x5xf32>
    %cst_164 = arith.constant dense<0.000000e+00> : vector<2xf32>
    %717 = vector.multi_reduction <add>, %716, %cst_164 [1] : vector<2x5xf32> to vector<2xf32>
    %718 = vector.shape_cast %717 : vector<2xf32> to vector<2x1xf32>
    %719 = arith.mulf %708, %714 : vector<2x5xf32>
    %cst_165 = arith.constant dense<0.000000e+00> : vector<2xf32>
    %720 = vector.multi_reduction <add>, %719, %cst_165 [1] : vector<2x5xf32> to vector<2xf32>
    %721 = vector.shape_cast %720 : vector<2xf32> to vector<2x1xf32>
    %722 = arith.addf %718, %721 : vector<2x1xf32>
    %723 = arith.mulf %699, %722 : vector<2x1xf32>
    %724 = arith.addf %673, %723 : vector<2x1xf32>
    %725 = vector.shape_cast %692 : vector<2x5xf32> to vector<2x5x1xf32>
    %726 = vector.shape_cast %5 : vector<5x5xf32> to vector<1x5x5xf32>
    %727 = vector.broadcast %725 : vector<2x5x1xf32> to vector<2x5x5xf32>
    %728 = vector.broadcast %726 : vector<1x5x5xf32> to vector<2x5x5xf32>
    %729 = arith.addf %727, %728 : vector<2x5x5xf32>
    %730 = vector.shape_cast %708 : vector<2x5xf32> to vector<2x1x5xf32>
    %731 = vector.broadcast %730 : vector<2x1x5xf32> to vector<2x5x5xf32>
    %732 = arith.addf %729, %731 : vector<2x5x5xf32>
    %cst_166 = arith.constant dense<0xFF800000> : vector<2x5xf32>
    %733 = vector.multi_reduction <maximumf>, %732, %cst_166 [1] : vector<2x5x5xf32> to vector<2x5xf32>
    %734 = vector.shape_cast %733 : vector<2x5xf32> to vector<2x1x5xf32>
    %735 = vector.broadcast %734 : vector<2x1x5xf32> to vector<2x5x5xf32>
    %736 = arith.subf %732, %735 : vector<2x5x5xf32>
    %737 = math.exp %736 : vector<2x5x5xf32>
    %cst_167 = arith.constant dense<0.000000e+00> : vector<2x5xf32>
    %738 = vector.multi_reduction <add>, %737, %cst_167 [1] : vector<2x5x5xf32> to vector<2x5xf32>
    %739 = math.log %738 : vector<2x5xf32>
    %740 = arith.addf %739, %733 : vector<2x5xf32>
    %741 = vector.shape_cast %697 : vector<2x1xi1> to vector<2x1xi1>
    %742 = vector.broadcast %741 : vector<2x1xi1> to vector<2x5xi1>
    %743 = arith.select %742, %740, %692 : vector<2x5xi1>, vector<2x5xf32>
    %744 = vector.shape_cast %697 : vector<2x1xi1> to vector<2x1xi1>
    %745 = vector.broadcast %744 : vector<2x1xi1> to vector<2x5xi1>
    %746 = arith.select %745, %714, %695 : vector<2x5xi1>, vector<2x5xf32>
    %747 = vector.broadcast %4 : vector<1x5xf32> to vector<2x5xf32>
    %748 = arith.mulf %746, %747 : vector<2x5xf32>
    %cst_168 = arith.constant dense<0.000000e+00> : vector<2xf32>
    %749 = vector.multi_reduction <add>, %748, %cst_168 [1] : vector<2x5xf32> to vector<2xf32>
    %750 = vector.shape_cast %749 : vector<2xf32> to vector<2x1xf32>
    %751 = arith.addf %724, %750 : vector<2x1xf32>
    %752 = vector.broadcast %4 : vector<1x5xf32> to vector<2x5xf32>
    %753 = arith.addf %743, %752 : vector<2x5xf32>
    %cst_169 = arith.constant dense<0xFF800000> : vector<2xf32>
    %754 = vector.multi_reduction <maximumf>, %753, %cst_169 [1] : vector<2x5xf32> to vector<2xf32>
    %755 = vector.shape_cast %754 : vector<2xf32> to vector<2x1xf32>
    %756 = vector.broadcast %755 : vector<2x1xf32> to vector<2x5xf32>
    %757 = arith.subf %753, %756 : vector<2x5xf32>
    %758 = math.exp %757 : vector<2x5xf32>
    %cst_170 = arith.constant dense<0.000000e+00> : vector<2xf32>
    %759 = vector.multi_reduction <add>, %758, %cst_170 [1] : vector<2x5xf32> to vector<2xf32>
    %760 = vector.shape_cast %759 : vector<2xf32> to vector<2x1xf32>
    %761 = math.log %760 : vector<2x1xf32>
    %762 = arith.addf %761, %755 : vector<2x1xf32>
    %763 = arith.subf %751, %762 : vector<2x1xf32>
    %cst_171 = arith.constant dense<0.000000e+00> : vector<1xf32>
    %764 = vector.multi_reduction <add>, %763, %cst_171 [0] : vector<2x1xf32> to vector<1xf32>
    %765 = vector.shape_cast %764 : vector<1xf32> to vector<1x1xf32>
    %c0_172 = arith.constant 0 : index
    %c0_173 = arith.constant 0 : index
    %766 = vector.load %arg12[%c0_172, %c0_173] : memref<1x1xf32, #tpu.memory_space<vmem>>, vector<1x1xf32>
    tpu.vector_store %arg12[%c0_172, %c0_173], %765 {strides = array<i32>} : memref<1x1xf32, #tpu.memory_space<vmem>>, vector<1x1xf32>,
    return
  }
  func.func @transform_0(%arg0: i32) -> (i32, i32) {
    %c0_i32 = arith.constant 0 : i32
    %c0_i32_0 = arith.constant 0 : i32
    %c0_i32_1 = arith.constant 0 : i32
    return %c0_i32, %c0_i32_0 : i32, i32
  }
  func.func @transform_1(%arg0: i32) -> (i32, i32) {
    %c0_i32 = arith.constant 0 : i32
    %c0_i32_0 = arith.constant 0 : i32
    %c0_i32_1 = arith.constant 0 : i32
    return %c0_i32, %c0_i32_0 : i32, i32
  }
  func.func @transform_2(%arg0: i32) -> (i32, i32) {
    %c0_i32 = arith.constant 0 : i32
    %c0_i32_0 = arith.constant 0 : i32
    %c0_i32_1 = arith.constant 0 : i32
    return %c0_i32, %c0_i32_0 : i32, i32
  }
  func.func @transform_3(%arg0: i32) -> (i32, i32) {
    %c0_i32 = arith.constant 0 : i32
    %c0_i32_0 = arith.constant 0 : i32
    %c0_i32_1 = arith.constant 0 : i32
    return %c0_i32, %c0_i32_0 : i32, i32
  }
  func.func @transform_4(%arg0: i32) -> (i32, i32) {
    %c0_i32 = arith.constant 0 : i32
    %c0_i32_0 = arith.constant 0 : i32
    %c0_i32_1 = arith.constant 0 : i32
    return %c0_i32, %c0_i32_0 : i32, i32
  }
  func.func @transform_5(%arg0: i32) -> (i32, i32) {
    %c0_i32 = arith.constant 0 : i32
    %c0_i32_0 = arith.constant 0 : i32
    %c0_i32_1 = arith.constant 0 : i32
    return %c0_i32, %c0_i32_0 : i32, i32
  }
  func.func @transform_6(%arg0: i32) -> (i32, i32) {
    %c0_i32 = arith.constant 0 : i32
    %c0_i32_0 = arith.constant 0 : i32
    %c0_i32_1 = arith.constant 0 : i32
    return %c0_i32, %c0_i32_0 : i32, i32
  }
  func.func @transform_7(%arg0: i32) -> (i32, i32) {
    %c0_i32 = arith.constant 0 : i32
    %c0_i32_0 = arith.constant 0 : i32
    %c0_i32_1 = arith.constant 0 : i32
    return %c0_i32, %c0_i32_0 : i32, i32
  }
  func.func @transform_8(%arg0: i32) -> (i32, i32) {
    %c0_i32 = arith.constant 0 : i32
    %c0_i32_0 = arith.constant 0 : i32
    %c0_i32_1 = arith.constant 0 : i32
    return %c0_i32, %c0_i32_0 : i32, i32
  }
  func.func @transform_9(%arg0: i32) -> (i32, i32) {
    %c0_i32 = arith.constant 0 : i32
    %c0_i32_0 = arith.constant 0 : i32
    %c0_i32_1 = arith.constant 0 : i32
    return %c0_i32, %c0_i32_0 : i32, i32
  }
  func.func @transform_10(%arg0: i32) -> (i32, i32) {
    %c0_i32 = arith.constant 0 : i32
    %c0_i32_0 = arith.constant 0 : i32
    %c0_i32_1 = arith.constant 0 : i32
    return %c0_i32, %c0_i32_0 : i32, i32
  }
  func.func @transform_11(%arg0: i32) -> (i32, i32) {
    %c0_i32 = arith.constant 0 : i32
    %c0_i32_0 = arith.constant 0 : i32
    %c0_i32_1 = arith.constant 0 : i32
    return %c0_i32, %c0_i32_0 : i32, i32
  }
}

</mosaic_0001>

<llo_original>
// kernel: bilstm_crf_forward.1
$region0: #{bilstm_crf_forward.1}
  #allocation0 [shape = 'u32[]', space=smem, size = 0x4, offset = 0x4, fixed_abs, tag = 'smem constant byte address 0x4 - core index']
  #allocation1 [shape = 'u32[144,128]{1,0:T(1,128)}', space=vmem, size = 0x12000, scoped, tag = 'internal scratch']
  #allocation2 [shape = 'f32[16,256]{1,0:T(8,128)}', space=vmem, size = 0x4000, scoped, tag = 'scratch operand']
  #allocation3 [shape = 'f32[16,64]{1,0:T(8,128)}', space=vmem, size = 0x2000, scoped, tag = 'scratch operand']
  %s0 = inlined_call_operand.vmem [shape: f32[16,16], index: 0, kind: input, shape index: {}]
  %s1 = inlined_call_operand.vmem [shape: s32[2,1], index: 1, kind: input, shape index: {}]
  %s2 = inlined_call_operand.vmem [shape: s32[2,8], index: 2, kind: input, shape index: {}]
  %s3 = inlined_call_operand.vmem [shape: f32[16,256], index: 3, kind: input, shape index: {}]
  %s4 = inlined_call_operand.vmem [shape: f32[64,256], index: 4, kind: input, shape index: {}]
  %s5 = inlined_call_operand.vmem [shape: f32[1,256], index: 5, kind: input, shape index: {}]
  %s6 = inlined_call_operand.vmem [shape: f32[64,10], index: 6, kind: input, shape index: {}]
  %s7 = inlined_call_operand.vmem [shape: f32[1,5], index: 7, kind: input, shape index: {}]
  %s8 = inlined_call_operand.vmem [shape: f32[1,5], index: 8, kind: input, shape index: {}]
  %s9 = inlined_call_operand.vmem [shape: f32[1,5], index: 9, kind: input, shape index: {}]
  %s10 = inlined_call_operand.vmem [shape: f32[5,5], index: 10, kind: input, shape index: {}]
  %s11 = inlined_call_operand.hbm [shape: f32[1,1], index: 11, kind: output, shape index: {}]
  %s12 = sld [smem:[#allocation0]]
  $region54: #{bilstm_crf_forward.1} parent=0
    _
  %s14 = ssub.s32 1, %s12
  %s15 = scalar_select 0, %s14, %s12
  $region1: #{bilstm_crf_forward.1} parent=0
    #allocation4 [shape = 'u8[512]{0}', space=vmem, size = 0x400, scoped, tag = 'output window, operand 0, single buffered']
    #allocation5 [shape = 's32[1]{0}', space=sflag, size = 0x4, scoped, tag = 'scoped memory for bilstm_crf_forward.1']
    %16 = vsyncpa [#allocation5], 0
    // Predicated region
    $region2: #{bilstm_crf_forward.1} parent=1 // pred_check
      _
    $region3: #{bilstm_crf_forward.1} parent=1 // pred_check_branch
      %18 = sbr.rel (0) target = $region5
    $region4: #{bilstm_crf_forward.1} parent=1 // pred_region
      _
    $region5: #{bilstm_crf_forward.1} parent=1 // pred_fallthru
      _
    // Predicated region
    $region6: #{bilstm_crf_forward.1} parent=1 // pred_check
      _
    $region7: #{bilstm_crf_forward.1} parent=1 // pred_check_branch
      %20 = sbr.rel (0) target = $region9
    $region8: #{bilstm_crf_forward.1} parent=1 // pred_region
      _
    $region9: #{bilstm_crf_forward.1} parent=1 // pred_fallthru
      _
    // Predicated region
    $region10: #{bilstm_crf_forward.1} parent=1 // pred_check
      _
    $region11: #{bilstm_crf_forward.1} parent=1 // pred_check_branch
      %22 = sbr.rel (0) target = $region13
    $region12: #{bilstm_crf_forward.1} parent=1 // pred_region
      _
    $region13: #{bilstm_crf_forward.1} parent=1 // pred_fallthru
      _
    // Predicated region
    $region14: #{bilstm_crf_forward.1} parent=1 // pred_check
      _
    $region15: #{bilstm_crf_forward.1} parent=1 // pred_check_branch
      %24 = sbr.rel (0) target = $region17
    $region16: #{bilstm_crf_forward.1} parent=1 // pred_region
      _
    $region17: #{bilstm_crf_forward.1} parent=1 // pred_fallthru
      _
    // Predicated region
    $region18: #{bilstm_crf_forward.1} parent=1 // pred_check
      _
    $region19: #{bilstm_crf_forward.1} parent=1 // pred_check_branch
      %26 = sbr.rel (0) target = $region21
    $region20: #{bilstm_crf_forward.1} parent=1 // pred_region
      _
    $region21: #{bilstm_crf_forward.1} parent=1 // pred_fallthru
      _
    // Predicated region
    $region22: #{bilstm_crf_forward.1} parent=1 // pred_check
      _
    $region23: #{bilstm_crf_forward.1} parent=1 // pred_check_branch
      %28 = sbr.rel (0) target = $region25
    $region24: #{bilstm_crf_forward.1} parent=1 // pred_region
      _
    $region25: #{bilstm_crf_forward.1} parent=1 // pred_fallthru
      _
    // Predicated region
    $region26: #{bilstm_crf_forward.1} parent=1 // pred_check
      _
    $region27: #{bilstm_crf_forward.1} parent=1 // pred_check_branch
      %30 = sbr.rel (0) target = $region29
    $region28: #{bilstm_crf_forward.1} parent=1 // pred_region
      _
    $region29: #{bilstm_crf_forward.1} parent=1 // pred_fallthru
      _
    // Predicated region
    $region30: #{bilstm_crf_forward.1} parent=1 // pred_check
      _
    $region31: #{bilstm_crf_forward.1} parent=1 // pred_check_branch
      %32 = sbr.rel (0) target = $region33
    $region32: #{bilstm_crf_forward.1} parent=1 // pred_region
      _
    $region33: #{bilstm_crf_forward.1} parent=1 // pred_fallthru
      _
    // Predicated region
    $region34: #{bilstm_crf_forward.1} parent=1 // pred_check
      _
    $region35: #{bilstm_crf_forward.1} parent=1 // pred_check_branch
      %34 = sbr.rel (0) target = $region37
    $region36: #{bilstm_crf_forward.1} parent=1 // pred_region
      _
    $region37: #{bilstm_crf_forward.1} parent=1 // pred_fallthru
      _
    // Predicated region
    $region38: #{bilstm_crf_forward.1} parent=1 // pred_check
      _
    $region39: #{bilstm_crf_forward.1} parent=1 // pred_check_branch
      %36 = sbr.rel (0) target = $region41
    $region40: #{bilstm_crf_forward.1} parent=1 // pred_region
      _
    $region41: #{bilstm_crf_forward.1} parent=1 // pred_fallthru
      _
    // Predicated region
    $region42: #{bilstm_crf_forward.1} parent=1 // pred_check
      _
    $region43: #{bilstm_crf_forward.1} parent=1 // pred_check_branch
      %38 = sbr.rel (0) target = $region45
    $region44: #{bilstm_crf_forward.1} parent=1 // pred_region
      _
    $region45: #{bilstm_crf_forward.1} parent=1 // pred_fallthru
      _
    %v39 = vld [vmem:[%s4] sm:$0xff]
    %v40 = vld [vmem:[%s4 + $0x8] sm:$0xff]
    %v41 = vld [vmem:[%s4 + $0x10] sm:$0xff]
    %v42 = vld [vmem:[%s4 + $0x18] sm:$0xff]
    %v43 = vld [vmem:[%s4 + $0x20] sm:$0xff]
    %v44 = vld [vmem:[%s4 + $0x28] sm:$0xff]
    %v45 = vld [vmem:[%s4 + $0x30] sm:$0xff]
    %v46 = vld [vmem:[%s4 + $0x38] sm:$0xff]
    %v47 = vld [vmem:[%s4 + $0x40] sm:$0xff]
    %v48 = vld [vmem:[%s4 + $0x48] sm:$0xff]
    %v49 = vld [vmem:[%s4 + $0x50] sm:$0xff]
    %v50 = vld [vmem:[%s4 + $0x58] sm:$0xff]
    %v51 = vld [vmem:[%s4 + $0x60] sm:$0xff]
    %v52 = vld [vmem:[%s4 + $0x68] sm:$0xff]
    %v53 = vld [vmem:[%s4 + $0x70] sm:$0xff]
    %v54 = vld [vmem:[%s4 + $0x78] sm:$0xff]
    %v55 = vld [vmem:[%s5] sm:$0x3]
    %v56 = vld [vmem:[%s7] sm:$0x1]
    %v57 = vld [vmem:[%s8] sm:$0x1]
    %v58 = vld [vmem:[%s9] sm:$0x1]
    %v59 = vld [vmem:[%s10] sm:$0x1f]
    %v60 = vld [vmem:[%s1] sm:$0x3]
    %v61 = vlaneseq
    %v62 = vand.u32 %v61, 127
    %v63 = vadd.s32 %v62, 128
    %vm64 = vcmp.lt.s32.totalorder %v62, 0
    %v65 = vsub.s32 0, %v62
    %v66 = vsel %vm64, %v65, %v62
    %v67 = vshrl.u32 %v66, 6
    %v68 = vand.u32 %v66, 63
    %v69 = vsub.s32 0, %v68
    %v70 = vsel %vm64, %v69, %v68
    %vm71 = vcmp.lt.s32.totalorder %v63, 0
    %v72 = vsub.s32 0, %v63
    %v73 = vsel %vm71, %v72, %v63
    %v74 = vshrl.u32 %v73, 6
    %v75 = vand.u32 %v73, 63
    %v76 = vsub.s32 0, %v75
    %v77 = vsel %vm71, %v76, %v75
    %vm78 = vcmp.ne.s32.totalorder %v70, 0
    %vm79 = vcmp.ne.s32.totalorder %v77, 0
    %vm80 = vcmp.lt.s32.totalorder %v70, 0
    %vm81 = vcmp.lt.s32.totalorder %v77, 0
    %vm82 = vmand %vm80, %vm78
    %vm83 = vmand %vm81, %vm79
    %v84 = vadd.s32 %v70, 64
    %v85 = vadd.s32 %v77, 64
    %v86 = vsel %vm82, %v84, %v70
    %v87 = vsel %vm83, %v85, %v77
    %vm88 = vcmp.lt.s32.totalorder %v86, 32
    %vm89 = vcmp.lt.s32.totalorder %v87, 32
    %vm90 = vcmp.lt.s32.totalorder %v62, 32
    %v91 = vld [vmem:[%s0] sm:$0xff]
    %v92 = vld [vmem:[%s0 + $0x8] sm:$0xff]
    %v93 = vld [vmem:[%s3] sm:$0xff]
    %v94 = vld [vmem:[%s3 + $0x8] sm:$0xff]
    %v95 = vld [vmem:[%s3 + $0x10] sm:$0xff]
    %v96 = vld [vmem:[%s3 + $0x18] sm:$0xff]
    %vm97 = vcmask 130048
    %v99 = vsel %vm97, %v91, 0
    %v102 = vsel %vm97, %v92, 0
    %104 = vmatprep.subr.mxu0 %v94
    %105 = vmatpush1.msra.mxu0 %v93
    %106 = vmatprep.subr.mxu0 %v96
    %107 = vmatpush1.msra.mxu0 %v95
    %108 = vmatprep.subr.mxu0 0.0
    %109 = vmatpush1.msra.mxu0 0.0
    %110 = vmatprep.subr.mxu0 0.0
    %111 = vmatpush1.msra.mxu0 0.0
    %112 = vmatprep.subr.mxu0 0.0
    %113 = vmatpush1.msra.mxu0 0.0
    %114 = vmatprep.subr.mxu0 0.0
    %115 = vmatpush1.msra.mxu0 0.0
    %116 = vmatprep.subr.mxu0 0.0
    %117 = vmatpush1.msra.mxu0 0.0
    %118 = vmatprep.subr.mxu0 0.0
    %119 = vmatpush1.msra.mxu0 0.0
    %120 = vmatprep.subr.mxu0 0.0
    %121 = vmatpush1.msra.mxu0 0.0
    %122 = vmatprep.subr.mxu0 0.0
    %123 = vmatpush1.msra.mxu0 0.0
    %124 = vmatprep.subr.mxu0 0.0
    %125 = vmatpush1.msra.mxu0 0.0
    %126 = vmatprep.subr.mxu0 0.0
    %127 = vmatpush1.msra.mxu0 0.0
    %128 = vmatprep.subr.mxu0 0.0
    %129 = vmatpush1.msra.mxu0 0.0
    %130 = vmatprep.subr.mxu0 0.0
    %131 = vmatpush1.msra.mxu0 0.0
    %132 = vmatprep.subr.mxu0 0.0
    %133 = vmatpush1.msra.mxu0 0.0
    %134 = vmatprep.subr.mxu0 0.0
    %135 = vmatpush1.msra.mxu0 0.0
    %136 = vmatprep.subr.mxu0 0.0
    %137 = vmatpush1.msra.mxu0 0.0
    %138 = vmatprep.subr.mxu0 0.0
    %139 = vmatpush1.msra.mxu0 0.0
    %140 = vmatprep.subr.mxu0 0.0
    %141 = vmatpush1.msra.mxu0 0.0
    %142 = vmatprep.subr.mxu0 0.0
    %143 = vmatpush1.msra.mxu0 0.0
    %144 = vmatprep.subr.mxu0 0.0
    %145 = vmatpush1.msra.mxu0 0.0
    %146 = vmatprep.subr.mxu0 0.0
    %147 = vmatpush1.msra.mxu0 0.0
    %148 = vmatprep.subr.mxu0 0.0
    %149 = vmatpush1.msra.mxu0 0.0
    %150 = vmatprep.subr.mxu0 0.0
    %151 = vmatpush1.msra.mxu0 0.0
    %152 = vmatprep.subr.mxu0 0.0
    %153 = vmatpush1.msra.mxu0 0.0
    %154 = vmatprep.subr.mxu0 0.0
    %155 = vmatpush1.msra.mxu0 0.0
    %156 = vmatprep.subr.mxu0 0.0
    %157 = vmatpush1.msra.mxu0 0.0
    %158 = vmatprep.subr.mxu0 0.0
    %159 = vmatpush1.msra.mxu0 0.0
    %160 = vmatprep.subr.mxu0 0.0
    %161 = vmatpush1.msra.mxu0 0.0
    %162 = vmatprep.subr.mxu0 0.0
    %163 = vmatpush1.msra.mxu0 0.0
    %164 = vmatprep.subr.mxu0 0.0
    %165 = vmatpush1.msra.mxu0 0.0
    %166 = vmatprep.subr.mxu0 0.0
    %167 = vmatpush1.msra.mxu0 0.0
    %168 = vmatprep.mubr.f32.mxu0 0.0
    %169 = vmatmul.mubr.f32.gmra.mrb[0].mxu0 %v99
    %v170 = vpop.f32.mrb[0].mxu0
    %v171 = vadd.f32 0.0, %v170
    %v172 = vpop.f32.mrb[0].mxu0
    %v173 = vadd.f32 0.0, %v172
    %174 = vmatprep.mubr.f32.mxu0 0.0
    %175 = vmatmul.mubr.f32.gmra.mrb[0].mxu0 %v102
    %v176 = vpop.f32.mrb[0].mxu0
    %v177 = vadd.f32 0.0, %v176
    %v178 = vpop.f32.mrb[0].mxu0
    %v179 = vadd.f32 0.0, %v178
    %180 = vdwg.mxu0
    %181 = vst [vmem:[#allocation2] sm:$0xff] %v171
    %182 = vst [vmem:[#allocation2 + $0x8] sm:$0xff] %v173
    %183 = vst [vmem:[#allocation2 + $0x10] sm:$0xff] %v177
    %184 = vst [vmem:[#allocation2 + $0x18] sm:$0xff] %v179
    %v185 = vld [vmem:[#allocation2] sm:$0x3]
    %v186 = vld [vmem:[#allocation2 + $0x8] sm:$0x3]
    %v187 = vld [vmem:[#allocation2 + $0x10] sm:$0xc0]
    %v188 = vld [vmem:[#allocation2 + $0x18] sm:$0xc0]
    %v189 = vsel %vm88, 1, 0
    %v190 = vsel %vm89, 1, 0
    %vm191 = vcmp.eq.s32.totalorder %v189, 1
    %vm192 = vcmp.eq.s32.totalorder %v190, 1
    %v195 = vrot.slane %v187, 6
    %v196 = vrot.slane %v188, 6
    %v199 = vsel %vm191, %v185, %v195
    %v200 = vsel %vm192, %v186, %v196
    %vm201 = vcmask 523264
    %v203 = vsel %vm201, 0.0, 0
    %205 = vmatprep.subr.mxu0 %v40
    %206 = vmatpush1.msra.mxu0 %v39
    %207 = vmatprep.subr.mxu0 %v42
    %208 = vmatpush1.msra.mxu0 %v41
    %209 = vmatprep.subr.mxu0 %v44
    %210 = vmatpush1.msra.mxu0 %v43
    %211 = vmatprep.subr.mxu0 %v46
    %212 = vmatpush1.msra.mxu0 %v45
    %213 = vmatprep.subr.mxu0 %v48
    %214 = vmatpush1.msra.mxu0 %v47
    %215 = vmatprep.subr.mxu0 %v50
    %216 = vmatpush1.msra.mxu0 %v49
    %217 = vmatprep.subr.mxu0 %v52
    %218 = vmatpush1.msra.mxu0 %v51
    %219 = vmatprep.subr.mxu0 %v54
    %220 = vmatpush1.msra.mxu0 %v53
    %221 = vmatprep.subr.mxu0 0.0
    %222 = vmatpush1.msra.mxu0 0.0
    %223 = vmatprep.subr.mxu0 0.0
    %224 = vmatpush1.msra.mxu0 0.0
    %225 = vmatprep.subr.mxu0 0.0
    %226 = vmatpush1.msra.mxu0 0.0
    %227 = vmatprep.subr.mxu0 0.0
    %228 = vmatpush1.msra.mxu0 0.0
    %229 = vmatprep.subr.mxu0 0.0
    %230 = vmatpush1.msra.mxu0 0.0
    %231 = vmatprep.subr.mxu0 0.0
    %232 = vmatpush1.msra.mxu0 0.0
    %233 = vmatprep.subr.mxu0 0.0
    %234 = vmatpush1.msra.mxu0 0.0
    %235 = vmatprep.subr.mxu0 0.0
    %236 = vmatpush1.msra.mxu0 0.0
    %237 = vmatprep.subr.mxu0 0.0
    %238 = vmatpush1.msra.mxu0 0.0
    %239 = vmatprep.subr.mxu0 0.0
    %240 = vmatpush1.msra.mxu0 0.0
    %241 = vmatprep.subr.mxu0 0.0
    %242 = vmatpush1.msra.mxu0 0.0
    %243 = vmatprep.subr.mxu0 0.0
    %244 = vmatpush1.msra.mxu0 0.0
    %245 = vmatprep.subr.mxu0 0.0
    %246 = vmatpush1.msra.mxu0 0.0
    %247 = vmatprep.subr.mxu0 0.0
    %248 = vmatpush1.msra.mxu0 0.0
    %249 = vmatprep.subr.mxu0 0.0
    %250 = vmatpush1.msra.mxu0 0.0
    %251 = vmatprep.subr.mxu0 0.0
    %252 = vmatpush1.msra.mxu0 0.0
    %253 = vmatprep.subr.mxu0 0.0
    %254 = vmatpush1.msra.mxu0 0.0
    %255 = vmatprep.subr.mxu0 0.0
    %256 = vmatpush1.msra.mxu0 0.0
    %257 = vmatprep.subr.mxu0 0.0
    %258 = vmatpush1.msra.mxu0 0.0
    %259 = vmatprep.subr.mxu0 0.0
    %260 = vmatpush1.msra.mxu0 0.0
    %261 = vmatprep.subr.mxu0 0.0
    %262 = vmatpush1.msra.mxu0 0.0
    %263 = vmatprep.subr.mxu0 0.0
    %264 = vmatpush1.msra.mxu0 0.0
    %265 = vmatprep.subr.mxu0 0.0
    %266 = vmatpush1.msra.mxu0 0.0
    %267 = vmatprep.subr.mxu0 0.0
    %268 = vmatpush1.msra.mxu0 0.0
    %269 = vmatprep.mubr.f32.mxu0 0.0
    %270 = vmatmul.mubr.f32.gmra.mrb[0].mxu0 %v203
    %v271 = vpop.f32.mrb[0].mxu0
    %v272 = vadd.f32 0.0, %v271
    %v273 = vpop.f32.mrb[0].mxu0
    %v274 = vadd.f32 0.0, %v273
    %275 = vdwg.mxu0
    %v276 = vadd.f32 %v199, %v272
    %v277 = vadd.f32 %v200, %v274
    %v279 = vlaneseq
    %v280 = vshrl.u32 %v279, 7
    %v281 = vsub.s32 0, %v280
    %v282 = vrot.slane %v55, %v281
    %v283 = vlaneseq
    %v284 = vshrl.u32 %v283, 7
    %v285 = vsub.s32 1, %v284
    %v286 = vrot.slane %v55, %v285
    %v289 = vadd.f32 %v276, %v282
    %v290 = vadd.f32 %v277, %v286
    %v291 = vxor.u32 %v289, 2147483648
    %v292 = vmul.f32 %v291, 1.442695
    %v293 = vpow.pop %v292
    %v294 = vadd.f32 %v293, 1.0
    %v295 = vrcp.pop %v294
    %v296 = vmul.f32 1.0, %v295
    %v297 = vtanh.pop %v290
    %v298 = vxor.u32 %v290, 2147483648
    %v299 = vmul.f32 %v298, 1.442695
    %v300 = vpow.pop %v299
    %v301 = vadd.f32 %v300, 1.0
    %v302 = vrcp.pop %v301
    %v303 = vmul.f32 1.0, %v302
    %v304 = vmul.f32 %v296, 0.0
    %v305 = vmul.f32 %v296, %v297
    %307 = vrot.lane.b32.xlu0 %v305, 64
    %v308 = vpop.permute.xlu0 %307
    %v310 = vadd.f32 %v304, %v308
    %v311 = vtanh.pop %v310
    %v312 = vmul.f32 %v303, %v311
    %314 = vrot.lane.b32.xlu0 %v312, 64
    %v315 = vpop.permute.xlu0 %314
    %vm317 = vcmask 517120
    %318 = vst.msk [vmem:[#allocation3] sm:$0x3] %vm317, %v315
    %vm319 = vcmp.gt.s32.totalorder %v60, 7
    %v320 = vsel %vm90, 1, 0
    %vm321 = vcmp.eq.s32.totalorder %v320, 1
    %v322 = vsel %vm319, 1, 0
    %323 = vset.pattern.permute.xlu0 0
    %324 = vperm.xlu0 %323, %v322
    %v325 = vpop.permute.xlu0 %324
    %vm326 = vcmp.eq.s32.totalorder %v325, 1
    %vm327 = vmor %vm321, %vm326
    %v328 = vsel %vm327, %v315, 0.0
    %330 = vrot.lane.b32.xlu0 %v310, 64
    %v331 = vpop.permute.xlu0 %330
    %v333 = vsel %vm327, %v331, 0.0
    %v334 = vld [vmem:[#allocation2] sm:$0xc]
    %v335 = vld [vmem:[#allocation2 + $0x8] sm:$0xc]
    %v336 = vld [vmem:[#allocation2 + $0x10] sm:$0x30]
    %v337 = vld [vmem:[#allocation2 + $0x18] sm:$0x30]
    %v340 = vrot.slane %v336, 2
    %v341 = vrot.slane %v337, 2
    %v344 = vsel %vm191, %v334, %v340
    %v345 = vsel %vm192, %v335, %v341
    %v347 = vsel %vm201, %v328, 0
    %349 = vmatprep.subr.mxu0 %v40
    %350 = vmatpush1.msra.mxu0 %v39
    %351 = vmatprep.subr.mxu0 %v42
    %352 = vmatpush1.msra.mxu0 %v41
    %353 = vmatprep.subr.mxu0 %v44
    %354 = vmatpush1.msra.mxu0 %v43
    %355 = vmatprep.subr.mxu0 %v46
    %356 = vmatpush1.msra.mxu0 %v45
    %357 = vmatprep.subr.mxu0 %v48
    %358 = vmatpush1.msra.mxu0 %v47
    %359 = vmatprep.subr.mxu0 %v50
    %360 = vmatpush1.msra.mxu0 %v49
    %361 = vmatprep.subr.mxu0 %v52
    %362 = vmatpush1.msra.mxu0 %v51
    %363 = vmatprep.subr.mxu0 %v54
    %364 = vmatpush1.msra.mxu0 %v53
    %365 = vmatprep.subr.mxu0 0.0
    %366 = vmatpush1.msra.mxu0 0.0
    %367 = vmatprep.subr.mxu0 0.0
    %368 = vmatpush1.msra.mxu0 0.0
    %369 = vmatprep.subr.mxu0 0.0
    %370 = vmatpush1.msra.mxu0 0.0
    %371 = vmatprep.subr.mxu0 0.0
    %372 = vmatpush1.msra.mxu0 0.0
    %373 = vmatprep.subr.mxu0 0.0
    %374 = vmatpush1.msra.mxu0 0.0
    %375 = vmatprep.subr.mxu0 0.0
    %376 = vmatpush1.msra.mxu0 0.0
    %377 = vmatprep.subr.mxu0 0.0
    %378 = vmatpush1.msra.mxu0 0.0
    %379 = vmatprep.subr.mxu0 0.0
    %380 = vmatpush1.msra.mxu0 0.0
    %381 = vmatprep.subr.mxu0 0.0
    %382 = vmatpush1.msra.mxu0 0.0
    %383 = vmatprep.subr.mxu0 0.0
    %384 = vmatpush1.msra.mxu0 0.0
    %385 = vmatprep.subr.mxu0 0.0
    %386 = vmatpush1.msra.mxu0 0.0
    %387 = vmatprep.subr.mxu0 0.0
    %388 = vmatpush1.msra.mxu0 0.0
    %389 = vmatprep.subr.mxu0 0.0
    %390 = vmatpush1.msra.mxu0 0.0
    %391 = vmatprep.subr.mxu0 0.0
    %392 = vmatpush1.msra.mxu0 0.0
    %393 = vmatprep.subr.mxu0 0.0
    %394 = vmatpush1.msra.mxu0 0.0
    %395 = vmatprep.subr.mxu0 0.0
    %396 = vmatpush1.msra.mxu0 0.0
    %397 = vmatprep.subr.mxu0 0.0
    %398 = vmatpush1.msra.mxu0 0.0
    %399 = vmatprep.subr.mxu0 0.0
    %400 = vmatpush1.msra.mxu0 0.0
    %401 = vmatprep.subr.mxu0 0.0
    %402 = vmatpush1.msra.mxu0 0.0
    %403 = vmatprep.subr.mxu0 0.0
    %404 = vmatpush1.msra.mxu0 0.0
    %405 = vmatprep.subr.mxu0 0.0
    %406 = vmatpush1.msra.mxu0 0.0
    %407 = vmatprep.subr.mxu0 0.0
    %408 = vmatpush1.msra.mxu0 0.0
    %409 = vmatprep.subr.mxu0 0.0
    %410 = vmatpush1.msra.mxu0 0.0
    %411 = vmatprep.subr.mxu0 0.0
    %412 = vmatpush1.msra.mxu0 0.0
    %413 = vmatprep.mubr.f32.mxu0 0.0
    %414 = vmatmul.mubr.f32.gmra.mrb[0].mxu0 %v347
    %v415 = vpop.f32.mrb[0].mxu0
    %v416 = vadd.f32 0.0, %v415
    %v417 = vpop.f32.mrb[0].mxu0
    %v418 = vadd.f32 0.0, %v417
    %419 = vdwg.mxu0
    %v422 = vrot.slane %v416, 6
    %v423 = vrot.slane %v418, 6
    %v426 = vadd.f32 %v344, %v422
    %v427 = vadd.f32 %v345, %v423
    %v428 = vadd.f32 %v426, %v282
    %v429 = vadd.f32 %v427, %v286
    %v430 = vxor.u32 %v428, 2147483648
    %v431 = vmul.f32 %v430, 1.442695
    %v432 = vpow.pop %v431
    %v433 = vadd.f32 %v432, 1.0
    %v434 = vrcp.pop %v433
    %v435 = vmul.f32 1.0, %v434
    %v436 = vtanh.pop %v429
    %v437 = vxor.u32 %v429, 2147483648
    %v438 = vmul.f32 %v437, 1.442695
    %v439 = vpow.pop %v438
    %v440 = vadd.f32 %v439, 1.0
    %v441 = vrcp.pop %v440
    %v442 = vmul.f32 1.0, %v441
    %v444 = vrot.slane %v333, 6
    %445 = vrot.lane.b32.xlu0 %v444, 64
    %v446 = vpop.permute.xlu0 %445
    %v448 = vmul.f32 %v435, %v446
    %v449 = vmul.f32 %v435, %v436
    %451 = vrot.lane.b32.xlu0 %v449, 64
    %v452 = vpop.permute.xlu0 %451
    %v454 = vadd.f32 %v448, %v452
    %v455 = vtanh.pop %v454
    %v456 = vmul.f32 %v442, %v455
    %458 = vrot.lane.b32.xlu0 %v456, 64
    %v459 = vpop.permute.xlu0 %458
    %vm461 = vcmask 519170
    %462 = vst.msk [vmem:[#allocation3] sm:$0xc] %vm461, %v459
    %vm463 = vcmp.gt.s32.totalorder %v60, 6
    %v464 = vsel %vm463, 1, 0
    %465 = vset.pattern.permute.xlu0 0
    %466 = vperm.xlu0 %465, %v464
    %v467 = vpop.permute.xlu0 %466
    %vm468 = vcmp.eq.s32.totalorder %v467, 1
    %vm469 = vmor %vm321, %vm468
    %v470 = vrot.slane %v456, 2
    %471 = vrot.lane.b32.xlu0 %v470, 64
    %v472 = vpop.permute.xlu0 %471
    %v474 = vsel %vm469, %v472, %v328
    %v476 = vrot.slane %v454, 2
    %477 = vrot.lane.b32.xlu0 %v476, 64
    %v478 = vpop.permute.xlu0 %477
    %v480 = vsel %vm469, %v478, %v333
    %v481 = vld [vmem:[#allocation2] sm:$0x30]
    %v482 = vld [vmem:[#allocation2 + $0x8] sm:$0x30]
    %v483 = vld [vmem:[#allocation2 + $0x10] sm:$0xc]
    %v484 = vld [vmem:[#allocation2 + $0x18] sm:$0xc]
    %v487 = vrot.slane %v483, 6
    %v488 = vrot.slane %v484, 6
    %v491 = vsel %vm191, %v481, %v487
    %v492 = vsel %vm192, %v482, %v488
    %v494 = vsel %vm201, %v474, 0
    %496 = vmatprep.subr.mxu0 %v40
    %497 = vmatpush1.msra.mxu0 %v39
    %498 = vmatprep.subr.mxu0 %v42
    %499 = vmatpush1.msra.mxu0 %v41
    %500 = vmatprep.subr.mxu0 %v44
    %501 = vmatpush1.msra.mxu0 %v43
    %502 = vmatprep.subr.mxu0 %v46
    %503 = vmatpush1.msra.mxu0 %v45
    %504 = vmatprep.subr.mxu0 %v48
    %505 = vmatpush1.msra.mxu0 %v47
    %506 = vmatprep.subr.mxu0 %v50
    %507 = vmatpush1.msra.mxu0 %v49
    %508 = vmatprep.subr.mxu0 %v52
    %509 = vmatpush1.msra.mxu0 %v51
    %510 = vmatprep.subr.mxu0 %v54
    %511 = vmatpush1.msra.mxu0 %v53
    %512 = vmatprep.subr.mxu0 0.0
    %513 = vmatpush1.msra.mxu0 0.0
    %514 = vmatprep.subr.mxu0 0.0
    %515 = vmatpush1.msra.mxu0 0.0
    %516 = vmatprep.subr.mxu0 0.0
    %517 = vmatpush1.msra.mxu0 0.0
    %518 = vmatprep.subr.mxu0 0.0
    %519 = vmatpush1.msra.mxu0 0.0
    %520 = vmatprep.subr.mxu0 0.0
    %521 = vmatpush1.msra.mxu0 0.0
    %522 = vmatprep.subr.mxu0 0.0
    %523 = vmatpush1.msra.mxu0 0.0
    %524 = vmatprep.subr.mxu0 0.0
    %525 = vmatpush1.msra.mxu0 0.0
    %526 = vmatprep.subr.mxu0 0.0
    %527 = vmatpush1.msra.mxu0 0.0
    %528 = vmatprep.subr.mxu0 0.0
    %529 = vmatpush1.msra.mxu0 0.0
    %530 = vmatprep.subr.mxu0 0.0
    %531 = vmatpush1.msra.mxu0 0.0
    %532 = vmatprep.subr.mxu0 0.0
    %533 = vmatpush1.msra.mxu0 0.0
    %534 = vmatprep.subr.mxu0 0.0
    %535 = vmatpush1.msra.mxu0 0.0
    %536 = vmatprep.subr.mxu0 0.0
    %537 = vmatpush1.msra.mxu0 0.0
    %538 = vmatprep.subr.mxu0 0.0
    %539 = vmatpush1.msra.mxu0 0.0
    %540 = vmatprep.subr.mxu0 0.0
    %541 = vmatpush1.msra.mxu0 0.0
    %542 = vmatprep.subr.mxu0 0.0
    %543 = vmatpush1.msra.mxu0 0.0
    %544 = vmatprep.subr.mxu0 0.0
    %545 = vmatpush1.msra.mxu0 0.0
    %546 = vmatprep.subr.mxu0 0.0
    %547 = vmatpush1.msra.mxu0 0.0
    %548 = vmatprep.subr.mxu0 0.0
    %549 = vmatpush1.msra.mxu0 0.0
    %550 = vmatprep.subr.mxu0 0.0
    %551 = vmatpush1.msra.mxu0 0.0
    %552 = vmatprep.subr.mxu0 0.0
    %553 = vmatpush1.msra.mxu0 0.0
    %554 = vmatprep.subr.mxu0 0.0
    %555 = vmatpush1.msra.mxu0 0.0
    %556 = vmatprep.subr.mxu0 0.0
    %557 = vmatpush1.msra.mxu0 0.0
    %558 = vmatprep.subr.mxu0 0.0
    %559 = vmatpush1.msra.mxu0 0.0
    %560 = vmatprep.mubr.f32.mxu0 0.0
    %561 = vmatmul.mubr.f32.gmra.mrb[0].mxu0 %v494
    %v562 = vpop.f32.mrb[0].mxu0
    %v563 = vadd.f32 0.0, %v562
    %v564 = vpop.f32.mrb[0].mxu0
    %v565 = vadd.f32 0.0, %v564
    %566 = vdwg.mxu0
    %v569 = vrot.slane %v563, 4
    %v570 = vrot.slane %v565, 4
    %v573 = vadd.f32 %v491, %v569
    %v574 = vadd.f32 %v492, %v570
    %v575 = vadd.f32 %v573, %v282
    %v576 = vadd.f32 %v574, %v286
    %v577 = vxor.u32 %v575, 2147483648
    %v578 = vmul.f32 %v577, 1.442695
    %v579 = vpow.pop %v578
    %v580 = vadd.f32 %v579, 1.0
    %v581 = vrcp.pop %v580
    %v582 = vmul.f32 1.0, %v581
    %v583 = vtanh.pop %v576
    %v584 = vxor.u32 %v576, 2147483648
    %v585 = vmul.f32 %v584, 1.442695
    %v586 = vpow.pop %v585
    %v587 = vadd.f32 %v586, 1.0
    %v588 = vrcp.pop %v587
    %v589 = vmul.f32 1.0, %v588
    %v591 = vrot.slane %v480, 4
    %592 = vrot.lane.b32.xlu0 %v591, 64
    %v593 = vpop.permute.xlu0 %592
    %v595 = vmul.f32 %v582, %v593
    %v596 = vmul.f32 %v582, %v583
    %598 = vrot.lane.b32.xlu0 %v596, 64
    %v599 = vpop.permute.xlu0 %598
    %v601 = vadd.f32 %v595, %v599
    %v602 = vtanh.pop %v601
    %v603 = vmul.f32 %v589, %v602
    %605 = vrot.lane.b32.xlu0 %v603, 64
    %v606 = vpop.permute.xlu0 %605
    %vm608 = vcmask 521220
    %609 = vst.msk [vmem:[#allocation3] sm:$0x30] %vm608, %v606
    %vm610 = vcmp.gt.s32.totalorder %v60, 5
    %v611 = vsel %vm610, 1, 0
    %612 = vset.pattern.permute.xlu0 0
    %613 = vperm.xlu0 %612, %v611
    %v614 = vpop.permute.xlu0 %613
    %vm615 = vcmp.eq.s32.totalorder %v614, 1
    %vm616 = vmor %vm321, %vm615
    %v617 = vrot.slane %v603, 4
    %618 = vrot.lane.b32.xlu0 %v617, 64
    %v619 = vpop.permute.xlu0 %618
    %v621 = vsel %vm616, %v619, %v474
    %v623 = vrot.slane %v601, 4
    %624 = vrot.lane.b32.xlu0 %v623, 64
    %v625 = vpop.permute.xlu0 %624
    %v627 = vsel %vm616, %v625, %v480
    %v628 = vld [vmem:[#allocation2] sm:$0xc0]
    %v629 = vld [vmem:[#allocation2 + $0x8] sm:$0xc0]
    %v630 = vld [vmem:[#allocation2 + $0x10] sm:$0x3]
    %v631 = vld [vmem:[#allocation2 + $0x18] sm:$0x3]
    %v634 = vrot.slane %v630, 2
    %v635 = vrot.slane %v631, 2
    %v638 = vsel %vm191, %v628, %v634
    %v639 = vsel %vm192, %v629, %v635
    %v641 = vsel %vm201, %v621, 0
    %643 = vmatprep.subr.mxu0 %v40
    %644 = vmatpush1.msra.mxu0 %v39
    %645 = vmatprep.subr.mxu0 %v42
    %646 = vmatpush1.msra.mxu0 %v41
    %647 = vmatprep.subr.mxu0 %v44
    %648 = vmatpush1.msra.mxu0 %v43
    %649 = vmatprep.subr.mxu0 %v46
    %650 = vmatpush1.msra.mxu0 %v45
    %651 = vmatprep.subr.mxu0 %v48
    %652 = vmatpush1.msra.mxu0 %v47
    %653 = vmatprep.subr.mxu0 %v50
    %654 = vmatpush1.msra.mxu0 %v49
    %655 = vmatprep.subr.mxu0 %v52
    %656 = vmatpush1.msra.mxu0 %v51
    %657 = vmatprep.subr.mxu0 %v54
    %658 = vmatpush1.msra.mxu0 %v53
    %659 = vmatprep.subr.mxu0 0.0
    %660 = vmatpush1.msra.mxu0 0.0
    %661 = vmatprep.subr.mxu0 0.0
    %662 = vmatpush1.msra.mxu0 0.0
    %663 = vmatprep.subr.mxu0 0.0
    %664 = vmatpush1.msra.mxu0 0.0
    %665 = vmatprep.subr.mxu0 0.0
    %666 = vmatpush1.msra.mxu0 0.0
    %667 = vmatprep.subr.mxu0 0.0
    %668 = vmatpush1.msra.mxu0 0.0
    %669 = vmatprep.subr.mxu0 0.0
    %670 = vmatpush1.msra.mxu0 0.0
    %671 = vmatprep.subr.mxu0 0.0
    %672 = vmatpush1.msra.mxu0 0.0
    %673 = vmatprep.subr.mxu0 0.0
    %674 = vmatpush1.msra.mxu0 0.0
    %675 = vmatprep.subr.mxu0 0.0
    %676 = vmatpush1.msra.mxu0 0.0
    %677 = vmatprep.subr.mxu0 0.0
    %678 = vmatpush1.msra.mxu0 0.0
    %679 = vmatprep.subr.mxu0 0.0
    %680 = vmatpush1.msra.mxu0 0.0
    %681 = vmatprep.subr.mxu0 0.0
    %682 = vmatpush1.msra.mxu0 0.0
    %683 = vmatprep.subr.mxu0 0.0
    %684 = vmatpush1.msra.mxu0 0.0
    %685 = vmatprep.subr.mxu0 0.0
    %686 = vmatpush1.msra.mxu0 0.0
    %687 = vmatprep.subr.mxu0 0.0
    %688 = vmatpush1.msra.mxu0 0.0
    %689 = vmatprep.subr.mxu0 0.0
    %690 = vmatpush1.msra.mxu0 0.0
    %691 = vmatprep.subr.mxu0 0.0
    %692 = vmatpush1.msra.mxu0 0.0
    %693 = vmatprep.subr.mxu0 0.0
    %694 = vmatpush1.msra.mxu0 0.0
    %695 = vmatprep.subr.mxu0 0.0
    %696 = vmatpush1.msra.mxu0 0.0
    %697 = vmatprep.subr.mxu0 0.0
    %698 = vmatpush1.msra.mxu0 0.0
    %699 = vmatprep.subr.mxu0 0.0
    %700 = vmatpush1.msra.mxu0 0.0
    %701 = vmatprep.subr.mxu0 0.0
    %702 = vmatpush1.msra.mxu0 0.0
    %703 = vmatprep.subr.mxu0 0.0
    %704 = vmatpush1.msra.mxu0 0.0
    %705 = vmatprep.subr.mxu0 0.0
    %706 = vmatpush1.msra.mxu0 0.0
    %707 = vmatprep.mubr.f32.mxu0 0.0
    %708 = vmatmul.mubr.f32.gmra.mrb[0].mxu0 %v641
    %v709 = vpop.f32.mrb[0].mxu0
    %v710 = vadd.f32 0.0, %v709
    %v711 = vpop.f32.mrb[0].mxu0
    %v712 = vadd.f32 0.0, %v711
    %713 = vdwg.mxu0
    %v716 = vrot.slane %v710, 2
    %v717 = vrot.slane %v712, 2
    %v720 = vadd.f32 %v638, %v716
    %v721 = vadd.f32 %v639, %v717
    %v722 = vadd.f32 %v720, %v282
    %v723 = vadd.f32 %v721, %v286
    %v724 = vxor.u32 %v722, 2147483648
    %v725 = vmul.f32 %v724, 1.442695
    %v726 = vpow.pop %v725
    %v727 = vadd.f32 %v726, 1.0
    %v728 = vrcp.pop %v727
    %v729 = vmul.f32 1.0, %v728
    %v730 = vtanh.pop %v723
    %v731 = vxor.u32 %v723, 2147483648
    %v732 = vmul.f32 %v731, 1.442695
    %v733 = vpow.pop %v732
    %v734 = vadd.f32 %v733, 1.0
    %v735 = vrcp.pop %v734
    %v736 = vmul.f32 1.0, %v735
    %v738 = vrot.slane %v627, 2
    %739 = vrot.lane.b32.xlu0 %v738, 64
    %v740 = vpop.permute.xlu0 %739
    %v742 = vmul.f32 %v729, %v740
    %v743 = vmul.f32 %v729, %v730
    %745 = vrot.lane.b32.xlu0 %v743, 64
    %v746 = vpop.permute.xlu0 %745
    %v748 = vadd.f32 %v742, %v746
    %v749 = vtanh.pop %v748
    %v750 = vmul.f32 %v736, %v749
    %752 = vrot.lane.b32.xlu0 %v750, 64
    %v753 = vpop.permute.xlu0 %752
    %vm755 = vcmask 523270
    %756 = vst.msk [vmem:[#allocation3] sm:$0xc0] %vm755, %v753
    %vm757 = vcmp.gt.s32.totalorder %v60, 4
    %v758 = vsel %vm757, 1, 0
    %759 = vset.pattern.permute.xlu0 0
    %760 = vperm.xlu0 %759, %v758
    %v761 = vpop.permute.xlu0 %760
    %vm762 = vcmp.eq.s32.totalorder %v761, 1
    %vm763 = vmor %vm321, %vm762
    %v764 = vrot.slane %v750, 6
    %765 = vrot.lane.b32.xlu0 %v764, 64
    %v766 = vpop.permute.xlu0 %765
    %v768 = vsel %vm763, %v766, %v621
    %v770 = vrot.slane %v748, 6
    %771 = vrot.lane.b32.xlu0 %v770, 64
    %v772 = vpop.permute.xlu0 %771
    %v774 = vsel %vm763, %v772, %v627
    %v775 = vld [vmem:[#allocation2 + $0x10] sm:$0x3]
    %v776 = vld [vmem:[#allocation2 + $0x18] sm:$0x3]
    %v777 = vld [vmem:[#allocation2] sm:$0xc0]
    %v778 = vld [vmem:[#allocation2 + $0x8] sm:$0xc0]
    %v781 = vrot.slane %v777, 6
    %v782 = vrot.slane %v778, 6
    %v785 = vsel %vm191, %v775, %v781
    %v786 = vsel %vm192, %v776, %v782
    %v788 = vsel %vm201, %v768, 0
    %790 = vmatprep.subr.mxu0 %v40
    %791 = vmatpush1.msra.mxu0 %v39
    %792 = vmatprep.subr.mxu0 %v42
    %793 = vmatpush1.msra.mxu0 %v41
    %794 = vmatprep.subr.mxu0 %v44
    %795 = vmatpush1.msra.mxu0 %v43
    %796 = vmatprep.subr.mxu0 %v46
    %797 = vmatpush1.msra.mxu0 %v45
    %798 = vmatprep.subr.mxu0 %v48
    %799 = vmatpush1.msra.mxu0 %v47
    %800 = vmatprep.subr.mxu0 %v50
    %801 = vmatpush1.msra.mxu0 %v49
    %802 = vmatprep.subr.mxu0 %v52
    %803 = vmatpush1.msra.mxu0 %v51
    %804 = vmatprep.subr.mxu0 %v54
    %805 = vmatpush1.msra.mxu0 %v53
    %806 = vmatprep.subr.mxu0 0.0
    %807 = vmatpush1.msra.mxu0 0.0
    %808 = vmatprep.subr.mxu0 0.0
    %809 = vmatpush1.msra.mxu0 0.0
    %810 = vmatprep.subr.mxu0 0.0
    %811 = vmatpush1.msra.mxu0 0.0
    %812 = vmatprep.subr.mxu0 0.0
    %813 = vmatpush1.msra.mxu0 0.0
    %814 = vmatprep.subr.mxu0 0.0
    %815 = vmatpush1.msra.mxu0 0.0
    %816 = vmatprep.subr.mxu0 0.0
    %817 = vmatpush1.msra.mxu0 0.0
    %818 = vmatprep.subr.mxu0 0.0
    %819 = vmatpush1.msra.mxu0 0.0
    %820 = vmatprep.subr.mxu0 0.0
    %821 = vmatpush1.msra.mxu0 0.0
    %822 = vmatprep.subr.mxu0 0.0
    %823 = vmatpush1.msra.mxu0 0.0
    %824 = vmatprep.subr.mxu0 0.0
    %825 = vmatpush1.msra.mxu0 0.0
    %826 = vmatprep.subr.mxu0 0.0
    %827 = vmatpush1.msra.mxu0 0.0
    %828 = vmatprep.subr.mxu0 0.0
    %829 = vmatpush1.msra.mxu0 0.0
    %830 = vmatprep.subr.mxu0 0.0
    %831 = vmatpush1.msra.mxu0 0.0
    %832 = vmatprep.subr.mxu0 0.0
    %833 = vmatpush1.msra.mxu0 0.0
    %834 = vmatprep.subr.mxu0 0.0
    %835 = vmatpush1.msra.mxu0 0.0
    %836 = vmatprep.subr.mxu0 0.0
    %837 = vmatpush1.msra.mxu0 0.0
    %838 = vmatprep.subr.mxu0 0.0
    %839 = vmatpush1.msra.mxu0 0.0
    %840 = vmatprep.subr.mxu0 0.0
    %841 = vmatpush1.msra.mxu0 0.0
    %842 = vmatprep.subr.mxu0 0.0
    %843 = vmatpush1.msra.mxu0 0.0
    %844 = vmatprep.subr.mxu0 0.0
    %845 = vmatpush1.msra.mxu0 0.0
    %846 = vmatprep.subr.mxu0 0.0
    %847 = vmatpush1.msra.mxu0 0.0
    %848 = vmatprep.subr.mxu0 0.0
    %849 = vmatpush1.msra.mxu0 0.0
    %850 = vmatprep.subr.mxu0 0.0
    %851 = vmatpush1.msra.mxu0 0.0
    %852 = vmatprep.subr.mxu0 0.0
    %853 = vmatpush1.msra.mxu0 0.0
    %854 = vmatprep.mubr.f32.mxu0 0.0
    %855 = vmatmul.mubr.f32.gmra.mrb[0].mxu0 %v788
    %v856 = vpop.f32.mrb[0].mxu0
    %v857 = vadd.f32 0.0, %v856
    %v858 = vpop.f32.mrb[0].mxu0
    %v859 = vadd.f32 0.0, %v858
    %860 = vdwg.mxu0
    %v861 = vadd.f32 %v785, %v857
    %v862 = vadd.f32 %v786, %v859
    %v863 = vadd.f32 %v861, %v282
    %v864 = vadd.f32 %v862, %v286
    %v865 = vxor.u32 %v863, 2147483648
    %v866 = vmul.f32 %v865, 1.442695
    %v867 = vpow.pop %v866
    %v868 = vadd.f32 %v867, 1.0
    %v869 = vrcp.pop %v868
    %v870 = vmul.f32 1.0, %v869
    %v871 = vtanh.pop %v864
    %v872 = vxor.u32 %v864, 2147483648
    %v873 = vmul.f32 %v872, 1.442695
    %v874 = vpow.pop %v873
    %v875 = vadd.f32 %v874, 1.0
    %v876 = vrcp.pop %v875
    %v877 = vmul.f32 1.0, %v876
    %879 = vrot.lane.b32.xlu0 %v774, 64
    %v880 = vpop.permute.xlu0 %879
    %v882 = vmul.f32 %v870, %v880
    %v883 = vmul.f32 %v870, %v871
    %885 = vrot.lane.b32.xlu0 %v883, 64
    %v886 = vpop.permute.xlu0 %885
    %v888 = vadd.f32 %v882, %v886
    %v889 = vtanh.pop %v888
    %v890 = vmul.f32 %v877, %v889
    %892 = vrot.lane.b32.xlu0 %v890, 64
    %v893 = vpop.permute.xlu0 %892
    %895 = vst.msk [vmem:[#allocation3 + $0x8] sm:$0x3] %vm317, %v893
    %vm896 = vcmp.gt.s32.totalorder %v60, 3
    %v897 = vsel %vm896, 1, 0
    %898 = vset.pattern.permute.xlu0 0
    %899 = vperm.xlu0 %898, %v897
    %v900 = vpop.permute.xlu0 %899
    %vm901 = vcmp.eq.s32.totalorder %v900, 1
    %vm902 = vmor %vm321, %vm901
    %v903 = vsel %vm902, %v893, %v768
    %905 = vrot.lane.b32.xlu0 %v888, 64
    %v906 = vpop.permute.xlu0 %905
    %v908 = vsel %vm902, %v906, %v774
    %v909 = vld [vmem:[#allocation2 + $0x10] sm:$0xc]
    %v910 = vld [vmem:[#allocation2 + $0x18] sm:$0xc]
    %v911 = vld [vmem:[#allocation2] sm:$0x30]
    %v912 = vld [vmem:[#allocation2 + $0x8] sm:$0x30]
    %v915 = vrot.slane %v911, 2
    %v916 = vrot.slane %v912, 2
    %v919 = vsel %vm191, %v909, %v915
    %v920 = vsel %vm192, %v910, %v916
    %v922 = vsel %vm201, %v903, 0
    %924 = vmatprep.subr.mxu0 %v40
    %925 = vmatpush1.msra.mxu0 %v39
    %926 = vmatprep.subr.mxu0 %v42
    %927 = vmatpush1.msra.mxu0 %v41
    %928 = vmatprep.subr.mxu0 %v44
    %929 = vmatpush1.msra.mxu0 %v43
    %930 = vmatprep.subr.mxu0 %v46
    %931 = vmatpush1.msra.mxu0 %v45
    %932 = vmatprep.subr.mxu0 %v48
    %933 = vmatpush1.msra.mxu0 %v47
    %934 = vmatprep.subr.mxu0 %v50
    %935 = vmatpush1.msra.mxu0 %v49
    %936 = vmatprep.subr.mxu0 %v52
    %937 = vmatpush1.msra.mxu0 %v51
    %938 = vmatprep.subr.mxu0 %v54
    %939 = vmatpush1.msra.mxu0 %v53
    %940 = vmatprep.subr.mxu0 0.0
    %941 = vmatpush1.msra.mxu0 0.0
    %942 = vmatprep.subr.mxu0 0.0
    %943 = vmatpush1.msra.mxu0 0.0
    %944 = vmatprep.subr.mxu0 0.0
    %945 = vmatpush1.msra.mxu0 0.0
    %946 = vmatprep.subr.mxu0 0.0
    %947 = vmatpush1.msra.mxu0 0.0
    %948 = vmatprep.subr.mxu0 0.0
    %949 = vmatpush1.msra.mxu0 0.0
    %950 = vmatprep.subr.mxu0 0.0
    %951 = vmatpush1.msra.mxu0 0.0
    %952 = vmatprep.subr.mxu0 0.0
    %953 = vmatpush1.msra.mxu0 0.0
    %954 = vmatprep.subr.mxu0 0.0
    %955 = vmatpush1.msra.mxu0 0.0
    %956 = vmatprep.subr.mxu0 0.0
    %957 = vmatpush1.msra.mxu0 0.0
    %958 = vmatprep.subr.mxu0 0.0
    %959 = vmatpush1.msra.mxu0 0.0
    %960 = vmatprep.subr.mxu0 0.0
    %961 = vmatpush1.msra.mxu0 0.0
    %962 = vmatprep.subr.mxu0 0.0
    %963 = vmatpush1.msra.mxu0 0.0
    %964 = vmatprep.subr.mxu0 0.0
    %965 = vmatpush1.msra.mxu0 0.0
    %966 = vmatprep.subr.mxu0 0.0
    %967 = vmatpush1.msra.mxu0 0.0
    %968 = vmatprep.subr.mxu0 0.0
    %969 = vmatpush1.msra.mxu0 0.0
    %970 = vmatprep.subr.mxu0 0.0
    %971 = vmatpush1.msra.mxu0 0.0
    %972 = vmatprep.subr.mxu0 0.0
    %973 = vmatpush1.msra.mxu0 0.0
    %974 = vmatprep.subr.mxu0 0.0
    %975 = vmatpush1.msra.mxu0 0.0
    %976 = vmatprep.subr.mxu0 0.0
    %977 = vmatpush1.msra.mxu0 0.0
    %978 = vmatprep.subr.mxu0 0.0
    %979 = vmatpush1.msra.mxu0 0.0
    %980 = vmatprep.subr.mxu0 0.0
    %981 = vmatpush1.msra.mxu0 0.0
    %982 = vmatprep.subr.mxu0 0.0
    %983 = vmatpush1.msra.mxu0 0.0
    %984 = vmatprep.subr.mxu0 0.0
    %985 = vmatpush1.msra.mxu0 0.0
    %986 = vmatprep.subr.mxu0 0.0
    %987 = vmatpush1.msra.mxu0 0.0
    %988 = vmatprep.mubr.f32.mxu0 0.0
    %989 = vmatmul.mubr.f32.gmra.mrb[0].mxu0 %v922
    %v990 = vpop.f32.mrb[0].mxu0
    %v991 = vadd.f32 0.0, %v990
    %v992 = vpop.f32.mrb[0].mxu0
    %v993 = vadd.f32 0.0, %v992
    %994 = vdwg.mxu0
    %v997 = vrot.slane %v991, 6
    %v998 = vrot.slane %v993, 6
    %v1001 = vadd.f32 %v919, %v997
    %v1002 = vadd.f32 %v920, %v998
    %v1003 = vadd.f32 %v1001, %v282
    %v1004 = vadd.f32 %v1002, %v286
    %v1005 = vxor.u32 %v1003, 2147483648
    %v1006 = vmul.f32 %v1005, 1.442695
    %v1007 = vpow.pop %v1006
    %v1008 = vadd.f32 %v1007, 1.0
    %v1009 = vrcp.pop %v1008
    %v1010 = vmul.f32 1.0, %v1009
    %v1011 = vtanh.pop %v1004
    %v1012 = vxor.u32 %v1004, 2147483648
    %v1013 = vmul.f32 %v1012, 1.442695
    %v1014 = vpow.pop %v1013
    %v1015 = vadd.f32 %v1014, 1.0
    %v1016 = vrcp.pop %v1015
    %v1017 = vmul.f32 1.0, %v1016
    %v1019 = vrot.slane %v908, 6
    %1020 = vrot.lane.b32.xlu0 %v1019, 64
    %v1021 = vpop.permute.xlu0 %1020
    %v1023 = vmul.f32 %v1010, %v1021
    %v1024 = vmul.f32 %v1010, %v1011
    %1026 = vrot.lane.b32.xlu0 %v1024, 64
    %v1027 = vpop.permute.xlu0 %1026
    %v1029 = vadd.f32 %v1023, %v1027
    %v1030 = vtanh.pop %v1029
    %v1031 = vmul.f32 %v1017, %v1030
    %1033 = vrot.lane.b32.xlu0 %v1031, 64
    %v1034 = vpop.permute.xlu0 %1033
    %1036 = vst.msk [vmem:[#allocation3 + $0x8] sm:$0xc] %vm461, %v1034
    %vm1037 = vcmp.gt.s32.totalorder %v60, 2
    %v1038 = vsel %vm1037, 1, 0
    %1039 = vset.pattern.permute.xlu0 0
    %1040 = vperm.xlu0 %1039, %v1038
    %v1041 = vpop.permute.xlu0 %1040
    %vm1042 = vcmp.eq.s32.totalorder %v1041, 1
    %vm1043 = vmor %vm321, %vm1042
    %v1044 = vrot.slane %v1031, 2
    %1045 = vrot.lane.b32.xlu0 %v1044, 64
    %v1046 = vpop.permute.xlu0 %1045
    %v1048 = vsel %vm1043, %v1046, %v903
    %v1050 = vrot.slane %v1029, 2
    %1051 = vrot.lane.b32.xlu0 %v1050, 64
    %v1052 = vpop.permute.xlu0 %1051
    %v1054 = vsel %vm1043, %v1052, %v908
    %v1055 = vld [vmem:[#allocation2 + $0x10] sm:$0x30]
    %v1056 = vld [vmem:[#allocation2 + $0x18] sm:$0x30]
    %v1057 = vld [vmem:[#allocation2] sm:$0xc]
    %v1058 = vld [vmem:[#allocation2 + $0x8] sm:$0xc]
    %v1061 = vrot.slane %v1057, 6
    %v1062 = vrot.slane %v1058, 6
    %v1065 = vsel %vm191, %v1055, %v1061
    %v1066 = vsel %vm192, %v1056, %v1062
    %v1068 = vsel %vm201, %v1048, 0
    %1070 = vmatprep.subr.mxu0 %v40
    %1071 = vmatpush1.msra.mxu0 %v39
    %1072 = vmatprep.subr.mxu0 %v42
    %1073 = vmatpush1.msra.mxu0 %v41
    %1074 = vmatprep.subr.mxu0 %v44
    %1075 = vmatpush1.msra.mxu0 %v43
    %1076 = vmatprep.subr.mxu0 %v46
    %1077 = vmatpush1.msra.mxu0 %v45
    %1078 = vmatprep.subr.mxu0 %v48
    %1079 = vmatpush1.msra.mxu0 %v47
    %1080 = vmatprep.subr.mxu0 %v50
    %1081 = vmatpush1.msra.mxu0 %v49
    %1082 = vmatprep.subr.mxu0 %v52
    %1083 = vmatpush1.msra.mxu0 %v51
    %1084 = vmatprep.subr.mxu0 %v54
    %1085 = vmatpush1.msra.mxu0 %v53
    %1086 = vmatprep.subr.mxu0 0.0
    %1087 = vmatpush1.msra.mxu0 0.0
    %1088 = vmatprep.subr.mxu0 0.0
    %1089 = vmatpush1.msra.mxu0 0.0
    %1090 = vmatprep.subr.mxu0 0.0
    %1091 = vmatpush1.msra.mxu0 0.0
    %1092 = vmatprep.subr.mxu0 0.0
    %1093 = vmatpush1.msra.mxu0 0.0
    %1094 = vmatprep.subr.mxu0 0.0
    %1095 = vmatpush1.msra.mxu0 0.0
    %1096 = vmatprep.subr.mxu0 0.0
    %1097 = vmatpush1.msra.mxu0 0.0
    %1098 = vmatprep.subr.mxu0 0.0
    %1099 = vmatpush1.msra.mxu0 0.0
    %1100 = vmatprep.subr.mxu0 0.0
    %1101 = vmatpush1.msra.mxu0 0.0
    %1102 = vmatprep.subr.mxu0 0.0
    %1103 = vmatpush1.msra.mxu0 0.0
    %1104 = vmatprep.subr.mxu0 0.0
    %1105 = vmatpush1.msra.mxu0 0.0
    %1106 = vmatprep.subr.mxu0 0.0
    %1107 = vmatpush1.msra.mxu0 0.0
    %1108 = vmatprep.subr.mxu0 0.0
    %1109 = vmatpush1.msra.mxu0 0.0
    %1110 = vmatprep.subr.mxu0 0.0
    %1111 = vmatpush1.msra.mxu0 0.0
    %1112 = vmatprep.subr.mxu0 0.0
    %1113 = vmatpush1.msra.mxu0 0.0
    %1114 = vmatprep.subr.mxu0 0.0
    %1115 = vmatpush1.msra.mxu0 0.0
    %1116 = vmatprep.subr.mxu0 0.0
    %1117 = vmatpush1.msra.mxu0 0.0
    %1118 = vmatprep.subr.mxu0 0.0
    %1119 = vmatpush1.msra.mxu0 0.0
    %1120 = vmatprep.subr.mxu0 0.0
    %1121 = vmatpush1.msra.mxu0 0.0
    %1122 = vmatprep.subr.mxu0 0.0
    %1123 = vmatpush1.msra.mxu0 0.0
    %1124 = vmatprep.subr.mxu0 0.0
    %1125 = vmatpush1.msra.mxu0 0.0
    %1126 = vmatprep.subr.mxu0 0.0
    %1127 = vmatpush1.msra.mxu0 0.0
    %1128 = vmatprep.subr.mxu0 0.0
    %1129 = vmatpush1.msra.mxu0 0.0
    %1130 = vmatprep.subr.mxu0 0.0
    %1131 = vmatpush1.msra.mxu0 0.0
    %1132 = vmatprep.subr.mxu0 0.0
    %1133 = vmatpush1.msra.mxu0 0.0
    %1134 = vmatprep.mubr.f32.mxu0 0.0
    %1135 = vmatmul.mubr.f32.gmra.mrb[0].mxu0 %v1068
    %v1136 = vpop.f32.mrb[0].mxu0
    %v1137 = vadd.f32 0.0, %v1136
    %v1138 = vpop.f32.mrb[0].mxu0
    %v1139 = vadd.f32 0.0, %v1138
    %1140 = vdwg.mxu0
    %v1143 = vrot.slane %v1137, 4
    %v1144 = vrot.slane %v1139, 4
    %v1147 = vadd.f32 %v1065, %v1143
    %v1148 = vadd.f32 %v1066, %v1144
    %v1149 = vadd.f32 %v1147, %v282
    %v1150 = vadd.f32 %v1148, %v286
    %v1151 = vxor.u32 %v1149, 2147483648
    %v1152 = vmul.f32 %v1151, 1.442695
    %v1153 = vpow.pop %v1152
    %v1154 = vadd.f32 %v1153, 1.0
    %v1155 = vrcp.pop %v1154
    %v1156 = vmul.f32 1.0, %v1155
    %v1157 = vtanh.pop %v1150
    %v1158 = vxor.u32 %v1150, 2147483648
    %v1159 = vmul.f32 %v1158, 1.442695
    %v1160 = vpow.pop %v1159
    %v1161 = vadd.f32 %v1160, 1.0
    %v1162 = vrcp.pop %v1161
    %v1163 = vmul.f32 1.0, %v1162
    %v1165 = vrot.slane %v1054, 4
    %1166 = vrot.lane.b32.xlu0 %v1165, 64
    %v1167 = vpop.permute.xlu0 %1166
    %v1169 = vmul.f32 %v1156, %v1167
    %v1170 = vmul.f32 %v1156, %v1157
    %1172 = vrot.lane.b32.xlu0 %v1170, 64
    %v1173 = vpop.permute.xlu0 %1172
    %v1175 = vadd.f32 %v1169, %v1173
    %v1176 = vtanh.pop %v1175
    %v1177 = vmul.f32 %v1163, %v1176
    %1179 = vrot.lane.b32.xlu0 %v1177, 64
    %v1180 = vpop.permute.xlu0 %1179
    %1182 = vst.msk [vmem:[#allocation3 + $0x8] sm:$0x30] %vm608, %v1180
    %vm1183 = vcmp.gt.s32.totalorder %v60, 1
    %v1184 = vsel %vm1183, 1, 0
    %1185 = vset.pattern.permute.xlu0 0
    %1186 = vperm.xlu0 %1185, %v1184
    %v1187 = vpop.permute.xlu0 %1186
    %vm1188 = vcmp.eq.s32.totalorder %v1187, 1
    %vm1189 = vmor %vm321, %vm1188
    %v1190 = vrot.slane %v1177, 4
    %1191 = vrot.lane.b32.xlu0 %v1190, 64
    %v1192 = vpop.permute.xlu0 %1191
    %v1194 = vsel %vm1189, %v1192, %v1048
    %v1196 = vrot.slane %v1175, 4
    %1197 = vrot.lane.b32.xlu0 %v1196, 64
    %v1198 = vpop.permute.xlu0 %1197
    %v1200 = vsel %vm1189, %v1198, %v1054
    %v1201 = vld [vmem:[#allocation2 + $0x10] sm:$0xc0]
    %v1202 = vld [vmem:[#allocation2 + $0x18] sm:$0xc0]
    %v1203 = vld [vmem:[#allocation2] sm:$0x3]
    %v1204 = vld [vmem:[#allocation2 + $0x8] sm:$0x3]
    %v1207 = vrot.slane %v1203, 2
    %v1208 = vrot.slane %v1204, 2
    %v1211 = vsel %vm191, %v1201, %v1207
    %v1212 = vsel %vm192, %v1202, %v1208
    %v1214 = vsel %vm201, %v1194, 0
    %1216 = vmatprep.subr.mxu0 %v40
    %1217 = vmatpush1.msra.mxu0 %v39
    %1218 = vmatprep.subr.mxu0 %v42
    %1219 = vmatpush1.msra.mxu0 %v41
    %1220 = vmatprep.subr.mxu0 %v44
    %1221 = vmatpush1.msra.mxu0 %v43
    %1222 = vmatprep.subr.mxu0 %v46
    %1223 = vmatpush1.msra.mxu0 %v45
    %1224 = vmatprep.subr.mxu0 %v48
    %1225 = vmatpush1.msra.mxu0 %v47
    %1226 = vmatprep.subr.mxu0 %v50
    %1227 = vmatpush1.msra.mxu0 %v49
    %1228 = vmatprep.subr.mxu0 %v52
    %1229 = vmatpush1.msra.mxu0 %v51
    %1230 = vmatprep.subr.mxu0 %v54
    %1231 = vmatpush1.msra.mxu0 %v53
    %1232 = vmatprep.subr.mxu0 0.0
    %1233 = vmatpush1.msra.mxu0 0.0
    %1234 = vmatprep.subr.mxu0 0.0
    %1235 = vmatpush1.msra.mxu0 0.0
    %1236 = vmatprep.subr.mxu0 0.0
    %1237 = vmatpush1.msra.mxu0 0.0
    %1238 = vmatprep.subr.mxu0 0.0
    %1239 = vmatpush1.msra.mxu0 0.0
    %1240 = vmatprep.subr.mxu0 0.0
    %1241 = vmatpush1.msra.mxu0 0.0
    %1242 = vmatprep.subr.mxu0 0.0
    %1243 = vmatpush1.msra.mxu0 0.0
    %1244 = vmatprep.subr.mxu0 0.0
    %1245 = vmatpush1.msra.mxu0 0.0
    %1246 = vmatprep.subr.mxu0 0.0
    %1247 = vmatpush1.msra.mxu0 0.0
    %1248 = vmatprep.subr.mxu0 0.0
    %1249 = vmatpush1.msra.mxu0 0.0
    %1250 = vmatprep.subr.mxu0 0.0
    %1251 = vmatpush1.msra.mxu0 0.0
    %1252 = vmatprep.subr.mxu0 0.0
    %1253 = vmatpush1.msra.mxu0 0.0
    %1254 = vmatprep.subr.mxu0 0.0
    %1255 = vmatpush1.msra.mxu0 0.0
    %1256 = vmatprep.subr.mxu0 0.0
    %1257 = vmatpush1.msra.mxu0 0.0
    %1258 = vmatprep.subr.mxu0 0.0
    %1259 = vmatpush1.msra.mxu0 0.0
    %1260 = vmatprep.subr.mxu0 0.0
    %1261 = vmatpush1.msra.mxu0 0.0
    %1262 = vmatprep.subr.mxu0 0.0
    %1263 = vmatpush1.msra.mxu0 0.0
    %1264 = vmatprep.subr.mxu0 0.0
    %1265 = vmatpush1.msra.mxu0 0.0
    %1266 = vmatprep.subr.mxu0 0.0
    %1267 = vmatpush1.msra.mxu0 0.0
    %1268 = vmatprep.subr.mxu0 0.0
    %1269 = vmatpush1.msra.mxu0 0.0
    %1270 = vmatprep.subr.mxu0 0.0
    %1271 = vmatpush1.msra.mxu0 0.0
    %1272 = vmatprep.subr.mxu0 0.0
    %1273 = vmatpush1.msra.mxu0 0.0
    %1274 = vmatprep.subr.mxu0 0.0
    %1275 = vmatpush1.msra.mxu0 0.0
    %1276 = vmatprep.subr.mxu0 0.0
    %1277 = vmatpush1.msra.mxu0 0.0
    %1278 = vmatprep.subr.mxu0 0.0
    %1279 = vmatpush1.msra.mxu0 0.0
    %1280 = vmatprep.mubr.f32.mxu0 0.0
    %1281 = vmatmul.mubr.f32.gmra.mrb[0].mxu0 %v1214
    %v1282 = vpop.f32.mrb[0].mxu0
    %v1283 = vadd.f32 0.0, %v1282
    %v1284 = vpop.f32.mrb[0].mxu0
    %v1285 = vadd.f32 0.0, %v1284
    %1286 = vdwg.mxu0
    %v1289 = vrot.slane %v1283, 2
    %v1290 = vrot.slane %v1285, 2
    %v1293 = vadd.f32 %v1211, %v1289
    %v1294 = vadd.f32 %v1212, %v1290
    %v1295 = vadd.f32 %v1293, %v282
    %v1296 = vadd.f32 %v1294, %v286
    %v1297 = vxor.u32 %v1295, 2147483648
    %v1298 = vmul.f32 %v1297, 1.442695
    %v1299 = vpow.pop %v1298
    %v1300 = vadd.f32 %v1299, 1.0
    %v1301 = vrcp.pop %v1300
    %v1302 = vmul.f32 1.0, %v1301
    %v1303 = vtanh.pop %v1296
    %v1304 = vxor.u32 %v1296, 2147483648
    %v1305 = vmul.f32 %v1304, 1.442695
    %v1306 = vpow.pop %v1305
    %v1307 = vadd.f32 %v1306, 1.0
    %v1308 = vrcp.pop %v1307
    %v1309 = vmul.f32 1.0, %v1308
    %v1311 = vrot.slane %v1200, 2
    %1312 = vrot.lane.b32.xlu0 %v1311, 64
    %v1313 = vpop.permute.xlu0 %1312
    %v1315 = vmul.f32 %v1302, %v1313
    %v1316 = vmul.f32 %v1302, %v1303
    %1318 = vrot.lane.b32.xlu0 %v1316, 64
    %v1319 = vpop.permute.xlu0 %1318
    %v1321 = vadd.f32 %v1315, %v1319
    %v1322 = vtanh.pop %v1321
    %v1323 = vmul.f32 %v1309, %v1322
    %1325 = vrot.lane.b32.xlu0 %v1323, 64
    %v1326 = vpop.permute.xlu0 %1325
    %1328 = vst.msk [vmem:[#allocation3 + $0x8] sm:$0xc0] %vm755, %v1326
    %v1329 = vld [vmem:[#allocation3] sm:$0xff]
    %v1330 = vld [vmem:[#allocation3 + $0x8] sm:$0xff]
    %v1331 = vld [vmem:[%s6] sm:$0xff]
    %v1332 = vld [vmem:[%s6 + $0x8] sm:$0xff]
    %v1333 = vld [vmem:[%s6 + $0x10] sm:$0xff]
    %v1334 = vld [vmem:[%s6 + $0x18] sm:$0xff]
    %v1335 = vld [vmem:[%s6 + $0x20] sm:$0xff]
    %v1336 = vld [vmem:[%s6 + $0x28] sm:$0xff]
    %v1337 = vld [vmem:[%s6 + $0x30] sm:$0xff]
    %v1338 = vld [vmem:[%s6 + $0x38] sm:$0xff]
    %v1340 = vsel %vm201, %v1329, 0
    %v1343 = vsel %vm201, %v1330, 0
    %1345 = vmatprep.subr.mxu0 0.0
    %1346 = vmatpush1.msra.mxu0 %v1331
    %1347 = vmatprep.subr.mxu0 0.0
    %1348 = vmatpush1.msra.mxu0 %v1332
    %1349 = vmatprep.subr.mxu0 0.0
    %1350 = vmatpush1.msra.mxu0 %v1333
    %1351 = vmatprep.subr.mxu0 0.0
    %1352 = vmatpush1.msra.mxu0 %v1334
    %1353 = vmatprep.subr.mxu0 0.0
    %1354 = vmatpush1.msra.mxu0 %v1335
    %1355 = vmatprep.subr.mxu0 0.0
    %1356 = vmatpush1.msra.mxu0 %v1336
    %1357 = vmatprep.subr.mxu0 0.0
    %1358 = vmatpush1.msra.mxu0 %v1337
    %1359 = vmatprep.subr.mxu0 0.0
    %1360 = vmatpush1.msra.mxu0 %v1338
    %1361 = vmatprep.subr.mxu0 0.0
    %1362 = vmatpush1.msra.mxu0 0.0
    %1363 = vmatprep.subr.mxu0 0.0
    %1364 = vmatpush1.msra.mxu0 0.0
    %1365 = vmatprep.subr.mxu0 0.0
    %1366 = vmatpush1.msra.mxu0 0.0
    %1367 = vmatprep.subr.mxu0 0.0
    %1368 = vmatpush1.msra.mxu0 0.0
    %1369 = vmatprep.subr.mxu0 0.0
    %1370 = vmatpush1.msra.mxu0 0.0
    %1371 = vmatprep.subr.mxu0 0.0
    %1372 = vmatpush1.msra.mxu0 0.0
    %1373 = vmatprep.subr.mxu0 0.0
    %1374 = vmatpush1.msra.mxu0 0.0
    %1375 = vmatprep.subr.mxu0 0.0
    %1376 = vmatpush1.msra.mxu0 0.0
    %1377 = vmatprep.subr.mxu0 0.0
    %1378 = vmatpush1.msra.mxu0 0.0
    %1379 = vmatprep.subr.mxu0 0.0
    %1380 = vmatpush1.msra.mxu0 0.0
    %1381 = vmatprep.subr.mxu0 0.0
    %1382 = vmatpush1.msra.mxu0 0.0
    %1383 = vmatprep.subr.mxu0 0.0
    %1384 = vmatpush1.msra.mxu0 0.0
    %1385 = vmatprep.subr.mxu0 0.0
    %1386 = vmatpush1.msra.mxu0 0.0
    %1387 = vmatprep.subr.mxu0 0.0
    %1388 = vmatpush1.msra.mxu0 0.0
    %1389 = vmatprep.subr.mxu0 0.0
    %1390 = vmatpush1.msra.mxu0 0.0
    %1391 = vmatprep.subr.mxu0 0.0
    %1392 = vmatpush1.msra.mxu0 0.0
    %1393 = vmatprep.subr.mxu0 0.0
    %1394 = vmatpush1.msra.mxu0 0.0
    %1395 = vmatprep.subr.mxu0 0.0
    %1396 = vmatpush1.msra.mxu0 0.0
    %1397 = vmatprep.subr.mxu0 0.0
    %1398 = vmatpush1.msra.mxu0 0.0
    %1399 = vmatprep.subr.mxu0 0.0
    %1400 = vmatpush1.msra.mxu0 0.0
    %1401 = vmatprep.subr.mxu0 0.0
    %1402 = vmatpush1.msra.mxu0 0.0
    %1403 = vmatprep.subr.mxu0 0.0
    %1404 = vmatpush1.msra.mxu0 0.0
    %1405 = vmatprep.subr.mxu0 0.0
    %1406 = vmatpush1.msra.mxu0 0.0
    %1407 = vmatprep.subr.mxu0 0.0
    %1408 = vmatpush1.msra.mxu0 0.0
    %1409 = vmatprep.mubr.f32.mxu0 0.0
    %1410 = vmatmul.mubr.f32.gmra.mrb[0].mxu0 %v1340
    %v1411 = vpop.f32.mrb[0].mxu0
    %v1412 = vadd.f32 0.0, %v1411
    %v1413 = vpop.f32.mrb[0].mxu0
    %1414 = vmatprep.mubr.f32.mxu0 0.0
    %1415 = vmatmul.mubr.f32.gmra.mrb[0].mxu0 %v1343
    %v1416 = vpop.f32.mrb[0].mxu0
    %v1417 = vadd.f32 0.0, %v1416
    %v1418 = vpop.f32.mrb[0].mxu0
    %1419 = vdwg.mxu0
    %vm1420 = vcmp.gt.s32.totalorder %v60, 0
    %v1422 = vrot.slane %v1417, 6
    %1423 = vrot.lane.b32.xlu0 %v1422, 123
    %v1424 = vpop.permute.xlu0 %1423
    %v1426 = vadd.f32 %v1412, %v1424
    %v1427 = vsel %vm1420, 1, 0
    %1428 = vset.pattern.permute.xlu0 0
    %1429 = vperm.xlu0 %1428, %v1427
    %v1430 = vpop.permute.xlu0 %1429
    %vm1431 = vcmp.eq.s32.totalorder %v1430, 1
    %v1432 = vsel %vm1431, %v1426, 0.0
    %v1434 = vlaneseq
    %v1435 = vshrl.u32 %v1434, 7
    %v1436 = vsub.s32 0, %v1435
    %v1437 = vrot.slane %v56, %v1436
    %v1439 = vadd.f32 %v1437, %v1432
    %v1440 = vld [vmem:[%s2] sm:$0x3]
    %1441 = vset.pattern.permute.xlu0 0
    %1442 = vperm.xlu0 %1441, %v1440
    %v1443 = vpop.permute.xlu0 %1442
    %vm1444 = vcmp.eq.s32.totalorder %v1443, %v62
    %v1445 = vsel %vm1444, 1, 0
    %v1446 = vcvt.s32.f32 %v1445
    %v1448 = vlaneseq
    %v1449 = vshrl.u32 %v1448, 7
    %v1450 = vsub.s32 0, %v1449
    %v1451 = vrot.slane %v57, %v1450
    %v1453 = vadd.f32 %v1451, %v1439
    %v1454 = vmul.f32 %v1453, %v1446
    %vm1455 = vcmask 33792
    %v1456 = vsel %vm1455, %v1454, 0.0
    %1457 = vadd.xlane.f32.xlu0 %v1456
    %v1458 = vpop.xlane.xlu0 %1457
    %v1459 = vcvt.s32.f32 %v1184
    %v1460 = vrot.slane %v1417, 2
    %1461 = vrot.lane.b32.xlu0 %v1460, 123
    %v1462 = vpop.permute.xlu0 %1461
    %v1464 = vadd.f32 %v1412, %v1462
    %v1466 = vrot.slane %v1464, 2
    %v1468 = vsel %vm1188, %v1466, 0.0
    %v1469 = vadd.f32 %v1437, %v1468
    %1470 = vset.pattern.permute.xlu0 1
    %1471 = vperm.xlu0 %1470, %v1440
    %v1472 = vpop.permute.xlu0 %1471
    %vm1473 = vcmp.eq.s32.totalorder %v1472, %v62
    %v1474 = vsel %vm1473, 1, 0
    %v1475 = vcvt.s32.f32 %v1474
    %vm1476 = vcmask 39936
    %v1478 = vsel %vm1476, %v1446, 0
    %vm1480 = vcmask 1044480
    %v1482 = vsel %vm1480, %v59, 0
    %1484 = vmatprep.subr.mxu0 0.0
    %1485 = vmatpush1.msra.mxu0 %v1482
    %1486 = vmatprep.subr.mxu0 0.0
    %1487 = vmatpush1.msra.mxu0 0.0
    %1488 = vmatprep.subr.mxu0 0.0
    %1489 = vmatpush1.msra.mxu0 0.0
    %1490 = vmatprep.subr.mxu0 0.0
    %1491 = vmatpush1.msra.mxu0 0.0
    %1492 = vmatprep.subr.mxu0 0.0
    %1493 = vmatpush1.msra.mxu0 0.0
    %1494 = vmatprep.subr.mxu0 0.0
    %1495 = vmatpush1.msra.mxu0 0.0
    %1496 = vmatprep.subr.mxu0 0.0
    %1497 = vmatpush1.msra.mxu0 0.0
    %1498 = vmatprep.subr.mxu0 0.0
    %1499 = vmatpush1.msra.mxu0 0.0
    %1500 = vmatprep.subr.mxu0 0.0
    %1501 = vmatpush1.msra.mxu0 0.0
    %1502 = vmatprep.subr.mxu0 0.0
    %1503 = vmatpush1.msra.mxu0 0.0
    %1504 = vmatprep.subr.mxu0 0.0
    %1505 = vmatpush1.msra.mxu0 0.0
    %1506 = vmatprep.subr.mxu0 0.0
    %1507 = vmatpush1.msra.mxu0 0.0
    %1508 = vmatprep.subr.mxu0 0.0
    %1509 = vmatpush1.msra.mxu0 0.0
    %1510 = vmatprep.subr.mxu0 0.0
    %1511 = vmatpush1.msra.mxu0 0.0
    %1512 = vmatprep.subr.mxu0 0.0
    %1513 = vmatpush1.msra.mxu0 0.0
    %1514 = vmatprep.subr.mxu0 0.0
    %1515 = vmatpush1.msra.mxu0 0.0
    %1516 = vmatprep.subr.mxu0 0.0
    %1517 = vmatpush1.msra.mxu0 0.0
    %1518 = vmatprep.subr.mxu0 0.0
    %1519 = vmatpush1.msra.mxu0 0.0
    %1520 = vmatprep.subr.mxu0 0.0
    %1521 = vmatpush1.msra.mxu0 0.0
    %1522 = vmatprep.subr.mxu0 0.0
    %1523 = vmatpush1.msra.mxu0 0.0
    %1524 = vmatprep.subr.mxu0 0.0
    %1525 = vmatpush1.msra.mxu0 0.0
    %1526 = vmatprep.subr.mxu0 0.0
    %1527 = vmatpush1.msra.mxu0 0.0
    %1528 = vmatprep.subr.mxu0 0.0
    %1529 = vmatpush1.msra.mxu0 0.0
    %1530 = vmatprep.subr.mxu0 0.0
    %1531 = vmatpush1.msra.mxu0 0.0
    %1532 = vmatprep.subr.mxu0 0.0
    %1533 = vmatpush1.msra.mxu0 0.0
    %1534 = vmatprep.subr.mxu0 0.0
    %1535 = vmatpush1.msra.mxu0 0.0
    %1536 = vmatprep.subr.mxu0 0.0
    %1537 = vmatpush1.msra.mxu0 0.0
    %1538 = vmatprep.subr.mxu0 0.0
    %1539 = vmatpush1.msra.mxu0 0.0
    %1540 = vmatprep.subr.mxu0 0.0
    %1541 = vmatpush1.msra.mxu0 0.0
    %1542 = vmatprep.subr.mxu0 0.0
    %1543 = vmatpush1.msra.mxu0 0.0
    %1544 = vmatprep.subr.mxu0 0.0
    %1545 = vmatpush1.msra.mxu0 0.0
    %1546 = vmatprep.subr.mxu0 0.0
    %1547 = vmatpush1.msra.mxu0 0.0
    %1548 = vmatprep.mubr.f32.mxu0 0.0
    %1549 = vmatmul.mubr.f32.gmra.mrb[0].mxu0 %v1478
    %v1550 = vpop.f32.mrb[0].mxu0
    %v1551 = vadd.f32 0.0, %v1550
    %v1552 = vpop.f32.mrb[0].mxu0
    %1553 = vdwg.mxu0
    %v1554 = vmul.f32 %v1551, %v1475
    %v1555 = vsel %vm1455, %v1554, 0.0
    %1556 = vadd.xlane.f32.xlu0 %v1555
    %v1557 = vpop.xlane.xlu0 %1556
    %v1558 = vmul.f32 %v1469, %v1475
    %v1559 = vsel %vm1455, %v1558, 0.0
    %1560 = vadd.xlane.f32.xlu0 %v1559
    %v1561 = vpop.xlane.xlu0 %1560
    %v1562 = vadd.f32 %v1557, %v1561
    %v1563 = vmul.f32 %v1459, %v1562
    %v1564 = vadd.f32 %v1458, %v1563
    %v1565 = vlaneseq
    %v1566 = vshrl.u32 %v1565, 7
    %v1567 = vsub.s32 0, %v1566
    %v1568 = vrot.slane %v1453, %v1567
    %1570 = vbcast.lane.b32.xlu0 %v1568, 256
    %v1571 = vpop.permute.xlu0 %1570
    %v1572 = vlaneseq
    %v1573 = vshrl.u32 %v1572, 7
    %v1574 = vsub.s32 1, %v1573
    %v1575 = vrot.slane %v1453, %v1574
    %1577 = vbcast.lane.b32.xlu0 %v1575, 256
    %v1578 = vpop.permute.xlu0 %1577
    %v1579 = vadd.f32 %v1571, %v59
    %v1580 = vadd.f32 %v1578, %v59
    %v1583 = vunpack.c.l.s4 1966171168
    %v1584 = vunpack.c.0.s8 %v1583
    %v1585 = vlaneseq
    %v1586 = vshrl.u32 %v1585, 7
    %v1587 = vsub.s32 %v1584, %v1586
    %v1588 = vrot.slane %v1469, %v1587
    %v1589 = vcombine.high %v1588, %v1588
    %v1591 = vunpack.c.l.s4 1966171168
    %v1592 = vunpack.c.0.s8 %v1591
    %v1593 = vlaneseq
    %v1594 = vshrl.u32 %v1593, 7
    %v1595 = vsub.s32 %v1592, %v1594
    %v1596 = vrot.slane %v1588, %v1595
    %v1598 = vunpack.c.l.s4 1966171168
    %v1599 = vunpack.c.0.s8 %v1598
    %v1600 = vlaneseq
    %v1601 = vshrl.u32 %v1600, 7
    %v1602 = vsub.s32 %v1599, %v1601
    %v1603 = vrot.slane %v1589, %v1602
    %v1604 = vlaneseq
    %v1605 = vshrl.u32 %v1604, 7
    %v1606 = vsub.s32 0, %v1605
    %v1607 = vrot.slane %v1596, %v1606
    %v1608 = vlaneseq
    %v1609 = vshrl.u32 %v1608, 7
    %v1610 = vsub.s32 0, %v1609
    %v1611 = vrot.slane %v1603, %v1610
    %v1614 = vadd.f32 %v1579, %v1607
    %v1615 = vadd.f32 %v1580, %v1611
    %vm1616 = vcmask 36864
    %v1617 = vsel %vm1616, %v1614, -inf
    %v1618 = vrot.slane %v1617, 4
    %v1619 = vmax.f32 %v1617, %v1618
    %v1620 = vrot.slane %v1619, 2
    %v1621 = vmax.f32 %v1619, %v1620
    %v1622 = vrot.slane %v1621, 1
    %v1623 = vmax.f32 %v1621, %v1622
    %v1624 = vsel %vm1616, %v1615, -inf
    %v1625 = vrot.slane %v1624, 4
    %v1626 = vmax.f32 %v1624, %v1625
    %v1627 = vrot.slane %v1626, 2
    %v1628 = vmax.f32 %v1626, %v1627
    %v1629 = vrot.slane %v1628, 1
    %v1630 = vmax.f32 %v1628, %v1629
    %v1631 = vsub.f32 %v1614, %v1623
    %v1632 = vsub.f32 %v1615, %v1630
    %v1633 = vmul.f32 %v1631, 1.442695
    %v1634 = vpow.pop %v1633
    %v1635 = vmul.f32 %v1632, 1.442695
    %v1636 = vpow.pop %v1635
    %v1637 = vsel %vm1616, %v1634, 0.0
    %v1638 = vrot.slane %v1637, 4
    %v1639 = vadd.f32 %v1637, %v1638
    %v1640 = vrot.slane %v1639, 2
    %v1641 = vadd.f32 %v1639, %v1640
    %v1642 = vrot.slane %v1641, 1
    %v1643 = vadd.f32 %v1641, %v1642
    %v1644 = vsel %vm1616, %v1636, 0.0
    %v1645 = vrot.slane %v1644, 4
    %v1646 = vadd.f32 %v1644, %v1645
    %v1647 = vrot.slane %v1646, 2
    %v1648 = vadd.f32 %v1646, %v1647
    %v1649 = vrot.slane %v1648, 1
    %v1650 = vadd.f32 %v1648, %v1649
    %v1651 = vlog2.pop %v1643
    %v1652 = vmul.f32 %v1651, 0.6931472
    %v1653 = vlog2.pop %v1650
    %v1654 = vmul.f32 %v1653, 0.6931472
    %v1655 = vadd.f32 %v1652, %v1623
    %v1656 = vadd.f32 %v1654, %v1630
    %vm1659 = vcmask 1041409
    %v1660 = vsel %vm1659, %v1656, %v1655
    %v1662 = vsel %vm1188, %v1660, %v1453
    %v1663 = vsel %vm1188, %v1475, %v1446
    %v1664 = vcvt.s32.f32 %v1038
    %v1666 = vrot.slane %v1426, 4
    %v1668 = vsel %vm1042, %v1666, 0.0
    %v1669 = vadd.f32 %v1437, %v1668
    %v1670 = vld [vmem:[%s2] sm:$0x3]
    %1671 = vset.pattern.permute.xlu0 2
    %1672 = vperm.xlu0 %1671, %v1670
    %v1673 = vpop.permute.xlu0 %1672
    %vm1674 = vcmp.eq.s32.totalorder %v1673, %v62
    %v1675 = vsel %vm1674, 1, 0
    %v1676 = vcvt.s32.f32 %v1675
    %v1678 = vsel %vm1476, %v1475, 0
    %1680 = vmatprep.subr.mxu0 0.0
    %1681 = vmatpush1.msra.mxu0 %v1482
    %1682 = vmatprep.subr.mxu0 0.0
    %1683 = vmatpush1.msra.mxu0 0.0
    %1684 = vmatprep.subr.mxu0 0.0
    %1685 = vmatpush1.msra.mxu0 0.0
    %1686 = vmatprep.subr.mxu0 0.0
    %1687 = vmatpush1.msra.mxu0 0.0
    %1688 = vmatprep.subr.mxu0 0.0
    %1689 = vmatpush1.msra.mxu0 0.0
    %1690 = vmatprep.subr.mxu0 0.0
    %1691 = vmatpush1.msra.mxu0 0.0
    %1692 = vmatprep.subr.mxu0 0.0
    %1693 = vmatpush1.msra.mxu0 0.0
    %1694 = vmatprep.subr.mxu0 0.0
    %1695 = vmatpush1.msra.mxu0 0.0
    %1696 = vmatprep.subr.mxu0 0.0
    %1697 = vmatpush1.msra.mxu0 0.0
    %1698 = vmatprep.subr.mxu0 0.0
    %1699 = vmatpush1.msra.mxu0 0.0
    %1700 = vmatprep.subr.mxu0 0.0
    %1701 = vmatpush1.msra.mxu0 0.0
    %1702 = vmatprep.subr.mxu0 0.0
    %1703 = vmatpush1.msra.mxu0 0.0
    %1704 = vmatprep.subr.mxu0 0.0
    %1705 = vmatpush1.msra.mxu0 0.0
    %1706 = vmatprep.subr.mxu0 0.0
    %1707 = vmatpush1.msra.mxu0 0.0
    %1708 = vmatprep.subr.mxu0 0.0
    %1709 = vmatpush1.msra.mxu0 0.0
    %1710 = vmatprep.subr.mxu0 0.0
    %1711 = vmatpush1.msra.mxu0 0.0
    %1712 = vmatprep.subr.mxu0 0.0
    %1713 = vmatpush1.msra.mxu0 0.0
    %1714 = vmatprep.subr.mxu0 0.0
    %1715 = vmatpush1.msra.mxu0 0.0
    %1716 = vmatprep.subr.mxu0 0.0
    %1717 = vmatpush1.msra.mxu0 0.0
    %1718 = vmatprep.subr.mxu0 0.0
    %1719 = vmatpush1.msra.mxu0 0.0
    %1720 = vmatprep.subr.mxu0 0.0
    %1721 = vmatpush1.msra.mxu0 0.0
    %1722 = vmatprep.subr.mxu0 0.0
    %1723 = vmatpush1.msra.mxu0 0.0
    %1724 = vmatprep.subr.mxu0 0.0
    %1725 = vmatpush1.msra.mxu0 0.0
    %1726 = vmatprep.subr.mxu0 0.0
    %1727 = vmatpush1.msra.mxu0 0.0
    %1728 = vmatprep.subr.mxu0 0.0
    %1729 = vmatpush1.msra.mxu0 0.0
    %1730 = vmatprep.subr.mxu0 0.0
    %1731 = vmatpush1.msra.mxu0 0.0
    %1732 = vmatprep.subr.mxu0 0.0
    %1733 = vmatpush1.msra.mxu0 0.0
    %1734 = vmatprep.subr.mxu0 0.0
    %1735 = vmatpush1.msra.mxu0 0.0
    %1736 = vmatprep.subr.mxu0 0.0
    %1737 = vmatpush1.msra.mxu0 0.0
    %1738 = vmatprep.subr.mxu0 0.0
    %1739 = vmatpush1.msra.mxu0 0.0
    %1740 = vmatprep.subr.mxu0 0.0
    %1741 = vmatpush1.msra.mxu0 0.0
    %1742 = vmatprep.subr.mxu0 0.0
    %1743 = vmatpush1.msra.mxu0 0.0
    %1744 = vmatprep.mubr.f32.mxu0 0.0
    %1745 = vmatmul.mubr.f32.gmra.mrb[0].mxu0 %v1678
    %v1746 = vpop.f32.mrb[0].mxu0
    %v1747 = vadd.f32 0.0, %v1746
    %v1748 = vpop.f32.mrb[0].mxu0
    %1749 = vdwg.mxu0
    %v1750 = vmul.f32 %v1747, %v1676
    %v1751 = vsel %vm1455, %v1750, 0.0
    %1752 = vadd.xlane.f32.xlu0 %v1751
    %v1753 = vpop.xlane.xlu0 %1752
    %v1754 = vmul.f32 %v1669, %v1676
    %v1755 = vsel %vm1455, %v1754, 0.0
    %1756 = vadd.xlane.f32.xlu0 %v1755
    %v1757 = vpop.xlane.xlu0 %1756
    %v1758 = vadd.f32 %v1753, %v1757
    %v1759 = vmul.f32 %v1664, %v1758
    %v1760 = vadd.f32 %v1564, %v1759
    %v1761 = vlaneseq
    %v1762 = vshrl.u32 %v1761, 7
    %v1763 = vsub.s32 0, %v1762
    %v1764 = vrot.slane %v1662, %v1763
    %1766 = vbcast.lane.b32.xlu0 %v1764, 256
    %v1767 = vpop.permute.xlu0 %1766
    %v1768 = vlaneseq
    %v1769 = vshrl.u32 %v1768, 7
    %v1770 = vsub.s32 1, %v1769
    %v1771 = vrot.slane %v1662, %v1770
    %1773 = vbcast.lane.b32.xlu0 %v1771, 256
    %v1774 = vpop.permute.xlu0 %1773
    %v1775 = vadd.f32 %v1767, %v59
    %v1776 = vadd.f32 %v1774, %v59
    %v1779 = vunpack.c.l.s4 1966171168
    %v1780 = vunpack.c.0.s8 %v1779
    %v1781 = vlaneseq
    %v1782 = vshrl.u32 %v1781, 7
    %v1783 = vsub.s32 %v1780, %v1782
    %v1784 = vrot.slane %v1669, %v1783
    %v1785 = vcombine.high %v1784, %v1784
    %v1787 = vunpack.c.l.s4 1966171168
    %v1788 = vunpack.c.0.s8 %v1787
    %v1789 = vlaneseq
    %v1790 = vshrl.u32 %v1789, 7
    %v1791 = vsub.s32 %v1788, %v1790
    %v1792 = vrot.slane %v1784, %v1791
    %v1794 = vunpack.c.l.s4 1966171168
    %v1795 = vunpack.c.0.s8 %v1794
    %v1796 = vlaneseq
    %v1797 = vshrl.u32 %v1796, 7
    %v1798 = vsub.s32 %v1795, %v1797
    %v1799 = vrot.slane %v1785, %v1798
    %v1800 = vlaneseq
    %v1801 = vshrl.u32 %v1800, 7
    %v1802 = vsub.s32 0, %v1801
    %v1803 = vrot.slane %v1792, %v1802
    %v1804 = vlaneseq
    %v1805 = vshrl.u32 %v1804, 7
    %v1806 = vsub.s32 0, %v1805
    %v1807 = vrot.slane %v1799, %v1806
    %v1810 = vadd.f32 %v1775, %v1803
    %v1811 = vadd.f32 %v1776, %v1807
    %v1812 = vsel %vm1616, %v1810, -inf
    %v1813 = vrot.slane %v1812, 4
    %v1814 = vmax.f32 %v1812, %v1813
    %v1815 = vrot.slane %v1814, 2
    %v1816 = vmax.f32 %v1814, %v1815
    %v1817 = vrot.slane %v1816, 1
    %v1818 = vmax.f32 %v1816, %v1817
    %v1819 = vsel %vm1616, %v1811, -inf
    %v1820 = vrot.slane %v1819, 4
    %v1821 = vmax.f32 %v1819, %v1820
    %v1822 = vrot.slane %v1821, 2
    %v1823 = vmax.f32 %v1821, %v1822
    %v1824 = vrot.slane %v1823, 1
    %v1825 = vmax.f32 %v1823, %v1824
    %v1826 = vsub.f32 %v1810, %v1818
    %v1827 = vsub.f32 %v1811, %v1825
    %v1828 = vmul.f32 %v1826, 1.442695
    %v1829 = vpow.pop %v1828
    %v1830 = vmul.f32 %v1827, 1.442695
    %v1831 = vpow.pop %v1830
    %v1832 = vsel %vm1616, %v1829, 0.0
    %v1833 = vrot.slane %v1832, 4
    %v1834 = vadd.f32 %v1832, %v1833
    %v1835 = vrot.slane %v1834, 2
    %v1836 = vadd.f32 %v1834, %v1835
    %v1837 = vrot.slane %v1836, 1
    %v1838 = vadd.f32 %v1836, %v1837
    %v1839 = vsel %vm1616, %v1831, 0.0
    %v1840 = vrot.slane %v1839, 4
    %v1841 = vadd.f32 %v1839, %v1840
    %v1842 = vrot.slane %v1841, 2
    %v1843 = vadd.f32 %v1841, %v1842
    %v1844 = vrot.slane %v1843, 1
    %v1845 = vadd.f32 %v1843, %v1844
    %v1846 = vlog2.pop %v1838
    %v1847 = vmul.f32 %v1846, 0.6931472
    %v1848 = vlog2.pop %v1845
    %v1849 = vmul.f32 %v1848, 0.6931472
    %v1850 = vadd.f32 %v1847, %v1818
    %v1851 = vadd.f32 %v1849, %v1825
    %v1854 = vsel %vm1659, %v1851, %v1850
    %v1856 = vsel %vm1042, %v1854, %v1662
    %v1857 = vsel %vm1042, %v1676, %v1663
    %v1858 = vcvt.s32.f32 %v897
    %v1859 = vrot.slane %v1464, 6
    %v1861 = vsel %vm901, %v1859, 0.0
    %v1862 = vadd.f32 %v1437, %v1861
    %v1863 = vld [vmem:[%s2] sm:$0x3]
    %1864 = vset.pattern.permute.xlu0 3
    %1865 = vperm.xlu0 %1864, %v1863
    %v1866 = vpop.permute.xlu0 %1865
    %vm1867 = vcmp.eq.s32.totalorder %v1866, %v62
    %v1868 = vsel %vm1867, 1, 0
    %v1869 = vcvt.s32.f32 %v1868
    %v1871 = vsel %vm1476, %v1676, 0
    %1873 = vmatprep.subr.mxu0 0.0
    %1874 = vmatpush1.msra.mxu0 %v1482
    %1875 = vmatprep.subr.mxu0 0.0
    %1876 = vmatpush1.msra.mxu0 0.0
    %1877 = vmatprep.subr.mxu0 0.0
    %1878 = vmatpush1.msra.mxu0 0.0
    %1879 = vmatprep.subr.mxu0 0.0
    %1880 = vmatpush1.msra.mxu0 0.0
    %1881 = vmatprep.subr.mxu0 0.0
    %1882 = vmatpush1.msra.mxu0 0.0
    %1883 = vmatprep.subr.mxu0 0.0
    %1884 = vmatpush1.msra.mxu0 0.0
    %1885 = vmatprep.subr.mxu0 0.0
    %1886 = vmatpush1.msra.mxu0 0.0
    %1887 = vmatprep.subr.mxu0 0.0
    %1888 = vmatpush1.msra.mxu0 0.0
    %1889 = vmatprep.subr.mxu0 0.0
    %1890 = vmatpush1.msra.mxu0 0.0
    %1891 = vmatprep.subr.mxu0 0.0
    %1892 = vmatpush1.msra.mxu0 0.0
    %1893 = vmatprep.subr.mxu0 0.0
    %1894 = vmatpush1.msra.mxu0 0.0
    %1895 = vmatprep.subr.mxu0 0.0
    %1896 = vmatpush1.msra.mxu0 0.0
    %1897 = vmatprep.subr.mxu0 0.0
    %1898 = vmatpush1.msra.mxu0 0.0
    %1899 = vmatprep.subr.mxu0 0.0
    %1900 = vmatpush1.msra.mxu0 0.0
    %1901 = vmatprep.subr.mxu0 0.0
    %1902 = vmatpush1.msra.mxu0 0.0
    %1903 = vmatprep.subr.mxu0 0.0
    %1904 = vmatpush1.msra.mxu0 0.0
    %1905 = vmatprep.subr.mxu0 0.0
    %1906 = vmatpush1.msra.mxu0 0.0
    %1907 = vmatprep.subr.mxu0 0.0
    %1908 = vmatpush1.msra.mxu0 0.0
    %1909 = vmatprep.subr.mxu0 0.0
    %1910 = vmatpush1.msra.mxu0 0.0
    %1911 = vmatprep.subr.mxu0 0.0
    %1912 = vmatpush1.msra.mxu0 0.0
    %1913 = vmatprep.subr.mxu0 0.0
    %1914 = vmatpush1.msra.mxu0 0.0
    %1915 = vmatprep.subr.mxu0 0.0
    %1916 = vmatpush1.msra.mxu0 0.0
    %1917 = vmatprep.subr.mxu0 0.0
    %1918 = vmatpush1.msra.mxu0 0.0
    %1919 = vmatprep.subr.mxu0 0.0
    %1920 = vmatpush1.msra.mxu0 0.0
    %1921 = vmatprep.subr.mxu0 0.0
    %1922 = vmatpush1.msra.mxu0 0.0
    %1923 = vmatprep.subr.mxu0 0.0
    %1924 = vmatpush1.msra.mxu0 0.0
    %1925 = vmatprep.subr.mxu0 0.0
    %1926 = vmatpush1.msra.mxu0 0.0
    %1927 = vmatprep.subr.mxu0 0.0
    %1928 = vmatpush1.msra.mxu0 0.0
    %1929 = vmatprep.subr.mxu0 0.0
    %1930 = vmatpush1.msra.mxu0 0.0
    %1931 = vmatprep.subr.mxu0 0.0
    %1932 = vmatpush1.msra.mxu0 0.0
    %1933 = vmatprep.subr.mxu0 0.0
    %1934 = vmatpush1.msra.mxu0 0.0
    %1935 = vmatprep.subr.mxu0 0.0
    %1936 = vmatpush1.msra.mxu0 0.0
    %1937 = vmatprep.mubr.f32.mxu0 0.0
    %1938 = vmatmul.mubr.f32.gmra.mrb[0].mxu0 %v1871
    %v1939 = vpop.f32.mrb[0].mxu0
    %v1940 = vadd.f32 0.0, %v1939
    %v1941 = vpop.f32.mrb[0].mxu0
    %1942 = vdwg.mxu0
    %v1943 = vmul.f32 %v1940, %v1869
    %v1944 = vsel %vm1455, %v1943, 0.0
    %1945 = vadd.xlane.f32.xlu0 %v1944
    %v1946 = vpop.xlane.xlu0 %1945
    %v1947 = vmul.f32 %v1862, %v1869
    %v1948 = vsel %vm1455, %v1947, 0.0
    %1949 = vadd.xlane.f32.xlu0 %v1948
    %v1950 = vpop.xlane.xlu0 %1949
    %v1951 = vadd.f32 %v1946, %v1950
    %v1952 = vmul.f32 %v1858, %v1951
    %v1953 = vadd.f32 %v1760, %v1952
    %v1954 = vlaneseq
    %v1955 = vshrl.u32 %v1954, 7
    %v1956 = vsub.s32 0, %v1955
    %v1957 = vrot.slane %v1856, %v1956
    %1959 = vbcast.lane.b32.xlu0 %v1957, 256
    %v1960 = vpop.permute.xlu0 %1959
    %v1961 = vlaneseq
    %v1962 = vshrl.u32 %v1961, 7
    %v1963 = vsub.s32 1, %v1962
    %v1964 = vrot.slane %v1856, %v1963
    %1966 = vbcast.lane.b32.xlu0 %v1964, 256
    %v1967 = vpop.permute.xlu0 %1966
    %v1968 = vadd.f32 %v1960, %v59
    %v1969 = vadd.f32 %v1967, %v59
    %v1972 = vunpack.c.l.s4 1966171168
    %v1973 = vunpack.c.0.s8 %v1972
    %v1974 = vlaneseq
    %v1975 = vshrl.u32 %v1974, 7
    %v1976 = vsub.s32 %v1973, %v1975
    %v1977 = vrot.slane %v1862, %v1976
    %v1978 = vcombine.high %v1977, %v1977
    %v1980 = vunpack.c.l.s4 1966171168
    %v1981 = vunpack.c.0.s8 %v1980
    %v1982 = vlaneseq
    %v1983 = vshrl.u32 %v1982, 7
    %v1984 = vsub.s32 %v1981, %v1983
    %v1985 = vrot.slane %v1977, %v1984
    %v1987 = vunpack.c.l.s4 1966171168
    %v1988 = vunpack.c.0.s8 %v1987
    %v1989 = vlaneseq
    %v1990 = vshrl.u32 %v1989, 7
    %v1991 = vsub.s32 %v1988, %v1990
    %v1992 = vrot.slane %v1978, %v1991
    %v1993 = vlaneseq
    %v1994 = vshrl.u32 %v1993, 7
    %v1995 = vsub.s32 0, %v1994
    %v1996 = vrot.slane %v1985, %v1995
    %v1997 = vlaneseq
    %v1998 = vshrl.u32 %v1997, 7
    %v1999 = vsub.s32 0, %v1998
    %v2000 = vrot.slane %v1992, %v1999
    %v2003 = vadd.f32 %v1968, %v1996
    %v2004 = vadd.f32 %v1969, %v2000
    %v2005 = vsel %vm1616, %v2003, -inf
    %v2006 = vrot.slane %v2005, 4
    %v2007 = vmax.f32 %v2005, %v2006
    %v2008 = vrot.slane %v2007, 2
    %v2009 = vmax.f32 %v2007, %v2008
    %v2010 = vrot.slane %v2009, 1
    %v2011 = vmax.f32 %v2009, %v2010
    %v2012 = vsel %vm1616, %v2004, -inf
    %v2013 = vrot.slane %v2012, 4
    %v2014 = vmax.f32 %v2012, %v2013
    %v2015 = vrot.slane %v2014, 2
    %v2016 = vmax.f32 %v2014, %v2015
    %v2017 = vrot.slane %v2016, 1
    %v2018 = vmax.f32 %v2016, %v2017
    %v2019 = vsub.f32 %v2003, %v2011
    %v2020 = vsub.f32 %v2004, %v2018
    %v2021 = vmul.f32 %v2019, 1.442695
    %v2022 = vpow.pop %v2021
    %v2023 = vmul.f32 %v2020, 1.442695
    %v2024 = vpow.pop %v2023
    %v2025 = vsel %vm1616, %v2022, 0.0
    %v2026 = vrot.slane %v2025, 4
    %v2027 = vadd.f32 %v2025, %v2026
    %v2028 = vrot.slane %v2027, 2
    %v2029 = vadd.f32 %v2027, %v2028
    %v2030 = vrot.slane %v2029, 1
    %v2031 = vadd.f32 %v2029, %v2030
    %v2032 = vsel %vm1616, %v2024, 0.0
    %v2033 = vrot.slane %v2032, 4
    %v2034 = vadd.f32 %v2032, %v2033
    %v2035 = vrot.slane %v2034, 2
    %v2036 = vadd.f32 %v2034, %v2035
    %v2037 = vrot.slane %v2036, 1
    %v2038 = vadd.f32 %v2036, %v2037
    %v2039 = vlog2.pop %v2031
    %v2040 = vmul.f32 %v2039, 0.6931472
    %v2041 = vlog2.pop %v2038
    %v2042 = vmul.f32 %v2041, 0.6931472
    %v2043 = vadd.f32 %v2040, %v2011
    %v2044 = vadd.f32 %v2042, %v2018
    %v2047 = vsel %vm1659, %v2044, %v2043
    %v2049 = vsel %vm901, %v2047, %v1856
    %v2050 = vsel %vm901, %v1869, %v1857
    %v2051 = vcvt.s32.f32 %v758
    %v2053 = vrot.slane %v1412, 6
    %2054 = vrot.lane.b32.xlu0 %v2053, 123
    %v2055 = vpop.permute.xlu0 %2054
    %v2057 = vadd.f32 %v1417, %v2055
    %v2058 = vsel %vm762, %v2057, 0.0
    %v2059 = vadd.f32 %v1437, %v2058
    %v2060 = vld [vmem:[%s2] sm:$0x3]
    %2061 = vset.pattern.permute.xlu0 4
    %2062 = vperm.xlu0 %2061, %v2060
    %v2063 = vpop.permute.xlu0 %2062
    %vm2064 = vcmp.eq.s32.totalorder %v2063, %v62
    %v2065 = vsel %vm2064, 1, 0
    %v2066 = vcvt.s32.f32 %v2065
    %v2068 = vsel %vm1476, %v1869, 0
    %2070 = vmatprep.subr.mxu0 0.0
    %2071 = vmatpush1.msra.mxu0 %v1482
    %2072 = vmatprep.subr.mxu0 0.0
    %2073 = vmatpush1.msra.mxu0 0.0
    %2074 = vmatprep.subr.mxu0 0.0
    %2075 = vmatpush1.msra.mxu0 0.0
    %2076 = vmatprep.subr.mxu0 0.0
    %2077 = vmatpush1.msra.mxu0 0.0
    %2078 = vmatprep.subr.mxu0 0.0
    %2079 = vmatpush1.msra.mxu0 0.0
    %2080 = vmatprep.subr.mxu0 0.0
    %2081 = vmatpush1.msra.mxu0 0.0
    %2082 = vmatprep.subr.mxu0 0.0
    %2083 = vmatpush1.msra.mxu0 0.0
    %2084 = vmatprep.subr.mxu0 0.0
    %2085 = vmatpush1.msra.mxu0 0.0
    %2086 = vmatprep.subr.mxu0 0.0
    %2087 = vmatpush1.msra.mxu0 0.0
    %2088 = vmatprep.subr.mxu0 0.0
    %2089 = vmatpush1.msra.mxu0 0.0
    %2090 = vmatprep.subr.mxu0 0.0
    %2091 = vmatpush1.msra.mxu0 0.0
    %2092 = vmatprep.subr.mxu0 0.0
    %2093 = vmatpush1.msra.mxu0 0.0
    %2094 = vmatprep.subr.mxu0 0.0
    %2095 = vmatpush1.msra.mxu0 0.0
    %2096 = vmatprep.subr.mxu0 0.0
    %2097 = vmatpush1.msra.mxu0 0.0
    %2098 = vmatprep.subr.mxu0 0.0
    %2099 = vmatpush1.msra.mxu0 0.0
    %2100 = vmatprep.subr.mxu0 0.0
    %2101 = vmatpush1.msra.mxu0 0.0
    %2102 = vmatprep.subr.mxu0 0.0
    %2103 = vmatpush1.msra.mxu0 0.0
    %2104 = vmatprep.subr.mxu0 0.0
    %2105 = vmatpush1.msra.mxu0 0.0
    %2106 = vmatprep.subr.mxu0 0.0
    %2107 = vmatpush1.msra.mxu0 0.0
    %2108 = vmatprep.subr.mxu0 0.0
    %2109 = vmatpush1.msra.mxu0 0.0
    %2110 = vmatprep.subr.mxu0 0.0
    %2111 = vmatpush1.msra.mxu0 0.0
    %2112 = vmatprep.subr.mxu0 0.0
    %2113 = vmatpush1.msra.mxu0 0.0
    %2114 = vmatprep.subr.mxu0 0.0
    %2115 = vmatpush1.msra.mxu0 0.0
    %2116 = vmatprep.subr.mxu0 0.0
    %2117 = vmatpush1.msra.mxu0 0.0
    %2118 = vmatprep.subr.mxu0 0.0
    %2119 = vmatpush1.msra.mxu0 0.0
    %2120 = vmatprep.subr.mxu0 0.0
    %2121 = vmatpush1.msra.mxu0 0.0
    %2122 = vmatprep.subr.mxu0 0.0
    %2123 = vmatpush1.msra.mxu0 0.0
    %2124 = vmatprep.subr.mxu0 0.0
    %2125 = vmatpush1.msra.mxu0 0.0
    %2126 = vmatprep.subr.mxu0 0.0
    %2127 = vmatpush1.msra.mxu0 0.0
    %2128 = vmatprep.subr.mxu0 0.0
    %2129 = vmatpush1.msra.mxu0 0.0
    %2130 = vmatprep.subr.mxu0 0.0
    %2131 = vmatpush1.msra.mxu0 0.0
    %2132 = vmatprep.subr.mxu0 0.0
    %2133 = vmatpush1.msra.mxu0 0.0
    %2134 = vmatprep.mubr.f32.mxu0 0.0
    %2135 = vmatmul.mubr.f32.gmra.mrb[0].mxu0 %v2068
    %v2136 = vpop.f32.mrb[0].mxu0
    %v2137 = vadd.f32 0.0, %v2136
    %v2138 = vpop.f32.mrb[0].mxu0
    %2139 = vdwg.mxu0
    %v2140 = vmul.f32 %v2137, %v2066
    %v2141 = vsel %vm1455, %v2140, 0.0
    %2142 = vadd.xlane.f32.xlu0 %v2141
    %v2143 = vpop.xlane.xlu0 %2142
    %v2144 = vmul.f32 %v2059, %v2066
    %v2145 = vsel %vm1455, %v2144, 0.0
    %2146 = vadd.xlane.f32.xlu0 %v2145
    %v2147 = vpop.xlane.xlu0 %2146
    %v2148 = vadd.f32 %v2143, %v2147
    %v2149 = vmul.f32 %v2051, %v2148
    %v2150 = vadd.f32 %v1953, %v2149
    %v2151 = vlaneseq
    %v2152 = vshrl.u32 %v2151, 7
    %v2153 = vsub.s32 0, %v2152
    %v2154 = vrot.slane %v2049, %v2153
    %2156 = vbcast.lane.b32.xlu0 %v2154, 256
    %v2157 = vpop.permute.xlu0 %2156
    %v2158 = vlaneseq
    %v2159 = vshrl.u32 %v2158, 7
    %v2160 = vsub.s32 1, %v2159
    %v2161 = vrot.slane %v2049, %v2160
    %2163 = vbcast.lane.b32.xlu0 %v2161, 256
    %v2164 = vpop.permute.xlu0 %2163
    %v2165 = vadd.f32 %v2157, %v59
    %v2166 = vadd.f32 %v2164, %v59
    %v2169 = vunpack.c.l.s4 1966171168
    %v2170 = vunpack.c.0.s8 %v2169
    %v2171 = vlaneseq
    %v2172 = vshrl.u32 %v2171, 7
    %v2173 = vsub.s32 %v2170, %v2172
    %v2174 = vrot.slane %v2059, %v2173
    %v2175 = vcombine.high %v2174, %v2174
    %v2177 = vunpack.c.l.s4 1966171168
    %v2178 = vunpack.c.0.s8 %v2177
    %v2179 = vlaneseq
    %v2180 = vshrl.u32 %v2179, 7
    %v2181 = vsub.s32 %v2178, %v2180
    %v2182 = vrot.slane %v2174, %v2181
    %v2184 = vunpack.c.l.s4 1966171168
    %v2185 = vunpack.c.0.s8 %v2184
    %v2186 = vlaneseq
    %v2187 = vshrl.u32 %v2186, 7
    %v2188 = vsub.s32 %v2185, %v2187
    %v2189 = vrot.slane %v2175, %v2188
    %v2190 = vlaneseq
    %v2191 = vshrl.u32 %v2190, 7
    %v2192 = vsub.s32 0, %v2191
    %v2193 = vrot.slane %v2182, %v2192
    %v2194 = vlaneseq
    %v2195 = vshrl.u32 %v2194, 7
    %v2196 = vsub.s32 0, %v2195
    %v2197 = vrot.slane %v2189, %v2196
    %v2200 = vadd.f32 %v2165, %v2193
    %v2201 = vadd.f32 %v2166, %v2197
    %v2202 = vsel %vm1616, %v2200, -inf
    %v2203 = vrot.slane %v2202, 4
    %v2204 = vmax.f32 %v2202, %v2203
    %v2205 = vrot.slane %v2204, 2
    %v2206 = vmax.f32 %v2204, %v2205
    %v2207 = vrot.slane %v2206, 1
    %v2208 = vmax.f32 %v2206, %v2207
    %v2209 = vsel %vm1616, %v2201, -inf
    %v2210 = vrot.slane %v2209, 4
    %v2211 = vmax.f32 %v2209, %v2210
    %v2212 = vrot.slane %v2211, 2
    %v2213 = vmax.f32 %v2211, %v2212
    %v2214 = vrot.slane %v2213, 1
    %v2215 = vmax.f32 %v2213, %v2214
    %v2216 = vsub.f32 %v2200, %v2208
    %v2217 = vsub.f32 %v2201, %v2215
    %v2218 = vmul.f32 %v2216, 1.442695
    %v2219 = vpow.pop %v2218
    %v2220 = vmul.f32 %v2217, 1.442695
    %v2221 = vpow.pop %v2220
    %v2222 = vsel %vm1616, %v2219, 0.0
    %v2223 = vrot.slane %v2222, 4
    %v2224 = vadd.f32 %v2222, %v2223
    %v2225 = vrot.slane %v2224, 2
    %v2226 = vadd.f32 %v2224, %v2225
    %v2227 = vrot.slane %v2226, 1
    %v2228 = vadd.f32 %v2226, %v2227
    %v2229 = vsel %vm1616, %v2221, 0.0
    %v2230 = vrot.slane %v2229, 4
    %v2231 = vadd.f32 %v2229, %v2230
    %v2232 = vrot.slane %v2231, 2
    %v2233 = vadd.f32 %v2231, %v2232
    %v2234 = vrot.slane %v2233, 1
    %v2235 = vadd.f32 %v2233, %v2234
    %v2236 = vlog2.pop %v2228
    %v2237 = vmul.f32 %v2236, 0.6931472
    %v2238 = vlog2.pop %v2235
    %v2239 = vmul.f32 %v2238, 0.6931472
    %v2240 = vadd.f32 %v2237, %v2208
    %v2241 = vadd.f32 %v2239, %v2215
    %v2244 = vsel %vm1659, %v2241, %v2240
    %v2246 = vsel %vm762, %v2244, %v2049
    %v2247 = vsel %vm762, %v2066, %v2050
    %v2248 = vcvt.s32.f32 %v611
    %v2249 = vrot.slane %v1412, 2
    %2250 = vrot.lane.b32.xlu0 %v2249, 123
    %v2251 = vpop.permute.xlu0 %2250
    %v2253 = vadd.f32 %v1417, %v2251
    %v2255 = vrot.slane %v2253, 2
    %v2257 = vsel %vm615, %v2255, 0.0
    %v2258 = vadd.f32 %v1437, %v2257
    %v2259 = vld [vmem:[%s2] sm:$0x3]
    %2260 = vset.pattern.permute.xlu0 5
    %2261 = vperm.xlu0 %2260, %v2259
    %v2262 = vpop.permute.xlu0 %2261
    %vm2263 = vcmp.eq.s32.totalorder %v2262, %v62
    %v2264 = vsel %vm2263, 1, 0
    %v2265 = vcvt.s32.f32 %v2264
    %v2267 = vsel %vm1476, %v2066, 0
    %2269 = vmatprep.subr.mxu0 0.0
    %2270 = vmatpush1.msra.mxu0 %v1482
    %2271 = vmatprep.subr.mxu0 0.0
    %2272 = vmatpush1.msra.mxu0 0.0
    %2273 = vmatprep.subr.mxu0 0.0
    %2274 = vmatpush1.msra.mxu0 0.0
    %2275 = vmatprep.subr.mxu0 0.0
    %2276 = vmatpush1.msra.mxu0 0.0
    %2277 = vmatprep.subr.mxu0 0.0
    %2278 = vmatpush1.msra.mxu0 0.0
    %2279 = vmatprep.subr.mxu0 0.0
    %2280 = vmatpush1.msra.mxu0 0.0
    %2281 = vmatprep.subr.mxu0 0.0
    %2282 = vmatpush1.msra.mxu0 0.0
    %2283 = vmatprep.subr.mxu0 0.0
    %2284 = vmatpush1.msra.mxu0 0.0
    %2285 = vmatprep.subr.mxu0 0.0
    %2286 = vmatpush1.msra.mxu0 0.0
    %2287 = vmatprep.subr.mxu0 0.0
    %2288 = vmatpush1.msra.mxu0 0.0
    %2289 = vmatprep.subr.mxu0 0.0
    %2290 = vmatpush1.msra.mxu0 0.0
    %2291 = vmatprep.subr.mxu0 0.0
    %2292 = vmatpush1.msra.mxu0 0.0
    %2293 = vmatprep.subr.mxu0 0.0
    %2294 = vmatpush1.msra.mxu0 0.0
    %2295 = vmatprep.subr.mxu0 0.0
    %2296 = vmatpush1.msra.mxu0 0.0
    %2297 = vmatprep.subr.mxu0 0.0
    %2298 = vmatpush1.msra.mxu0 0.0
    %2299 = vmatprep.subr.mxu0 0.0
    %2300 = vmatpush1.msra.mxu0 0.0
    %2301 = vmatprep.subr.mxu0 0.0
    %2302 = vmatpush1.msra.mxu0 0.0
    %2303 = vmatprep.subr.mxu0 0.0
    %2304 = vmatpush1.msra.mxu0 0.0
    %2305 = vmatprep.subr.mxu0 0.0
    %2306 = vmatpush1.msra.mxu0 0.0
    %2307 = vmatprep.subr.mxu0 0.0
    %2308 = vmatpush1.msra.mxu0 0.0
    %2309 = vmatprep.subr.mxu0 0.0
    %2310 = vmatpush1.msra.mxu0 0.0
    %2311 = vmatprep.subr.mxu0 0.0
    %2312 = vmatpush1.msra.mxu0 0.0
    %2313 = vmatprep.subr.mxu0 0.0
    %2314 = vmatpush1.msra.mxu0 0.0
    %2315 = vmatprep.subr.mxu0 0.0
    %2316 = vmatpush1.msra.mxu0 0.0
    %2317 = vmatprep.subr.mxu0 0.0
    %2318 = vmatpush1.msra.mxu0 0.0
    %2319 = vmatprep.subr.mxu0 0.0
    %2320 = vmatpush1.msra.mxu0 0.0
    %2321 = vmatprep.subr.mxu0 0.0
    %2322 = vmatpush1.msra.mxu0 0.0
    %2323 = vmatprep.subr.mxu0 0.0
    %2324 = vmatpush1.msra.mxu0 0.0
    %2325 = vmatprep.subr.mxu0 0.0
    %2326 = vmatpush1.msra.mxu0 0.0
    %2327 = vmatprep.subr.mxu0 0.0
    %2328 = vmatpush1.msra.mxu0 0.0
    %2329 = vmatprep.subr.mxu0 0.0
    %2330 = vmatpush1.msra.mxu0 0.0
    %2331 = vmatprep.subr.mxu0 0.0
    %2332 = vmatpush1.msra.mxu0 0.0
    %2333 = vmatprep.mubr.f32.mxu0 0.0
    %2334 = vmatmul.mubr.f32.gmra.mrb[0].mxu0 %v2267
    %v2335 = vpop.f32.mrb[0].mxu0
    %v2336 = vadd.f32 0.0, %v2335
    %v2337 = vpop.f32.mrb[0].mxu0
    %2338 = vdwg.mxu0
    %v2339 = vmul.f32 %v2336, %v2265
    %v2340 = vsel %vm1455, %v2339, 0.0
    %2341 = vadd.xlane.f32.xlu0 %v2340
    %v2342 = vpop.xlane.xlu0 %2341
    %v2343 = vmul.f32 %v2258, %v2265
    %v2344 = vsel %vm1455, %v2343, 0.0
    %2345 = vadd.xlane.f32.xlu0 %v2344
    %v2346 = vpop.xlane.xlu0 %2345
    %v2347 = vadd.f32 %v2342, %v2346
    %v2348 = vmul.f32 %v2248, %v2347
    %v2349 = vadd.f32 %v2150, %v2348
    %v2350 = vlaneseq
    %v2351 = vshrl.u32 %v2350, 7
    %v2352 = vsub.s32 0, %v2351
    %v2353 = vrot.slane %v2246, %v2352
    %2355 = vbcast.lane.b32.xlu0 %v2353, 256
    %v2356 = vpop.permute.xlu0 %2355
    %v2357 = vlaneseq
    %v2358 = vshrl.u32 %v2357, 7
    %v2359 = vsub.s32 1, %v2358
    %v2360 = vrot.slane %v2246, %v2359
    %2362 = vbcast.lane.b32.xlu0 %v2360, 256
    %v2363 = vpop.permute.xlu0 %2362
    %v2364 = vadd.f32 %v2356, %v59
    %v2365 = vadd.f32 %v2363, %v59
    %v2368 = vunpack.c.l.s4 1966171168
    %v2369 = vunpack.c.0.s8 %v2368
    %v2370 = vlaneseq
    %v2371 = vshrl.u32 %v2370, 7
    %v2372 = vsub.s32 %v2369, %v2371
    %v2373 = vrot.slane %v2258, %v2372
    %v2374 = vcombine.high %v2373, %v2373
    %v2376 = vunpack.c.l.s4 1966171168
    %v2377 = vunpack.c.0.s8 %v2376
    %v2378 = vlaneseq
    %v2379 = vshrl.u32 %v2378, 7
    %v2380 = vsub.s32 %v2377, %v2379
    %v2381 = vrot.slane %v2373, %v2380
    %v2383 = vunpack.c.l.s4 1966171168
    %v2384 = vunpack.c.0.s8 %v2383
    %v2385 = vlaneseq
    %v2386 = vshrl.u32 %v2385, 7
    %v2387 = vsub.s32 %v2384, %v2386
    %v2388 = vrot.slane %v2374, %v2387
    %v2389 = vlaneseq
    %v2390 = vshrl.u32 %v2389, 7
    %v2391 = vsub.s32 0, %v2390
    %v2392 = vrot.slane %v2381, %v2391
    %v2393 = vlaneseq
    %v2394 = vshrl.u32 %v2393, 7
    %v2395 = vsub.s32 0, %v2394
    %v2396 = vrot.slane %v2388, %v2395
    %v2399 = vadd.f32 %v2364, %v2392
    %v2400 = vadd.f32 %v2365, %v2396
    %v2401 = vsel %vm1616, %v2399, -inf
    %v2402 = vrot.slane %v2401, 4
    %v2403 = vmax.f32 %v2401, %v2402
    %v2404 = vrot.slane %v2403, 2
    %v2405 = vmax.f32 %v2403, %v2404
    %v2406 = vrot.slane %v2405, 1
    %v2407 = vmax.f32 %v2405, %v2406
    %v2408 = vsel %vm1616, %v2400, -inf
    %v2409 = vrot.slane %v2408, 4
    %v2410 = vmax.f32 %v2408, %v2409
    %v2411 = vrot.slane %v2410, 2
    %v2412 = vmax.f32 %v2410, %v2411
    %v2413 = vrot.slane %v2412, 1
    %v2414 = vmax.f32 %v2412, %v2413
    %v2415 = vsub.f32 %v2399, %v2407
    %v2416 = vsub.f32 %v2400, %v2414
    %v2417 = vmul.f32 %v2415, 1.442695
    %v2418 = vpow.pop %v2417
    %v2419 = vmul.f32 %v2416, 1.442695
    %v2420 = vpow.pop %v2419
    %v2421 = vsel %vm1616, %v2418, 0.0
    %v2422 = vrot.slane %v2421, 4
    %v2423 = vadd.f32 %v2421, %v2422
    %v2424 = vrot.slane %v2423, 2
    %v2425 = vadd.f32 %v2423, %v2424
    %v2426 = vrot.slane %v2425, 1
    %v2427 = vadd.f32 %v2425, %v2426
    %v2428 = vsel %vm1616, %v2420, 0.0
    %v2429 = vrot.slane %v2428, 4
    %v2430 = vadd.f32 %v2428, %v2429
    %v2431 = vrot.slane %v2430, 2
    %v2432 = vadd.f32 %v2430, %v2431
    %v2433 = vrot.slane %v2432, 1
    %v2434 = vadd.f32 %v2432, %v2433
    %v2435 = vlog2.pop %v2427
    %v2436 = vmul.f32 %v2435, 0.6931472
    %v2437 = vlog2.pop %v2434
    %v2438 = vmul.f32 %v2437, 0.6931472
    %v2439 = vadd.f32 %v2436, %v2407
    %v2440 = vadd.f32 %v2438, %v2414
    %v2443 = vsel %vm1659, %v2440, %v2439
    %v2445 = vsel %vm615, %v2443, %v2246
    %v2446 = vsel %vm615, %v2265, %v2247
    %v2447 = vcvt.s32.f32 %v464
    %v2449 = vrot.slane %v2057, 4
    %v2451 = vsel %vm468, %v2449, 0.0
    %v2452 = vadd.f32 %v1437, %v2451
    %v2453 = vld [vmem:[%s2] sm:$0x3]
    %2454 = vset.pattern.permute.xlu0 6
    %2455 = vperm.xlu0 %2454, %v2453
    %v2456 = vpop.permute.xlu0 %2455
    %vm2457 = vcmp.eq.s32.totalorder %v2456, %v62
    %v2458 = vsel %vm2457, 1, 0
    %v2459 = vcvt.s32.f32 %v2458
    %v2461 = vsel %vm1476, %v2265, 0
    %2463 = vmatprep.subr.mxu0 0.0
    %2464 = vmatpush1.msra.mxu0 %v1482
    %2465 = vmatprep.subr.mxu0 0.0
    %2466 = vmatpush1.msra.mxu0 0.0
    %2467 = vmatprep.subr.mxu0 0.0
    %2468 = vmatpush1.msra.mxu0 0.0
    %2469 = vmatprep.subr.mxu0 0.0
    %2470 = vmatpush1.msra.mxu0 0.0
    %2471 = vmatprep.subr.mxu0 0.0
    %2472 = vmatpush1.msra.mxu0 0.0
    %2473 = vmatprep.subr.mxu0 0.0
    %2474 = vmatpush1.msra.mxu0 0.0
    %2475 = vmatprep.subr.mxu0 0.0
    %2476 = vmatpush1.msra.mxu0 0.0
    %2477 = vmatprep.subr.mxu0 0.0
    %2478 = vmatpush1.msra.mxu0 0.0
    %2479 = vmatprep.subr.mxu0 0.0
    %2480 = vmatpush1.msra.mxu0 0.0
    %2481 = vmatprep.subr.mxu0 0.0
    %2482 = vmatpush1.msra.mxu0 0.0
    %2483 = vmatprep.subr.mxu0 0.0
    %2484 = vmatpush1.msra.mxu0 0.0
    %2485 = vmatprep.subr.mxu0 0.0
    %2486 = vmatpush1.msra.mxu0 0.0
    %2487 = vmatprep.subr.mxu0 0.0
    %2488 = vmatpush1.msra.mxu0 0.0
    %2489 = vmatprep.subr.mxu0 0.0
    %2490 = vmatpush1.msra.mxu0 0.0
    %2491 = vmatprep.subr.mxu0 0.0
    %2492 = vmatpush1.msra.mxu0 0.0
    %2493 = vmatprep.subr.mxu0 0.0
    %2494 = vmatpush1.msra.mxu0 0.0
    %2495 = vmatprep.subr.mxu0 0.0
    %2496 = vmatpush1.msra.mxu0 0.0
    %2497 = vmatprep.subr.mxu0 0.0
    %2498 = vmatpush1.msra.mxu0 0.0
    %2499 = vmatprep.subr.mxu0 0.0
    %2500 = vmatpush1.msra.mxu0 0.0
    %2501 = vmatprep.subr.mxu0 0.0
    %2502 = vmatpush1.msra.mxu0 0.0
    %2503 = vmatprep.subr.mxu0 0.0
    %2504 = vmatpush1.msra.mxu0 0.0
    %2505 = vmatprep.subr.mxu0 0.0
    %2506 = vmatpush1.msra.mxu0 0.0
    %2507 = vmatprep.subr.mxu0 0.0
    %2508 = vmatpush1.msra.mxu0 0.0
    %2509 = vmatprep.subr.mxu0 0.0
    %2510 = vmatpush1.msra.mxu0 0.0
    %2511 = vmatprep.subr.mxu0 0.0
    %2512 = vmatpush1.msra.mxu0 0.0
    %2513 = vmatprep.subr.mxu0 0.0
    %2514 = vmatpush1.msra.mxu0 0.0
    %2515 = vmatprep.subr.mxu0 0.0
    %2516 = vmatpush1.msra.mxu0 0.0
    %2517 = vmatprep.subr.mxu0 0.0
    %2518 = vmatpush1.msra.mxu0 0.0
    %2519 = vmatprep.subr.mxu0 0.0
    %2520 = vmatpush1.msra.mxu0 0.0
    %2521 = vmatprep.subr.mxu0 0.0
    %2522 = vmatpush1.msra.mxu0 0.0
    %2523 = vmatprep.subr.mxu0 0.0
    %2524 = vmatpush1.msra.mxu0 0.0
    %2525 = vmatprep.subr.mxu0 0.0
    %2526 = vmatpush1.msra.mxu0 0.0
    %2527 = vmatprep.mubr.f32.mxu0 0.0
    %2528 = vmatmul.mubr.f32.gmra.mrb[0].mxu0 %v2461
    %v2529 = vpop.f32.mrb[0].mxu0
    %v2530 = vadd.f32 0.0, %v2529
    %v2531 = vpop.f32.mrb[0].mxu0
    %2532 = vdwg.mxu0
    %v2533 = vmul.f32 %v2530, %v2459
    %v2534 = vsel %vm1455, %v2533, 0.0
    %2535 = vadd.xlane.f32.xlu0 %v2534
    %v2536 = vpop.xlane.xlu0 %2535
    %v2537 = vmul.f32 %v2452, %v2459
    %v2538 = vsel %vm1455, %v2537, 0.0
    %2539 = vadd.xlane.f32.xlu0 %v2538
    %v2540 = vpop.xlane.xlu0 %2539
    %v2541 = vadd.f32 %v2536, %v2540
    %v2542 = vmul.f32 %v2447, %v2541
    %v2543 = vadd.f32 %v2349, %v2542
    %v2544 = vlaneseq
    %v2545 = vshrl.u32 %v2544, 7
    %v2546 = vsub.s32 0, %v2545
    %v2547 = vrot.slane %v2445, %v2546
    %2549 = vbcast.lane.b32.xlu0 %v2547, 256
    %v2550 = vpop.permute.xlu0 %2549
    %v2551 = vlaneseq
    %v2552 = vshrl.u32 %v2551, 7
    %v2553 = vsub.s32 1, %v2552
    %v2554 = vrot.slane %v2445, %v2553
    %2556 = vbcast.lane.b32.xlu0 %v2554, 256
    %v2557 = vpop.permute.xlu0 %2556
    %v2558 = vadd.f32 %v2550, %v59
    %v2559 = vadd.f32 %v2557, %v59
    %v2562 = vunpack.c.l.s4 1966171168
    %v2563 = vunpack.c.0.s8 %v2562
    %v2564 = vlaneseq
    %v2565 = vshrl.u32 %v2564, 7
    %v2566 = vsub.s32 %v2563, %v2565
    %v2567 = vrot.slane %v2452, %v2566
    %v2568 = vcombine.high %v2567, %v2567
    %v2570 = vunpack.c.l.s4 1966171168
    %v2571 = vunpack.c.0.s8 %v2570
    %v2572 = vlaneseq
    %v2573 = vshrl.u32 %v2572, 7
    %v2574 = vsub.s32 %v2571, %v2573
    %v2575 = vrot.slane %v2567, %v2574
    %v2577 = vunpack.c.l.s4 1966171168
    %v2578 = vunpack.c.0.s8 %v2577
    %v2579 = vlaneseq
    %v2580 = vshrl.u32 %v2579, 7
    %v2581 = vsub.s32 %v2578, %v2580
    %v2582 = vrot.slane %v2568, %v2581
    %v2583 = vlaneseq
    %v2584 = vshrl.u32 %v2583, 7
    %v2585 = vsub.s32 0, %v2584
    %v2586 = vrot.slane %v2575, %v2585
    %v2587 = vlaneseq
    %v2588 = vshrl.u32 %v2587, 7
    %v2589 = vsub.s32 0, %v2588
    %v2590 = vrot.slane %v2582, %v2589
    %v2593 = vadd.f32 %v2558, %v2586
    %v2594 = vadd.f32 %v2559, %v2590
    %v2595 = vsel %vm1616, %v2593, -inf
    %v2596 = vrot.slane %v2595, 4
    %v2597 = vmax.f32 %v2595, %v2596
    %v2598 = vrot.slane %v2597, 2
    %v2599 = vmax.f32 %v2597, %v2598
    %v2600 = vrot.slane %v2599, 1
    %v2601 = vmax.f32 %v2599, %v2600
    %v2602 = vsel %vm1616, %v2594, -inf
    %v2603 = vrot.slane %v2602, 4
    %v2604 = vmax.f32 %v2602, %v2603
    %v2605 = vrot.slane %v2604, 2
    %v2606 = vmax.f32 %v2604, %v2605
    %v2607 = vrot.slane %v2606, 1
    %v2608 = vmax.f32 %v2606, %v2607
    %v2609 = vsub.f32 %v2593, %v2601
    %v2610 = vsub.f32 %v2594, %v2608
    %v2611 = vmul.f32 %v2609, 1.442695
    %v2612 = vpow.pop %v2611
    %v2613 = vmul.f32 %v2610, 1.442695
    %v2614 = vpow.pop %v2613
    %v2615 = vsel %vm1616, %v2612, 0.0
    %v2616 = vrot.slane %v2615, 4
    %v2617 = vadd.f32 %v2615, %v2616
    %v2618 = vrot.slane %v2617, 2
    %v2619 = vadd.f32 %v2617, %v2618
    %v2620 = vrot.slane %v2619, 1
    %v2621 = vadd.f32 %v2619, %v2620
    %v2622 = vsel %vm1616, %v2614, 0.0
    %v2623 = vrot.slane %v2622, 4
    %v2624 = vadd.f32 %v2622, %v2623
    %v2625 = vrot.slane %v2624, 2
    %v2626 = vadd.f32 %v2624, %v2625
    %v2627 = vrot.slane %v2626, 1
    %v2628 = vadd.f32 %v2626, %v2627
    %v2629 = vlog2.pop %v2621
    %v2630 = vmul.f32 %v2629, 0.6931472
    %v2631 = vlog2.pop %v2628
    %v2632 = vmul.f32 %v2631, 0.6931472
    %v2633 = vadd.f32 %v2630, %v2601
    %v2634 = vadd.f32 %v2632, %v2608
    %v2637 = vsel %vm1659, %v2634, %v2633
    %v2639 = vsel %vm468, %v2637, %v2445
    %v2640 = vsel %vm468, %v2459, %v2446
    %v2641 = vcvt.s32.f32 %v322
    %v2642 = vrot.slane %v2253, 6
    %v2644 = vsel %vm326, %v2642, 0.0
    %v2645 = vadd.f32 %v1437, %v2644
    %v2646 = vld [vmem:[%s2] sm:$0x3]
    %2647 = vset.pattern.permute.xlu0 7
    %2648 = vperm.xlu0 %2647, %v2646
    %v2649 = vpop.permute.xlu0 %2648
    %vm2650 = vcmp.eq.s32.totalorder %v2649, %v62
    %v2651 = vsel %vm2650, 1, 0
    %v2652 = vcvt.s32.f32 %v2651
    %v2654 = vsel %vm1476, %v2459, 0
    %2656 = vmatprep.subr.mxu0 0.0
    %2657 = vmatpush1.msra.mxu0 %v1482
    %2658 = vmatprep.subr.mxu0 0.0
    %2659 = vmatpush1.msra.mxu0 0.0
    %2660 = vmatprep.subr.mxu0 0.0
    %2661 = vmatpush1.msra.mxu0 0.0
    %2662 = vmatprep.subr.mxu0 0.0
    %2663 = vmatpush1.msra.mxu0 0.0
    %2664 = vmatprep.subr.mxu0 0.0
    %2665 = vmatpush1.msra.mxu0 0.0
    %2666 = vmatprep.subr.mxu0 0.0
    %2667 = vmatpush1.msra.mxu0 0.0
    %2668 = vmatprep.subr.mxu0 0.0
    %2669 = vmatpush1.msra.mxu0 0.0
    %2670 = vmatprep.subr.mxu0 0.0
    %2671 = vmatpush1.msra.mxu0 0.0
    %2672 = vmatprep.subr.mxu0 0.0
    %2673 = vmatpush1.msra.mxu0 0.0
    %2674 = vmatprep.subr.mxu0 0.0
    %2675 = vmatpush1.msra.mxu0 0.0
    %2676 = vmatprep.subr.mxu0 0.0
    %2677 = vmatpush1.msra.mxu0 0.0
    %2678 = vmatprep.subr.mxu0 0.0
    %2679 = vmatpush1.msra.mxu0 0.0
    %2680 = vmatprep.subr.mxu0 0.0
    %2681 = vmatpush1.msra.mxu0 0.0
    %2682 = vmatprep.subr.mxu0 0.0
    %2683 = vmatpush1.msra.mxu0 0.0
    %2684 = vmatprep.subr.mxu0 0.0
    %2685 = vmatpush1.msra.mxu0 0.0
    %2686 = vmatprep.subr.mxu0 0.0
    %2687 = vmatpush1.msra.mxu0 0.0
    %2688 = vmatprep.subr.mxu0 0.0
    %2689 = vmatpush1.msra.mxu0 0.0
    %2690 = vmatprep.subr.mxu0 0.0
    %2691 = vmatpush1.msra.mxu0 0.0
    %2692 = vmatprep.subr.mxu0 0.0
    %2693 = vmatpush1.msra.mxu0 0.0
    %2694 = vmatprep.subr.mxu0 0.0
    %2695 = vmatpush1.msra.mxu0 0.0
    %2696 = vmatprep.subr.mxu0 0.0
    %2697 = vmatpush1.msra.mxu0 0.0
    %2698 = vmatprep.subr.mxu0 0.0
    %2699 = vmatpush1.msra.mxu0 0.0
    %2700 = vmatprep.subr.mxu0 0.0
    %2701 = vmatpush1.msra.mxu0 0.0
    %2702 = vmatprep.subr.mxu0 0.0
    %2703 = vmatpush1.msra.mxu0 0.0
    %2704 = vmatprep.subr.mxu0 0.0
    %2705 = vmatpush1.msra.mxu0 0.0
    %2706 = vmatprep.subr.mxu0 0.0
    %2707 = vmatpush1.msra.mxu0 0.0
    %2708 = vmatprep.subr.mxu0 0.0
    %2709 = vmatpush1.msra.mxu0 0.0
    %2710 = vmatprep.subr.mxu0 0.0
    %2711 = vmatpush1.msra.mxu0 0.0
    %2712 = vmatprep.subr.mxu0 0.0
    %2713 = vmatpush1.msra.mxu0 0.0
    %2714 = vmatprep.subr.mxu0 0.0
    %2715 = vmatpush1.msra.mxu0 0.0
    %2716 = vmatprep.subr.mxu0 0.0
    %2717 = vmatpush1.msra.mxu0 0.0
    %2718 = vmatprep.subr.mxu0 0.0
    %2719 = vmatpush1.msra.mxu0 0.0
    %2720 = vmatprep.mubr.f32.mxu0 0.0
    %2721 = vmatmul.mubr.f32.gmra.mrb[0].mxu0 %v2654
    %v2722 = vpop.f32.mrb[0].mxu0
    %v2723 = vadd.f32 0.0, %v2722
    %v2724 = vpop.f32.mrb[0].mxu0
    %2725 = vdwg.mxu0
    %v2726 = vmul.f32 %v2723, %v2652
    %v2727 = vsel %vm1455, %v2726, 0.0
    %2728 = vadd.xlane.f32.xlu0 %v2727
    %v2729 = vpop.xlane.xlu0 %2728
    %v2730 = vmul.f32 %v2645, %v2652
    %v2731 = vsel %vm1455, %v2730, 0.0
    %2732 = vadd.xlane.f32.xlu0 %v2731
    %v2733 = vpop.xlane.xlu0 %2732
    %v2734 = vadd.f32 %v2729, %v2733
    %v2735 = vmul.f32 %v2641, %v2734
    %v2736 = vadd.f32 %v2543, %v2735
    %v2737 = vlaneseq
    %v2738 = vshrl.u32 %v2737, 7
    %v2739 = vsub.s32 0, %v2738
    %v2740 = vrot.slane %v2639, %v2739
    %2742 = vbcast.lane.b32.xlu0 %v2740, 256
    %v2743 = vpop.permute.xlu0 %2742
    %v2744 = vlaneseq
    %v2745 = vshrl.u32 %v2744, 7
    %v2746 = vsub.s32 1, %v2745
    %v2747 = vrot.slane %v2639, %v2746
    %2749 = vbcast.lane.b32.xlu0 %v2747, 256
    %v2750 = vpop.permute.xlu0 %2749
    %v2751 = vadd.f32 %v2743, %v59
    %v2752 = vadd.f32 %v2750, %v59
    %v2755 = vunpack.c.l.s4 1966171168
    %v2756 = vunpack.c.0.s8 %v2755
    %v2757 = vlaneseq
    %v2758 = vshrl.u32 %v2757, 7
    %v2759 = vsub.s32 %v2756, %v2758
    %v2760 = vrot.slane %v2645, %v2759
    %v2761 = vcombine.high %v2760, %v2760
    %v2763 = vunpack.c.l.s4 1966171168
    %v2764 = vunpack.c.0.s8 %v2763
    %v2765 = vlaneseq
    %v2766 = vshrl.u32 %v2765, 7
    %v2767 = vsub.s32 %v2764, %v2766
    %v2768 = vrot.slane %v2760, %v2767
    %v2770 = vunpack.c.l.s4 1966171168
    %v2771 = vunpack.c.0.s8 %v2770
    %v2772 = vlaneseq
    %v2773 = vshrl.u32 %v2772, 7
    %v2774 = vsub.s32 %v2771, %v2773
    %v2775 = vrot.slane %v2761, %v2774
    %v2776 = vlaneseq
    %v2777 = vshrl.u32 %v2776, 7
    %v2778 = vsub.s32 0, %v2777
    %v2779 = vrot.slane %v2768, %v2778
    %v2780 = vlaneseq
    %v2781 = vshrl.u32 %v2780, 7
    %v2782 = vsub.s32 0, %v2781
    %v2783 = vrot.slane %v2775, %v2782
    %v2786 = vadd.f32 %v2751, %v2779
    %v2787 = vadd.f32 %v2752, %v2783
    %v2788 = vsel %vm1616, %v2786, -inf
    %v2789 = vrot.slane %v2788, 4
    %v2790 = vmax.f32 %v2788, %v2789
    %v2791 = vrot.slane %v2790, 2
    %v2792 = vmax.f32 %v2790, %v2791
    %v2793 = vrot.slane %v2792, 1
    %v2794 = vmax.f32 %v2792, %v2793
    %v2795 = vsel %vm1616, %v2787, -inf
    %v2796 = vrot.slane %v2795, 4
    %v2797 = vmax.f32 %v2795, %v2796
    %v2798 = vrot.slane %v2797, 2
    %v2799 = vmax.f32 %v2797, %v2798
    %v2800 = vrot.slane %v2799, 1
    %v2801 = vmax.f32 %v2799, %v2800
    %v2802 = vsub.f32 %v2786, %v2794
    %v2803 = vsub.f32 %v2787, %v2801
    %v2804 = vmul.f32 %v2802, 1.442695
    %v2805 = vpow.pop %v2804
    %v2806 = vmul.f32 %v2803, 1.442695
    %v2807 = vpow.pop %v2806
    %v2808 = vsel %vm1616, %v2805, 0.0
    %v2809 = vrot.slane %v2808, 4
    %v2810 = vadd.f32 %v2808, %v2809
    %v2811 = vrot.slane %v2810, 2
    %v2812 = vadd.f32 %v2810, %v2811
    %v2813 = vrot.slane %v2812, 1
    %v2814 = vadd.f32 %v2812, %v2813
    %v2815 = vsel %vm1616, %v2807, 0.0
    %v2816 = vrot.slane %v2815, 4
    %v2817 = vadd.f32 %v2815, %v2816
    %v2818 = vrot.slane %v2817, 2
    %v2819 = vadd.f32 %v2817, %v2818
    %v2820 = vrot.slane %v2819, 1
    %v2821 = vadd.f32 %v2819, %v2820
    %v2822 = vlog2.pop %v2814
    %v2823 = vmul.f32 %v2822, 0.6931472
    %v2824 = vlog2.pop %v2821
    %v2825 = vmul.f32 %v2824, 0.6931472
    %v2826 = vadd.f32 %v2823, %v2794
    %v2827 = vadd.f32 %v2825, %v2801
    %v2830 = vsel %vm1659, %v2827, %v2826
    %v2832 = vsel %vm326, %v2830, %v2639
    %v2833 = vsel %vm326, %v2652, %v2640
    %v2835 = vlaneseq
    %v2836 = vshrl.u32 %v2835, 7
    %v2837 = vsub.s32 0, %v2836
    %v2838 = vrot.slane %v58, %v2837
    %v2840 = vmul.f32 %v2833, %v2838
    %v2841 = vsel %vm1455, %v2840, 0.0
    %2842 = vadd.xlane.f32.xlu0 %v2841
    %v2843 = vpop.xlane.xlu0 %2842
    %v2844 = vadd.f32 %v2736, %v2843
    %v2845 = vadd.f32 %v2832, %v2838
    %v2846 = vsel %vm1455, %v2845, -inf
    %2847 = vmax.xlane.f32.xlu0 %v2846
    %v2848 = vpop.xlane.xlu0 %2847
    %v2849 = vsub.f32 %v2845, %v2848
    %v2850 = vmul.f32 %v2849, 1.442695
    %v2851 = vpow.pop %v2850
    %v2852 = vsel %vm1455, %v2851, 0.0
    %2853 = vadd.xlane.f32.xlu0 %v2852
    %v2854 = vpop.xlane.xlu0 %2853
    %v2855 = vlog2.pop %v2854
    %v2856 = vmul.f32 %v2855, 0.6931472
    %v2857 = vadd.f32 %v2856, %v2848
    %v2858 = vsub.f32 %v2844, %v2857
    %vm2859 = vcmask 1024
    %v2860 = vsel %vm2859, %v2858, 0.0
    %v2861 = vrot.slane %v2860, 4
    %v2862 = vadd.f32 %v2860, %v2861
    %v2863 = vrot.slane %v2862, 2
    %v2864 = vadd.f32 %v2862, %v2863
    %v2865 = vrot.slane %v2864, 1
    %v2866 = vadd.f32 %v2864, %v2865
    %vm2867 = vcmask 0
    %2868 = vst.msk [vmem:[#allocation4] sm:$0x1] %vm2867, %v2866
    // Predicated region
    $region46: #{bilstm_crf_forward.1} parent=1 // pred_check
      _
    $region47: #{bilstm_crf_forward.1} parent=1 // pred_check_branch
      %2870 = sbr.rel (0) target = $region49
    $region48: #{bilstm_crf_forward.1} parent=1 // pred_region
      %s2872 = ssub.s32 16, 16
      %2873 = vsyncadd [#allocation5], %s2872
      %s2875 = sshll.u32 [#allocation4], 4
      %s2876 = int_to_ptr.vmem [resolvable:$true] %s2875
      %2878 = dma.vmem_to_hbm [thread:$0]  %s2876, 16, %s11, [#allocation5]
    $region49: #{bilstm_crf_forward.1} parent=1 // pred_fallthru
      _
    // Predicated region
    $region50: #{bilstm_crf_forward.1} parent=1 // pred_check
      _
    $region51: #{bilstm_crf_forward.1} parent=1 // pred_check_branch
      %2880 = sbr.rel (0) target = $region53
    $region52: #{bilstm_crf_forward.1} parent=1 // pred_region
      %2881 = dma.done [#allocation5], 16
    $region53: #{bilstm_crf_forward.1} parent=1 // pred_fallthru
      _
    %2882 = vsyncpa [#allocation5], 1

</llo_original>
